<compile_context>
chip_gen: v7x
topology: tpu7x:2x2x1
jax: 0.10.0
libtpu: 0.0.40
codegen_flags: <defaults>
</compile_context>

<pallas_src>
import functools

import jax
import jax.numpy as jnp
from jax.experimental import pallas as pl
from jax.experimental.pallas import tpu as pltpu


LAYER_DIMS = (1024, 512, 256, 128, 64, 10)
PAD_TAIL = 128   # fc4/fc5 output dims padded up to one full lane register


def mlp_kernel(x_ref,
               w1_ref, b1_ref,
               w2_ref, b2_ref,
               w3_ref, b3_ref,
               w4_ref, b4_ref,
               w5_ref, b5_ref,
               o_ref):
    """Fused 5-layer MLP for one (bm, 1024) batch tile.

    x_ref is f32; it is cast to bf16 on the VPU here (cheaper than a separate
    XLA cast pass over HBM).  Matmul operands are bf16; the MXU accumulates in
    f32; bias add + ReLU run in f32 on the VPU (v5e-safe), then re-cast to bf16
    only as the next matmul's input.
    """
    h = x_ref[...].astype(jnp.bfloat16)          # (bm, 1024)

    def dense_relu(h_bf16, w_ref, b_ref):
        acc = jnp.dot(h_bf16, w_ref[...], preferred_element_type=jnp.float32)
        return jnp.maximum(acc + b_ref[...], 0.0).astype(jnp.bfloat16)

    h = dense_relu(h, w1_ref, b1_ref)            # (bm, 512)
    h = dense_relu(h, w2_ref, b2_ref)            # (bm, 256)
    h = dense_relu(h, w3_ref, b3_ref)            # (bm, 128)
    h = dense_relu(h, w4_ref, b4_ref)            # (bm, 128)  (64 real + 64 zero-pad)
    out = jnp.dot(h, w5_ref[...], preferred_element_type=jnp.float32) + b5_ref[...]
    o_ref[...] = out.astype(o_ref.dtype)         # (bm, 128) f32; cols 10: are zeros


def prepare_params(params):
    """One-time prep: cast weights to bf16, biases to f32, pad tail layers to
    128 lanes.  Call ONCE and reuse the returned tuple for every forward."""
    w4 = jnp.pad(params["w4"], ((0, 0), (0, PAD_TAIL - params["w4"].shape[1])))
    b4 = jnp.pad(params["b4"], ((0, 0), (0, PAD_TAIL - params["b4"].shape[1])))
    w5 = jnp.pad(params["w5"], ((0, PAD_TAIL - params["w5"].shape[0]),
                                (0, PAD_TAIL - params["w5"].shape[1])))
    b5 = jnp.pad(params["b5"], ((0, 0), (0, PAD_TAIL - params["b5"].shape[1])))
    ws = [params["w1"], params["w2"], params["w3"], w4, w5]
    bs = [params["b1"], params["b2"], params["b3"], b4, b5]
    flat = []
    for w, b in zip(ws, bs):
        flat.append(w.astype(jnp.bfloat16))
        flat.append(b.astype(jnp.float32))
    return tuple(jax.device_put(p) for p in flat)


@functools.partial(jax.jit, static_argnames=("bm",))
def complexnet_forward(x, prepared, *, bm=128):
    """x: (B, 1024) float32.  prepared: output of prepare_params().

    Returns (B, 10) float32 matching torch: relu(fc1..fc4), fc5 linear.

    bm=128 gives v7x's two TensorCores >= 2 grid steps each at B=512; on
    single-TC v5e bm=256 is marginally better (fewer per-step overheads).
    """
    B, d_in = x.shape
    assert d_in == LAYER_DIMS[0]

    # Pad batch to a multiple of the batch tile.  Padded rows compute
    # relu(bias) garbage through the layers; rows are independent and are
    # sliced off below, but never reduce over the padded batch dimension.
    b_pad = pl.cdiv(B, bm) * bm
    if b_pad != B:
        x = jnp.pad(x, ((0, b_pad - B), (0, 0)))

    grid = (b_pad // bm,)

    def resident(shape):
        # Constant block index -> DMA'd once, resident in VMEM for all steps.
        return pl.BlockSpec(shape, lambda i: (0,) * len(shape))

    in_specs = [pl.BlockSpec((bm, LAYER_DIMS[0]), lambda i: (i, 0))]
    for p in prepared:
        in_specs.append(resident(p.shape))

    out = pl.pallas_call(
        mlp_kernel,
        out_shape=jax.ShapeDtypeStruct((b_pad, PAD_TAIL), jnp.float32),
        grid_spec=pltpu.PrefetchScalarGridSpec(
            num_scalar_prefetch=0,
            grid=grid,
            in_specs=in_specs,
            out_specs=pl.BlockSpec((bm, PAD_TAIL), lambda i: (i, 0)),
        ),
        compiler_params=pltpu.CompilerParams(
            dimension_semantics=("parallel",),   # batch tiles shard across TCs
            vmem_limit_bytes=32 << 20,           # footprint ~5 MiB, ample headroom
        ),
    )(x, *prepared)

    # Lane-dense (b_pad, 128) stays inside the kernel; slice to (B, 10) here.
    return out[:B, :LAYER_DIMS[-1]]


def init_params(key):
    """Deterministic synthetic parameters matching ComplexNet's shapes.

    Weights stored as (in, out) (transposed vs. torch); biases as (1, out).
    """
    params = {}
    keys = jax.random.split(key, len(LAYER_DIMS) - 1)
    for li, (d_in, d_out) in enumerate(zip(LAYER_DIMS[:-1], LAYER_DIMS[1:]), 1):
        kw, kb = jax.random.split(keys[li - 1])
        scale = 1.0 / jnp.sqrt(d_in)
        params[f"w{li}"] = (jax.random.uniform(kw, (d_in, d_out), jnp.float32,
                                               minval=-1.0, maxval=1.0) * scale)
        params[f"b{li}"] = (jax.random.uniform(kb, (1, d_out), jnp.float32,
                                               minval=-1.0, maxval=1.0) * scale)
    return params


def reference_forward(x, params, *, emulate_bf16=False):
    cast = (lambda a: a.astype(jnp.bfloat16)) if emulate_bf16 else (lambda a: a)
    h = x
    for li in range(1, 6):
        w, b = params[f"w{li}"], params[f"b{li}"]
        h = jnp.dot(cast(h), cast(w), preferred_element_type=jnp.float32) + b
        if li < 5:
            h = jnp.maximum(h, 0.0)
    return h


if __name__ == "__main__":
    key = jax.random.PRNGKey(0)
    k_x, k_p = jax.random.split(key)

    # B=512, bm=128 -> 4 parallel batch tiles (2 grid steps per v7x TC, full
    # MXU row utilization on every gen).
    B = 512
    x = jax.random.normal(k_x, (B, 1024), dtype=jnp.float32)
    params = init_params(k_p)

    # One-time parameter prep, reused for every forward call.
    prepared = prepare_params(params)

    y = complexnet_forward(x, prepared, bm=128)
    y = jax.block_until_ready(y)
    assert y.shape == (B, 10)

    # Tight check vs. a reference using the same bf16-operand / f32-accum
    # numerics, loose check vs. the pure-f32 reference.
    y_ref_bf16 = reference_forward(x, params, emulate_bf16=True)
    y_ref_f32 = reference_forward(x, params, emulate_bf16=False)
    assert jnp.allclose(y, y_ref_bf16, atol=1e-2, rtol=1e-2), "mismatch (bf16 ref)"
    assert jnp.allclose(y, y_ref_f32, atol=1e-1, rtol=1e-1), "mismatch (f32 ref)"

    print("KERNEL_OK")
</pallas_src>

<mosaic_0001>
module attributes {stable_mosaic.version = 11 : i64} {
  func.func @mlp_kernel(%arg0: i32, %arg1: memref<128x1024xf32, #tpu.memory_space<vmem>>, %arg2: memref<1024x512xbf16, #tpu.memory_space<vmem>>, %arg3: memref<1x512xf32, #tpu.memory_space<vmem>>, %arg4: memref<512x256xbf16, #tpu.memory_space<vmem>>, %arg5: memref<1x256xf32, #tpu.memory_space<vmem>>, %arg6: memref<256x128xbf16, #tpu.memory_space<vmem>>, %arg7: memref<1x128xf32, #tpu.memory_space<vmem>>, %arg8: memref<128x128xbf16, #tpu.memory_space<vmem>>, %arg9: memref<1x128xf32, #tpu.memory_space<vmem>>, %arg10: memref<128x128xbf16, #tpu.memory_space<vmem>>, %arg11: memref<1x128xf32, #tpu.memory_space<vmem>>, %arg12: memref<128x128xf32, #tpu.memory_space<vmem>>) attributes {dimension_semantics = [#tpu.dimension_semantics<parallel>], iteration_bounds = array<i64: 4>, scalar_prefetch = 0 : i64, scratch_operands = 0 : i64, tpu.core_type = #tpu.core_type<tc>, window_params = [{transform_indices = @transform_0, window_bounds = array<i64: 128, 1024>}, {pipeline_mode = #tpu.pipeline_mode<synchronous>, transform_indices = @transform_1, window_bounds = array<i64: 1024, 512>}, {pipeline_mode = #tpu.pipeline_mode<synchronous>, transform_indices = @transform_2, window_bounds = array<i64: 1, 512>}, {pipeline_mode = #tpu.pipeline_mode<synchronous>, transform_indices = @transform_3, window_bounds = array<i64: 512, 256>}, {pipeline_mode = #tpu.pipeline_mode<synchronous>, transform_indices = @transform_4, window_bounds = array<i64: 1, 256>}, {pipeline_mode = #tpu.pipeline_mode<synchronous>, transform_indices = @transform_5, window_bounds = array<i64: 256, 128>}, {pipeline_mode = #tpu.pipeline_mode<synchronous>, transform_indices = @transform_6, window_bounds = array<i64: 1, 128>}, {pipeline_mode = #tpu.pipeline_mode<synchronous>, transform_indices = @transform_7, window_bounds = array<i64: 128, 128>}, {pipeline_mode = #tpu.pipeline_mode<synchronous>, transform_indices = @transform_8, window_bounds = array<i64: 1, 128>}, {pipeline_mode = #tpu.pipeline_mode<synchronous>, transform_indices = @transform_9, window_bounds = array<i64: 128, 128>}, {pipeline_mode = #tpu.pipeline_mode<synchronous>, transform_indices = @transform_10, window_bounds = array<i64: 1, 128>}, {transform_indices = @transform_11, window_bounds = array<i64: 128, 128>}]} {
    %c0 = arith.constant 0 : index
    %c0_0 = arith.constant 0 : index
    %0 = vector.load %arg1[%c0, %c0_0] : memref<128x1024xf32, #tpu.memory_space<vmem>>, vector<128x1024xf32>
    %1 = arith.truncf %0 : vector<128x1024xf32> to vector<128x1024xbf16>
    %c0_1 = arith.constant 0 : index
    %c0_2 = arith.constant 0 : index
    %2 = vector.load %arg2[%c0_1, %c0_2] : memref<1024x512xbf16, #tpu.memory_space<vmem>>, vector<1024x512xbf16>
    %cst = arith.constant dense<0.000000e+00> : vector<128x512xf32>
    %3 = tpu.matmul %1, %2, %cst {dimension_numbers = #tpu.dot_dimension_numbers<[1], [0], [0], [1], [0, 0, 1, 1], [], []>} : vector<128x1024xbf16>, vector<1024x512xbf16>, vector<128x512xf32> -> vector<128x512xf32>
    %c0_3 = arith.constant 0 : index
    %c0_4 = arith.constant 0 : index
    %4 = vector.load %arg3[%c0_3, %c0_4] : memref<1x512xf32, #tpu.memory_space<vmem>>, vector<1x512xf32>
    %5 = vector.broadcast %4 : vector<1x512xf32> to vector<128x512xf32>
    %6 = arith.addf %3, %5 : vector<128x512xf32>
    %cst_5 = arith.constant 0.000000e+00 : f32
    %7 = vector.broadcast %cst_5 : f32 to vector<128x512xf32>
    %8 = arith.maximumf %6, %7 : vector<128x512xf32>
    %9 = arith.truncf %8 : vector<128x512xf32> to vector<128x512xbf16>
    %c0_6 = arith.constant 0 : index
    %c0_7 = arith.constant 0 : index
    %10 = vector.load %arg4[%c0_6, %c0_7] : memref<512x256xbf16, #tpu.memory_space<vmem>>, vector<512x256xbf16>
    %cst_8 = arith.constant dense<0.000000e+00> : vector<128x256xf32>
    %11 = tpu.matmul %9, %10, %cst_8 {dimension_numbers = #tpu.dot_dimension_numbers<[1], [0], [0], [1], [0, 0, 1, 1], [], []>} : vector<128x512xbf16>, vector<512x256xbf16>, vector<128x256xf32> -> vector<128x256xf32>
    %c0_9 = arith.constant 0 : index
    %c0_10 = arith.constant 0 : index
    %12 = vector.load %arg5[%c0_9, %c0_10] : memref<1x256xf32, #tpu.memory_space<vmem>>, vector<1x256xf32>
    %13 = vector.broadcast %12 : vector<1x256xf32> to vector<128x256xf32>
    %14 = arith.addf %11, %13 : vector<128x256xf32>
    %cst_11 = arith.constant 0.000000e+00 : f32
    %15 = vector.broadcast %cst_11 : f32 to vector<128x256xf32>
    %16 = arith.maximumf %14, %15 : vector<128x256xf32>
    %17 = arith.truncf %16 : vector<128x256xf32> to vector<128x256xbf16>
    %c0_12 = arith.constant 0 : index
    %c0_13 = arith.constant 0 : index
    %18 = vector.load %arg6[%c0_12, %c0_13] : memref<256x128xbf16, #tpu.memory_space<vmem>>, vector<256x128xbf16>
    %cst_14 = arith.constant dense<0.000000e+00> : vector<128x128xf32>
    %19 = tpu.matmul %17, %18, %cst_14 {dimension_numbers = #tpu.dot_dimension_numbers<[1], [0], [0], [1], [0, 0, 1, 1], [], []>} : vector<128x256xbf16>, vector<256x128xbf16>, vector<128x128xf32> -> vector<128x128xf32>
    %c0_15 = arith.constant 0 : index
    %c0_16 = arith.constant 0 : index
    %20 = vector.load %arg7[%c0_15, %c0_16] : memref<1x128xf32, #tpu.memory_space<vmem>>, vector<1x128xf32>
    %21 = vector.broadcast %20 : vector<1x128xf32> to vector<128x128xf32>
    %22 = arith.addf %19, %21 : vector<128x128xf32>
    %cst_17 = arith.constant 0.000000e+00 : f32
    %23 = vector.broadcast %cst_17 : f32 to vector<128x128xf32>
    %24 = arith.maximumf %22, %23 : vector<128x128xf32>
    %25 = arith.truncf %24 : vector<128x128xf32> to vector<128x128xbf16>
    %c0_18 = arith.constant 0 : index
    %c0_19 = arith.constant 0 : index
    %26 = vector.load %arg8[%c0_18, %c0_19] : memref<128x128xbf16, #tpu.memory_space<vmem>>, vector<128x128xbf16>
    %cst_20 = arith.constant dense<0.000000e+00> : vector<128x128xf32>
    %27 = tpu.matmul %25, %26, %cst_20 {dimension_numbers = #tpu.dot_dimension_numbers<[1], [0], [0], [1], [0, 0, 1, 1], [], []>} : vector<128x128xbf16>, vector<128x128xbf16>, vector<128x128xf32> -> vector<128x128xf32>
    %c0_21 = arith.constant 0 : index
    %c0_22 = arith.constant 0 : index
    %28 = vector.load %arg9[%c0_21, %c0_22] : memref<1x128xf32, #tpu.memory_space<vmem>>, vector<1x128xf32>
    %29 = vector.broadcast %28 : vector<1x128xf32> to vector<128x128xf32>
    %30 = arith.addf %27, %29 : vector<128x128xf32>
    %cst_23 = arith.constant 0.000000e+00 : f32
    %31 = vector.broadcast %cst_23 : f32 to vector<128x128xf32>
    %32 = arith.maximumf %30, %31 : vector<128x128xf32>
    %33 = arith.truncf %32 : vector<128x128xf32> to vector<128x128xbf16>
    %c0_24 = arith.constant 0 : index
    %c0_25 = arith.constant 0 : index
    %34 = vector.load %arg10[%c0_24, %c0_25] : memref<128x128xbf16, #tpu.memory_space<vmem>>, vector<128x128xbf16>
    %cst_26 = arith.constant dense<0.000000e+00> : vector<128x128xf32>
    %35 = tpu.matmul %33, %34, %cst_26 {dimension_numbers = #tpu.dot_dimension_numbers<[1], [0], [0], [1], [0, 0, 1, 1], [], []>} : vector<128x128xbf16>, vector<128x128xbf16>, vector<128x128xf32> -> vector<128x128xf32>
    %c0_27 = arith.constant 0 : index
    %c0_28 = arith.constant 0 : index
    %36 = vector.load %arg11[%c0_27, %c0_28] : memref<1x128xf32, #tpu.memory_space<vmem>>, vector<1x128xf32>
    %37 = vector.broadcast %36 : vector<1x128xf32> to vector<128x128xf32>
    %38 = arith.addf %35, %37 : vector<128x128xf32>
    %c0_29 = arith.constant 0 : index
    %c0_30 = arith.constant 0 : index
    %39 = vector.load %arg12[%c0_29, %c0_30] : memref<128x128xf32, #tpu.memory_space<vmem>>, vector<128x128xf32>
    tpu.vector_store %arg12[%c0_29, %c0_30], %38 {strides = array<i32>} : memref<128x128xf32, #tpu.memory_space<vmem>>, vector<128x128xf32>,
    return
  }
  func.func @transform_0(%arg0: i32) -> (i32, i32) {
    %c0_i32 = arith.constant 0 : i32
    %c0_i32_0 = arith.constant 0 : i32
    return %arg0, %c0_i32 : i32, i32
  }
  func.func @transform_1(%arg0: i32) -> (i32, i32) {
    %c0_i32 = arith.constant 0 : i32
    %c0_i32_0 = arith.constant 0 : i32
    %c0_i32_1 = arith.constant 0 : i32
    return %c0_i32, %c0_i32_0 : i32, i32
  }
  func.func @transform_2(%arg0: i32) -> (i32, i32) {
    %c0_i32 = arith.constant 0 : i32
    %c0_i32_0 = arith.constant 0 : i32
    %c0_i32_1 = arith.constant 0 : i32
    return %c0_i32, %c0_i32_0 : i32, i32
  }
  func.func @transform_3(%arg0: i32) -> (i32, i32) {
    %c0_i32 = arith.constant 0 : i32
    %c0_i32_0 = arith.constant 0 : i32
    %c0_i32_1 = arith.constant 0 : i32
    return %c0_i32, %c0_i32_0 : i32, i32
  }
  func.func @transform_4(%arg0: i32) -> (i32, i32) {
    %c0_i32 = arith.constant 0 : i32
    %c0_i32_0 = arith.constant 0 : i32
    %c0_i32_1 = arith.constant 0 : i32
    return %c0_i32, %c0_i32_0 : i32, i32
  }
  func.func @transform_5(%arg0: i32) -> (i32, i32) {
    %c0_i32 = arith.constant 0 : i32
    %c0_i32_0 = arith.constant 0 : i32
    %c0_i32_1 = arith.constant 0 : i32
    return %c0_i32, %c0_i32_0 : i32, i32
  }
  func.func @transform_6(%arg0: i32) -> (i32, i32) {
    %c0_i32 = arith.constant 0 : i32
    %c0_i32_0 = arith.constant 0 : i32
    %c0_i32_1 = arith.constant 0 : i32
    return %c0_i32, %c0_i32_0 : i32, i32
  }
  func.func @transform_7(%arg0: i32) -> (i32, i32) {
    %c0_i32 = arith.constant 0 : i32
    %c0_i32_0 = arith.constant 0 : i32
    %c0_i32_1 = arith.constant 0 : i32
    return %c0_i32, %c0_i32_0 : i32, i32
  }
  func.func @transform_8(%arg0: i32) -> (i32, i32) {
    %c0_i32 = arith.constant 0 : i32
    %c0_i32_0 = arith.constant 0 : i32
    %c0_i32_1 = arith.constant 0 : i32
    return %c0_i32, %c0_i32_0 : i32, i32
  }
  func.func @transform_9(%arg0: i32) -> (i32, i32) {
    %c0_i32 = arith.constant 0 : i32
    %c0_i32_0 = arith.constant 0 : i32
    %c0_i32_1 = arith.constant 0 : i32
    return %c0_i32, %c0_i32_0 : i32, i32
  }
  func.func @transform_10(%arg0: i32) -> (i32, i32) {
    %c0_i32 = arith.constant 0 : i32
    %c0_i32_0 = arith.constant 0 : i32
    %c0_i32_1 = arith.constant 0 : i32
    return %c0_i32, %c0_i32_0 : i32, i32
  }
  func.func @transform_11(%arg0: i32) -> (i32, i32) {
    %c0_i32 = arith.constant 0 : i32
    %c0_i32_0 = arith.constant 0 : i32
    return %arg0, %c0_i32 : i32, i32
  }
}

</mosaic_0001>

<llo_original>
// kernel: complexnet_forward.1
$region0: #{complexnet_forward.1}
  #allocation0 [shape = 'u32[]', space=smem, size = 0x4, offset = 0x4, fixed_abs, tag = 'smem constant byte address 0x4 - core index']
  #allocation1 [shape = 'u32[144,128]{1,0:T(1,128)}', space=vmem, size = 0x12000, scoped, tag = 'internal scratch']
  %s0 = inlined_call_operand.hbm [shape: f32[512,1024], index: 0, kind: input, shape index: {}]
  %s1 = inlined_call_operand.hbm [shape: bf16[1024,512], index: 1, kind: input, shape index: {}]
  %s2 = inlined_call_operand.hbm [shape: f32[1,512], index: 2, kind: input, shape index: {}]
  %s3 = inlined_call_operand.hbm [shape: bf16[512,256], index: 3, kind: input, shape index: {}]
  %s4 = inlined_call_operand.hbm [shape: f32[1,256], index: 4, kind: input, shape index: {}]
  %s5 = inlined_call_operand.hbm [shape: bf16[256,128], index: 5, kind: input, shape index: {}]
  %s6 = inlined_call_operand.hbm [shape: f32[1,128], index: 6, kind: input, shape index: {}]
  %s7 = inlined_call_operand.hbm [shape: bf16[128,128], index: 7, kind: input, shape index: {}]
  %s8 = inlined_call_operand.hbm [shape: f32[1,128], index: 8, kind: input, shape index: {}]
  %s9 = inlined_call_operand.hbm [shape: bf16[128,128], index: 9, kind: input, shape index: {}]
  %s10 = inlined_call_operand.hbm [shape: f32[1,128], index: 10, kind: input, shape index: {}]
  %s11 = inlined_call_operand.vmem [shape: f32[512,128], index: 11, kind: output, shape index: {}]
  %s12 = sld [smem:[#allocation0]]
  $region121: #{complexnet_forward.1} parent=0
    _
  %s14 = ssub.s32 1, %s12
  %s15 = scalar_select 0, %s14, %s12
  $region1: #{complexnet_forward.1} parent=0
    #allocation2 [shape = 'u8[1048576]{0}', space=vmem, size = 0x100000, scoped, tag = 'input window, operand 0']
    #allocation3 [shape = 's32[2]{0}', space=sflag, size = 0x8, scoped, tag = 'scoped memory for complexnet_forward.1']
    #allocation4 [shape = 'u8[1048576]{0}', space=vmem, size = 0x100000, scoped, tag = 'input window, operand 1, single buffered']
    #allocation5 [shape = 's32[1]{0}', space=sflag, size = 0x4, scoped, tag = 'scoped memory for complexnet_forward.1']
    #allocation6 [shape = 'u8[2048]{0}', space=vmem, size = 0x800, scoped, tag = 'input window, operand 2, single buffered']
    #allocation7 [shape = 'u8[262144]{0}', space=vmem, size = 0x40000, scoped, tag = 'input window, operand 3, single buffered']
    #allocation8 [shape = 's32[1]{0}', space=sflag, size = 0x4, scoped, tag = 'scoped memory for complexnet_forward.1']
    #allocation9 [shape = 'u8[1024]{0}', space=vmem, size = 0x400, scoped, tag = 'input window, operand 4, single buffered']
    #allocation10 [shape = 'u8[65536]{0}', space=vmem, size = 0x10000, scoped, tag = 'input window, operand 5, single buffered']
    #allocation11 [shape = 's32[1]{0}', space=sflag, size = 0x4, scoped, tag = 'scoped memory for complexnet_forward.1']
    #allocation12 [shape = 'u8[512]{0}', space=vmem, size = 0x400, scoped, tag = 'input window, operand 6, single buffered']
    #allocation13 [shape = 'u8[32768]{0}', space=vmem, size = 0x8000, scoped, tag = 'input window, operand 7, single buffered']
    #allocation14 [shape = 's32[1]{0}', space=sflag, size = 0x4, scoped, tag = 'scoped memory for complexnet_forward.1']
    #allocation15 [shape = 'u8[512]{0}', space=vmem, size = 0x400, scoped, tag = 'input window, operand 8, single buffered']
    #allocation16 [shape = 'u8[32768]{0}', space=vmem, size = 0x8000, scoped, tag = 'input window, operand 9, single buffered']
    #allocation17 [shape = 's32[1]{0}', space=sflag, size = 0x4, scoped, tag = 'scoped memory for complexnet_forward.1']
    #allocation18 [shape = 'u8[512]{0}', space=vmem, size = 0x400, scoped, tag = 'input window, operand 10, single buffered']
    %16 = vsyncpa [#allocation3], 0
    %s17 = scalar_lea.sflag [#allocation3], 1
    %18 = vsyncpa %s17, 0
    %19 = vsyncpa [#allocation5], 0
    %20 = vsyncpa [#allocation8], 0
    %21 = vsyncpa [#allocation11], 0
    %22 = vsyncpa [#allocation14], 0
    %23 = vsyncpa [#allocation17], 0
    loop: start=0, step=1, limit=6
    $region2: #{complexnet_forward.1} parent=1 // loop_pre_header
      _
    $region3: #{complexnet_forward.1} parent=1 // loop_header
      %s25 = sphi 0, %s29
      %p26 = scmp.ge.s32.totalorder %s25, 6
      %s35 = sphi 0, %s37
      %s38 = sphi 0, %s35
      %s39 = sphi 0, %s38
      %s55 = sphi 0, %s39
      %s59 = sphi 0, %s59
      %s61 = sphi 0, %s59
      %s62 = sphi 0, %s61
      %s76 = sphi 0, %s62
      %s80 = sphi 0, %s80
      %s82 = sphi 0, %s80
      %s83 = sphi 0, %s82
      %s97 = sphi 0, %s83
      %s101 = sphi 0, %s101
      %s103 = sphi 0, %s101
      %s104 = sphi 0, %s103
      %s118 = sphi 0, %s104
      %s122 = sphi 0, %s122
      %s124 = sphi 0, %s122
      %s125 = sphi 0, %s124
      %s139 = sphi 0, %s125
      %s143 = sphi 0, %s143
      %s145 = sphi 0, %s143
      %s146 = sphi 0, %s145
      %s160 = sphi 0, %s146
      %s164 = sphi 0, %s164
      %s166 = sphi 0, %s164
      %s167 = sphi 0, %s166
      %s181 = sphi 0, %s167
      %s185 = sphi 0, %s185
      %s187 = sphi 0, %s185
      %s188 = sphi 0, %s187
      %s202 = sphi 0, %s188
      %s206 = sphi 0, %s206
      %s208 = sphi 0, %s206
      %s209 = sphi 0, %s208
      %s223 = sphi 0, %s209
      %s227 = sphi 0, %s227
      %s229 = sphi 0, %s227
      %s230 = sphi 0, %s229
      %s244 = sphi 0, %s230
      %s248 = sphi 0, %s248
      %s250 = sphi 0, %s248
      %s251 = sphi 0, %s250
      %s265 = sphi 0, %s251
      %s271 = sphi 0, %s273
      %s274 = sphi 0, %s271
      %s275 = sphi 0, %s274
      %s291 = sphi 0, %s275
    $region4: #{complexnet_forward.1} parent=1 // loop_header_branch
      %28 = sbr.rel (%p26) target = $region8
    $region5: #{complexnet_forward.1} parent=1 // loop_body
      %s30 = ssub.s32 %s25, 1
      %s31 = ssub.s32 %s25, 2
      %s32 = sadd.s32 %s25, 1
      %s33 = ssub.s32 %s25, %s32
      %p34 = scmp.eq.s32.totalorder %s33, 0
      %s36 = sadd.s32 %s35, 1
      %s37 = scalar_select %p34, %s35, %s36
      %p40 = pneg %p34
      %p41 = scmp.eq.s32.totalorder %s25, 3
      %p42 = por %p40, %p41
      %p43 = scmp.ne.s32.totalorder %s35, %s38
      %p44 = scmp.eq.s32.totalorder %s25, 0
      %p45 = por %p43, %p44
      %p46 = scmp.ne.s32.totalorder %s35, %s38
      %p47 = scmp.eq.s32.totalorder %s30, 3
      %p48 = por %p46, %p47
      %p49 = scmp.ne.s32.totalorder %s38, %s39
      %p50 = scmp.eq.s32.totalorder %s30, 0
      %p51 = por %p49, %p50
      %p52 = scmp.ne.s32.totalorder %s38, %s39
      %p53 = scmp.eq.s32.totalorder %s31, 3
      %p54 = por %p52, %p53
      %p56 = scmp.ne.s32.totalorder %s39, %s55
      %p57 = scmp.eq.s32.totalorder %s31, 0
      %p58 = por %p56, %p57
      %s60 = sadd.s32 %s59, 1
      %p63 = scmp.eq.s32.totalorder %s25, 3
      %p64 = scmp.ne.s32.totalorder %s59, %s61
      %p65 = scmp.eq.s32.totalorder %s25, 0
      %p66 = por %p64, %p65
      %p67 = scmp.ne.s32.totalorder %s59, %s61
      %p68 = scmp.eq.s32.totalorder %s30, 3
      %p69 = por %p67, %p68
      %p70 = scmp.ne.s32.totalorder %s61, %s62
      %p71 = scmp.eq.s32.totalorder %s30, 0
      %p72 = por %p70, %p71
      %p73 = scmp.ne.s32.totalorder %s61, %s62
      %p74 = scmp.eq.s32.totalorder %s31, 3
      %p75 = por %p73, %p74
      %p77 = scmp.ne.s32.totalorder %s62, %s76
      %p78 = scmp.eq.s32.totalorder %s31, 0
      %p79 = por %p77, %p78
      %s81 = sadd.s32 %s80, 1
      %p84 = scmp.eq.s32.totalorder %s25, 3
      %p85 = scmp.ne.s32.totalorder %s80, %s82
      %p86 = scmp.eq.s32.totalorder %s25, 0
      %p87 = por %p85, %p86
      %p88 = scmp.ne.s32.totalorder %s80, %s82
      %p89 = scmp.eq.s32.totalorder %s30, 3
      %p90 = por %p88, %p89
      %p91 = scmp.ne.s32.totalorder %s82, %s83
      %p92 = scmp.eq.s32.totalorder %s30, 0
      %p93 = por %p91, %p92
      %p94 = scmp.ne.s32.totalorder %s82, %s83
      %p95 = scmp.eq.s32.totalorder %s31, 3
      %p96 = por %p94, %p95
      %p98 = scmp.ne.s32.totalorder %s83, %s97
      %p99 = scmp.eq.s32.totalorder %s31, 0
      %p100 = por %p98, %p99
      %s102 = sadd.s32 %s101, 1
      %p105 = scmp.eq.s32.totalorder %s25, 3
      %p106 = scmp.ne.s32.totalorder %s101, %s103
      %p107 = scmp.eq.s32.totalorder %s25, 0
      %p108 = por %p106, %p107
      %p109 = scmp.ne.s32.totalorder %s101, %s103
      %p110 = scmp.eq.s32.totalorder %s30, 3
      %p111 = por %p109, %p110
      %p112 = scmp.ne.s32.totalorder %s103, %s104
      %p113 = scmp.eq.s32.totalorder %s30, 0
      %p114 = por %p112, %p113
      %p115 = scmp.ne.s32.totalorder %s103, %s104
      %p116 = scmp.eq.s32.totalorder %s31, 3
      %p117 = por %p115, %p116
      %p119 = scmp.ne.s32.totalorder %s104, %s118
      %p120 = scmp.eq.s32.totalorder %s31, 0
      %p121 = por %p119, %p120
      %s123 = sadd.s32 %s122, 1
      %p126 = scmp.eq.s32.totalorder %s25, 3
      %p127 = scmp.ne.s32.totalorder %s122, %s124
      %p128 = scmp.eq.s32.totalorder %s25, 0
      %p129 = por %p127, %p128
      %p130 = scmp.ne.s32.totalorder %s122, %s124
      %p131 = scmp.eq.s32.totalorder %s30, 3
      %p132 = por %p130, %p131
      %p133 = scmp.ne.s32.totalorder %s124, %s125
      %p134 = scmp.eq.s32.totalorder %s30, 0
      %p135 = por %p133, %p134
      %p136 = scmp.ne.s32.totalorder %s124, %s125
      %p137 = scmp.eq.s32.totalorder %s31, 3
      %p138 = por %p136, %p137
      %p140 = scmp.ne.s32.totalorder %s125, %s139
      %p141 = scmp.eq.s32.totalorder %s31, 0
      %p142 = por %p140, %p141
      %s144 = sadd.s32 %s143, 1
      %p147 = scmp.eq.s32.totalorder %s25, 3
      %p148 = scmp.ne.s32.totalorder %s143, %s145
      %p149 = scmp.eq.s32.totalorder %s25, 0
      %p150 = por %p148, %p149
      %p151 = scmp.ne.s32.totalorder %s143, %s145
      %p152 = scmp.eq.s32.totalorder %s30, 3
      %p153 = por %p151, %p152
      %p154 = scmp.ne.s32.totalorder %s145, %s146
      %p155 = scmp.eq.s32.totalorder %s30, 0
      %p156 = por %p154, %p155
      %p157 = scmp.ne.s32.totalorder %s145, %s146
      %p158 = scmp.eq.s32.totalorder %s31, 3
      %p159 = por %p157, %p158
      %p161 = scmp.ne.s32.totalorder %s146, %s160
      %p162 = scmp.eq.s32.totalorder %s31, 0
      %p163 = por %p161, %p162
      %s165 = sadd.s32 %s164, 1
      %p168 = scmp.eq.s32.totalorder %s25, 3
      %p169 = scmp.ne.s32.totalorder %s164, %s166
      %p170 = scmp.eq.s32.totalorder %s25, 0
      %p171 = por %p169, %p170
      %p172 = scmp.ne.s32.totalorder %s164, %s166
      %p173 = scmp.eq.s32.totalorder %s30, 3
      %p174 = por %p172, %p173
      %p175 = scmp.ne.s32.totalorder %s166, %s167
      %p176 = scmp.eq.s32.totalorder %s30, 0
      %p177 = por %p175, %p176
      %p178 = scmp.ne.s32.totalorder %s166, %s167
      %p179 = scmp.eq.s32.totalorder %s31, 3
      %p180 = por %p178, %p179
      %p182 = scmp.ne.s32.totalorder %s167, %s181
      %p183 = scmp.eq.s32.totalorder %s31, 0
      %p184 = por %p182, %p183
      %s186 = sadd.s32 %s185, 1
      %p189 = scmp.eq.s32.totalorder %s25, 3
      %p190 = scmp.ne.s32.totalorder %s185, %s187
      %p191 = scmp.eq.s32.totalorder %s25, 0
      %p192 = por %p190, %p191
      %p193 = scmp.ne.s32.totalorder %s185, %s187
      %p194 = scmp.eq.s32.totalorder %s30, 3
      %p195 = por %p193, %p194
      %p196 = scmp.ne.s32.totalorder %s187, %s188
      %p197 = scmp.eq.s32.totalorder %s30, 0
      %p198 = por %p196, %p197
      %p199 = scmp.ne.s32.totalorder %s187, %s188
      %p200 = scmp.eq.s32.totalorder %s31, 3
      %p201 = por %p199, %p200
      %p203 = scmp.ne.s32.totalorder %s188, %s202
      %p204 = scmp.eq.s32.totalorder %s31, 0
      %p205 = por %p203, %p204
      %s207 = sadd.s32 %s206, 1
      %p210 = scmp.eq.s32.totalorder %s25, 3
      %p211 = scmp.ne.s32.totalorder %s206, %s208
      %p212 = scmp.eq.s32.totalorder %s25, 0
      %p213 = por %p211, %p212
      %p214 = scmp.ne.s32.totalorder %s206, %s208
      %p215 = scmp.eq.s32.totalorder %s30, 3
      %p216 = por %p214, %p215
      %p217 = scmp.ne.s32.totalorder %s208, %s209
      %p218 = scmp.eq.s32.totalorder %s30, 0
      %p219 = por %p217, %p218
      %p220 = scmp.ne.s32.totalorder %s208, %s209
      %p221 = scmp.eq.s32.totalorder %s31, 3
      %p222 = por %p220, %p221
      %p224 = scmp.ne.s32.totalorder %s209, %s223
      %p225 = scmp.eq.s32.totalorder %s31, 0
      %p226 = por %p224, %p225
      %s228 = sadd.s32 %s227, 1
      %p231 = scmp.eq.s32.totalorder %s25, 3
      %p232 = scmp.ne.s32.totalorder %s227, %s229
      %p233 = scmp.eq.s32.totalorder %s25, 0
      %p234 = por %p232, %p233
      %p235 = scmp.ne.s32.totalorder %s227, %s229
      %p236 = scmp.eq.s32.totalorder %s30, 3
      %p237 = por %p235, %p236
      %p238 = scmp.ne.s32.totalorder %s229, %s230
      %p239 = scmp.eq.s32.totalorder %s30, 0
      %p240 = por %p238, %p239
      %p241 = scmp.ne.s32.totalorder %s229, %s230
      %p242 = scmp.eq.s32.totalorder %s31, 3
      %p243 = por %p241, %p242
      %p245 = scmp.ne.s32.totalorder %s230, %s244
      %p246 = scmp.eq.s32.totalorder %s31, 0
      %p247 = por %p245, %p246
      %s249 = sadd.s32 %s248, 1
      %p252 = scmp.eq.s32.totalorder %s25, 3
      %p253 = scmp.ne.s32.totalorder %s248, %s250
      %p254 = scmp.eq.s32.totalorder %s25, 0
      %p255 = por %p253, %p254
      %p256 = scmp.ne.s32.totalorder %s248, %s250
      %p257 = scmp.eq.s32.totalorder %s30, 3
      %p258 = por %p256, %p257
      %p259 = scmp.ne.s32.totalorder %s250, %s251
      %p260 = scmp.eq.s32.totalorder %s30, 0
      %p261 = por %p259, %p260
      %p262 = scmp.ne.s32.totalorder %s250, %s251
      %p263 = scmp.eq.s32.totalorder %s31, 3
      %p264 = por %p262, %p263
      %p266 = scmp.ne.s32.totalorder %s251, %s265
      %p267 = scmp.eq.s32.totalorder %s31, 0
      %p268 = por %p266, %p267
      %s269 = ssub.s32 %s25, %s32
      %p270 = scmp.eq.s32.totalorder %s269, 0
      %s272 = sadd.s32 %s271, 1
      %s273 = scalar_select %p270, %s271, %s272
      %p276 = pneg %p270
      %p277 = scmp.eq.s32.totalorder %s25, 3
      %p278 = por %p276, %p277
      %p279 = scmp.ne.s32.totalorder %s271, %s274
      %p280 = scmp.eq.s32.totalorder %s25, 0
      %p281 = por %p279, %p280
      %p282 = scmp.ne.s32.totalorder %s271, %s274
      %p283 = scmp.eq.s32.totalorder %s30, 3
      %p284 = por %p282, %p283
      %p285 = scmp.ne.s32.totalorder %s274, %s275
      %p286 = scmp.eq.s32.totalorder %s30, 0
      %p287 = por %p285, %p286
      %p288 = scmp.ne.s32.totalorder %s274, %s275
      %p289 = scmp.eq.s32.totalorder %s31, 3
      %p290 = por %p288, %p289
      %p292 = scmp.ne.s32.totalorder %s275, %s291
      %p293 = scmp.eq.s32.totalorder %s31, 0
      %p294 = por %p292, %p293
      %p295 = scmp.le.s32.totalorder 1, %s25
      %p296 = scmp.lt.s32.totalorder %s25, 5
      %p297 = pnand %p295, %p296
      %p298 = pneg %p297
      // Predicated region
      $region9: #{complexnet_forward.1} parent=5 // pred_check
        _
      $region10: #{complexnet_forward.1} parent=5 // pred_check_branch
        %300 = sbr.rel (%p297) target = $region12
      $region11: #{complexnet_forward.1} parent=5 // pred_region
        %s301 = ssub.s32 %s25, 1
        // Predicated region
        $region13: #{complexnet_forward.1} parent=11 // pred_check
          %p302 = pneg %p72
        $region14: #{complexnet_forward.1} parent=11 // pred_check_branch
          %304 = sbr.rel (%p302) target = $region16
        $region15: #{complexnet_forward.1} parent=11 // pred_region
          %s306 = ssub.s32 32768, 32768
          %307 = vsyncadd [#allocation5], %s306
          %s308 = sshll.u32 [#allocation4], 4
          %s309 = int_to_ptr.vmem [resolvable:$true] %s308
          %314 = dma.hbm_to_vmem [thread:$0]  %s1, 32768, %s309, [#allocation5], 256, 256, 16
        $region16: #{complexnet_forward.1} parent=11 // pred_fallthru
          _
        // Predicated region
        $region17: #{complexnet_forward.1} parent=11 // pred_check
          %p315 = pneg %p93
        $region18: #{complexnet_forward.1} parent=11 // pred_check_branch
          %317 = sbr.rel (%p315) target = $region20
        $region19: #{complexnet_forward.1} parent=11 // pred_region
          %s319 = ssub.s32 64, 64
          %320 = vsyncadd [#allocation5], %s319
          %s322 = sshll.u32 [#allocation6], 4
          %s323 = int_to_ptr.vmem [resolvable:$true] %s322
          %325 = dma.hbm_to_vmem [thread:$0]  %s2, 64, %s323, [#allocation5]
        $region20: #{complexnet_forward.1} parent=11 // pred_fallthru
          _
        // Predicated region
        $region21: #{complexnet_forward.1} parent=11 // pred_check
          %p326 = pneg %p114
        $region22: #{complexnet_forward.1} parent=11 // pred_check_branch
          %328 = sbr.rel (%p326) target = $region24
        $region23: #{complexnet_forward.1} parent=11 // pred_region
          %s330 = ssub.s32 8192, 8192
          %331 = vsyncadd [#allocation8], %s330
          %s332 = sshll.u32 [#allocation7], 4
          %s333 = int_to_ptr.vmem [resolvable:$true] %s332
          %338 = dma.hbm_to_vmem [thread:$0]  %s3, 8192, %s333, [#allocation8], 128, 128, 8
        $region24: #{complexnet_forward.1} parent=11 // pred_fallthru
          _
        // Predicated region
        $region25: #{complexnet_forward.1} parent=11 // pred_check
          %p339 = pneg %p135
        $region26: #{complexnet_forward.1} parent=11 // pred_check_branch
          %341 = sbr.rel (%p339) target = $region28
        $region27: #{complexnet_forward.1} parent=11 // pred_region
          %s343 = ssub.s32 32, 32
          %344 = vsyncadd [#allocation8], %s343
          %s346 = sshll.u32 [#allocation9], 4
          %s347 = int_to_ptr.vmem [resolvable:$true] %s346
          %349 = dma.hbm_to_vmem [thread:$0]  %s4, 32, %s347, [#allocation8]
        $region28: #{complexnet_forward.1} parent=11 // pred_fallthru
          _
        // Predicated region
        $region29: #{complexnet_forward.1} parent=11 // pred_check
          %p350 = pneg %p156
        $region30: #{complexnet_forward.1} parent=11 // pred_check_branch
          %352 = sbr.rel (%p350) target = $region32
        $region31: #{complexnet_forward.1} parent=11 // pred_region
          %s354 = ssub.s32 2048, 2048
          %355 = vsyncadd [#allocation11], %s354
          %s356 = sshll.u32 [#allocation10], 4
          %s357 = int_to_ptr.vmem [resolvable:$true] %s356
          %362 = dma.hbm_to_vmem [thread:$0]  %s5, 2048, %s357, [#allocation11], 64, 64, 4
        $region32: #{complexnet_forward.1} parent=11 // pred_fallthru
          _
        // Predicated region
        $region33: #{complexnet_forward.1} parent=11 // pred_check
          %p363 = pneg %p177
        $region34: #{complexnet_forward.1} parent=11 // pred_check_branch
          %365 = sbr.rel (%p363) target = $region36
        $region35: #{complexnet_forward.1} parent=11 // pred_region
          %s367 = ssub.s32 16, 16
          %368 = vsyncadd [#allocation11], %s367
          %s370 = sshll.u32 [#allocation12], 4
          %s371 = int_to_ptr.vmem [resolvable:$true] %s370
          %373 = dma.hbm_to_vmem [thread:$0]  %s6, 16, %s371, [#allocation11]
        $region36: #{complexnet_forward.1} parent=11 // pred_fallthru
          _
        // Predicated region
        $region37: #{complexnet_forward.1} parent=11 // pred_check
          %p374 = pneg %p198
        $region38: #{complexnet_forward.1} parent=11 // pred_check_branch
          %376 = sbr.rel (%p374) target = $region40
        $region39: #{complexnet_forward.1} parent=11 // pred_region
          %s378 = ssub.s32 1024, 1024
          %379 = vsyncadd [#allocation14], %s378
          %s380 = sshll.u32 [#allocation13], 4
          %s381 = int_to_ptr.vmem [resolvable:$true] %s380
          %386 = dma.hbm_to_vmem [thread:$0]  %s7, 1024, %s381, [#allocation14], 64, 64, 4
        $region40: #{complexnet_forward.1} parent=11 // pred_fallthru
          _
        // Predicated region
        $region41: #{complexnet_forward.1} parent=11 // pred_check
          %p387 = pneg %p219
        $region42: #{complexnet_forward.1} parent=11 // pred_check_branch
          %389 = sbr.rel (%p387) target = $region44
        $region43: #{complexnet_forward.1} parent=11 // pred_region
          %s391 = ssub.s32 16, 16
          %392 = vsyncadd [#allocation14], %s391
          %s394 = sshll.u32 [#allocation15], 4
          %s395 = int_to_ptr.vmem [resolvable:$true] %s394
          %397 = dma.hbm_to_vmem [thread:$0]  %s8, 16, %s395, [#allocation14]
        $region44: #{complexnet_forward.1} parent=11 // pred_fallthru
          _
        // Predicated region
        $region45: #{complexnet_forward.1} parent=11 // pred_check
          %p398 = pneg %p240
        $region46: #{complexnet_forward.1} parent=11 // pred_check_branch
          %400 = sbr.rel (%p398) target = $region48
        $region47: #{complexnet_forward.1} parent=11 // pred_region
          %s402 = ssub.s32 1024, 1024
          %403 = vsyncadd [#allocation17], %s402
          %s404 = sshll.u32 [#allocation16], 4
          %s405 = int_to_ptr.vmem [resolvable:$true] %s404
          %410 = dma.hbm_to_vmem [thread:$0]  %s9, 1024, %s405, [#allocation17], 64, 64, 4
        $region48: #{complexnet_forward.1} parent=11 // pred_fallthru
          _
        // Predicated region
        $region49: #{complexnet_forward.1} parent=11 // pred_check
          %p411 = pneg %p261
        $region50: #{complexnet_forward.1} parent=11 // pred_check_branch
          %413 = sbr.rel (%p411) target = $region52
        $region51: #{complexnet_forward.1} parent=11 // pred_region
          %s415 = ssub.s32 16, 16
          %416 = vsyncadd [#allocation17], %s415
          %s418 = sshll.u32 [#allocation18], 4
          %s419 = int_to_ptr.vmem [resolvable:$true] %s418
          %421 = dma.hbm_to_vmem [thread:$0]  %s10, 16, %s419, [#allocation17]
        $region52: #{complexnet_forward.1} parent=11 // pred_fallthru
          _
      $region12: #{complexnet_forward.1} parent=5 // pred_fallthru
        _
      %p422 = scmp.lt.s32.totalorder %s25, 4
      // Predicated region
      $region53: #{complexnet_forward.1} parent=5 // pred_check
        %p423 = pneg %p422
      $region54: #{complexnet_forward.1} parent=5 // pred_check_branch
        %425 = sbr.rel (%p423) target = $region56
      $region55: #{complexnet_forward.1} parent=5 // pred_region
        // Predicated region
        $region57: #{complexnet_forward.1} parent=55 // pred_check
          %p426 = pneg %p45
        $region58: #{complexnet_forward.1} parent=55 // pred_check_branch
          %428 = sbr.rel (%p426) target = $region60
        $region59: #{complexnet_forward.1} parent=55 // pred_region
          %s429 = sand.u32 %s35, 1
          %s430 = scalar_lea.sflag [#allocation3], %s429
          %s431 = sand.u32 %s35, 1
          %s432 = smul.addr %s431, 1024
          %s433 = scalar_lea.vmem [#allocation2], %s432
          %s434 = smul.u32 16, %s25
          %s436 = ssub.s32 16384, 16384
          %437 = vsyncadd %s430, %s436
          %s438 = smul.addr %s434, 8
          %s439 = smul.addr %s438, 128
          %s440 = scalar_lea.hbm %s0, %s439
          %s441 = sshll.u32 %s433, 4
          %s442 = int_to_ptr.vmem [resolvable:$true] %s441
          %447 = dma.hbm_to_vmem [thread:$0]  %s440, 16384, %s442, %s430, 1024, 1024, 64
        $region60: #{complexnet_forward.1} parent=55 // pred_fallthru
          _
      $region56: #{complexnet_forward.1} parent=5 // pred_fallthru
        _
      %p448 = scmp.le.s32.totalorder 1, %s25
      %p449 = scmp.lt.s32.totalorder %s25, 5
      %p450 = pnand %p448, %p449
      %p451 = pneg %p450
      // Predicated region
      $region61: #{complexnet_forward.1} parent=5 // pred_check
        _
      $region62: #{complexnet_forward.1} parent=5 // pred_check_branch
        %453 = sbr.rel (%p450) target = $region64
      $region63: #{complexnet_forward.1} parent=5 // pred_region
        %s454 = ssub.s32 %s25, 1
        %s455 = sand.u32 %s38, 1
        %s456 = scalar_lea.sflag [#allocation3], %s455
        %s457 = sand.u32 %s38, 1
        %s458 = smul.addr %s457, 1024
        %s459 = scalar_lea.vmem [#allocation2], %s458
        // Predicated region
        $region65: #{complexnet_forward.1} parent=63 // pred_check
          %p460 = pneg %p51
        $region66: #{complexnet_forward.1} parent=63 // pred_check_branch
          %462 = sbr.rel (%p460) target = $region68
        $region67: #{complexnet_forward.1} parent=63 // pred_region
          %463 = dma.done %s456, 16384
        $region68: #{complexnet_forward.1} parent=63 // pred_fallthru
          _
        // Predicated region
        $region69: #{complexnet_forward.1} parent=63 // pred_check
          %p464 = pneg %p72
        $region70: #{complexnet_forward.1} parent=63 // pred_check_branch
          %466 = sbr.rel (%p464) target = $region72
        $region71: #{complexnet_forward.1} parent=63 // pred_region
          %467 = dma.done [#allocation5], 32768
        $region72: #{complexnet_forward.1} parent=63 // pred_fallthru
          _
        // Predicated region
        $region73: #{complexnet_forward.1} parent=63 // pred_check
          %p468 = pneg %p93
        $region74: #{complexnet_forward.1} parent=63 // pred_check_branch
          %470 = sbr.rel (%p468) target = $region76
        $region75: #{complexnet_forward.1} parent=63 // pred_region
          %471 = dma.done [#allocation5], 64
        $region76: #{complexnet_forward.1} parent=63 // pred_fallthru
          _
        // Predicated region
        $region77: #{complexnet_forward.1} parent=63 // pred_check
          %p472 = pneg %p114
        $region78: #{complexnet_forward.1} parent=63 // pred_check_branch
          %474 = sbr.rel (%p472) target = $region80
        $region79: #{complexnet_forward.1} parent=63 // pred_region
          %475 = dma.done [#allocation8], 8192
        $region80: #{complexnet_forward.1} parent=63 // pred_fallthru
          _
        // Predicated region
        $region81: #{complexnet_forward.1} parent=63 // pred_check
          %p476 = pneg %p135
        $region82: #{complexnet_forward.1} parent=63 // pred_check_branch
          %478 = sbr.rel (%p476) target = $region84
        $region83: #{complexnet_forward.1} parent=63 // pred_region
          %479 = dma.done [#allocation8], 32
        $region84: #{complexnet_forward.1} parent=63 // pred_fallthru
          _
        // Predicated region
        $region85: #{complexnet_forward.1} parent=63 // pred_check
          %p480 = pneg %p156
        $region86: #{complexnet_forward.1} parent=63 // pred_check_branch
          %482 = sbr.rel (%p480) target = $region88
        $region87: #{complexnet_forward.1} parent=63 // pred_region
          %483 = dma.done [#allocation11], 2048
        $region88: #{complexnet_forward.1} parent=63 // pred_fallthru
          _
        // Predicated region
        $region89: #{complexnet_forward.1} parent=63 // pred_check
          %p484 = pneg %p177
        $region90: #{complexnet_forward.1} parent=63 // pred_check_branch
          %486 = sbr.rel (%p484) target = $region92
        $region91: #{complexnet_forward.1} parent=63 // pred_region
          %487 = dma.done [#allocation11], 16
        $region92: #{complexnet_forward.1} parent=63 // pred_fallthru
          _
        // Predicated region
        $region93: #{complexnet_forward.1} parent=63 // pred_check
          %p488 = pneg %p198
        $region94: #{complexnet_forward.1} parent=63 // pred_check_branch
          %490 = sbr.rel (%p488) target = $region96
        $region95: #{complexnet_forward.1} parent=63 // pred_region
          %491 = dma.done [#allocation14], 1024
        $region96: #{complexnet_forward.1} parent=63 // pred_fallthru
          _
        // Predicated region
        $region97: #{complexnet_forward.1} parent=63 // pred_check
          %p492 = pneg %p219
        $region98: #{complexnet_forward.1} parent=63 // pred_check_branch
          %494 = sbr.rel (%p492) target = $region100
        $region99: #{complexnet_forward.1} parent=63 // pred_region
          %495 = dma.done [#allocation14], 16
        $region100: #{complexnet_forward.1} parent=63 // pred_fallthru
          _
        // Predicated region
        $region101: #{complexnet_forward.1} parent=63 // pred_check
          %p496 = pneg %p240
        $region102: #{complexnet_forward.1} parent=63 // pred_check_branch
          %498 = sbr.rel (%p496) target = $region104
        $region103: #{complexnet_forward.1} parent=63 // pred_region
          %499 = dma.done [#allocation17], 1024
        $region104: #{complexnet_forward.1} parent=63 // pred_fallthru
          _
        // Predicated region
        $region105: #{complexnet_forward.1} parent=63 // pred_check
          %p500 = pneg %p261
        $region106: #{complexnet_forward.1} parent=63 // pred_check_branch
          %502 = sbr.rel (%p500) target = $region108
        $region107: #{complexnet_forward.1} parent=63 // pred_region
          %503 = dma.done [#allocation17], 16
        $region108: #{complexnet_forward.1} parent=63 // pred_fallthru
          _
        %s504 = sand.u32 %s38, 1
        %s505 = scalar_lea.sflag [#allocation3], %s504
        %s506 = sand.u32 %s38, 1
        %s507 = smul.addr %s506, 1024
        %s508 = scalar_lea.vmem [#allocation2], %s507
        %p509 = pneg %p51
        %p510 = pneg %p48
        %p511 = pneg %p72
        %p512 = pneg %p69
        %p513 = pneg %p93
        %p514 = pneg %p90
        %p515 = pneg %p114
        %p516 = pneg %p111
        %p517 = pneg %p135
        %p518 = pneg %p132
        %p519 = pneg %p156
        %p520 = pneg %p153
        %p521 = pneg %p177
        %p522 = pneg %p174
        %p523 = pneg %p198
        %p524 = pneg %p195
        %p525 = pneg %p219
        %p526 = pneg %p216
        %p527 = pneg %p240
        %p528 = pneg %p237
        %p529 = pneg %p261
        %p530 = pneg %p258
        %p531 = pneg %p287
        %p532 = pneg %p284
        %s533 = smul.u32 16, %s30
        %p534 = scmp.lt.s32.totalorder %s533, 63
        %s535 = scalar_select %p534, %s533, 63
        %s536 = smul.addr %s535, 8
        %s537 = scalar_lea.vmem %s11, %s536
        %s538 = smul.u32 16, %s30
        %s539 = smul.u32 16, %s30
        %p540 = scmp.lt.s32.totalorder %s539, 63
        %s541 = scalar_select %p540, %s539, 63
        %s542 = smul.addr %s541, 8
        %s543 = scalar_lea.vmem %s11, %s542
        %s544 = smul.u32 16, %s30
        %v546 = vld [vmem:[%s459] sm:$0xff]
        %v547 = vld [vmem:[%s459 + $0x8] sm:$0xff]
        %v548 = vld [vmem:[%s459 + $0x10] sm:$0xff]
        %v549 = vld [vmem:[%s459 + $0x18] sm:$0xff]
        %v550 = vld [vmem:[%s459 + $0x20] sm:$0xff]
        %v551 = vld [vmem:[%s459 + $0x28] sm:$0xff]
        %v552 = vld [vmem:[%s459 + $0x30] sm:$0xff]
        %v553 = vld [vmem:[%s459 + $0x38] sm:$0xff]
        %v554 = vld [vmem:[%s459 + $0x40] sm:$0xff]
        %v555 = vld [vmem:[%s459 + $0x48] sm:$0xff]
        %v556 = vld [vmem:[%s459 + $0x50] sm:$0xff]
        %v557 = vld [vmem:[%s459 + $0x58] sm:$0xff]
        %v558 = vld [vmem:[%s459 + $0x60] sm:$0xff]
        %v559 = vld [vmem:[%s459 + $0x68] sm:$0xff]
        %v560 = vld [vmem:[%s459 + $0x70] sm:$0xff]
        %v561 = vld [vmem:[%s459 + $0x78] sm:$0xff]
        %v562 = vld [vmem:[%s459 + $0x80] sm:$0xff]
        %v563 = vld [vmem:[%s459 + $0x88] sm:$0xff]
        %v564 = vld [vmem:[%s459 + $0x90] sm:$0xff]
        %v565 = vld [vmem:[%s459 + $0x98] sm:$0xff]
        %v566 = vld [vmem:[%s459 + $0xa0] sm:$0xff]
        %v567 = vld [vmem:[%s459 + $0xa8] sm:$0xff]
        %v568 = vld [vmem:[%s459 + $0xb0] sm:$0xff]
        %v569 = vld [vmem:[%s459 + $0xb8] sm:$0xff]
        %v570 = vld [vmem:[%s459 + $0xc0] sm:$0xff]
        %v571 = vld [vmem:[%s459 + $0xc8] sm:$0xff]
        %v572 = vld [vmem:[%s459 + $0xd0] sm:$0xff]
        %v573 = vld [vmem:[%s459 + $0xd8] sm:$0xff]
        %v574 = vld [vmem:[%s459 + $0xe0] sm:$0xff]
        %v575 = vld [vmem:[%s459 + $0xe8] sm:$0xff]
        %v576 = vld [vmem:[%s459 + $0xf0] sm:$0xff]
        %v577 = vld [vmem:[%s459 + $0xf8] sm:$0xff]
        %v578 = vld [vmem:[%s459 + $0x100] sm:$0xff]
        %v579 = vld [vmem:[%s459 + $0x108] sm:$0xff]
        %v580 = vld [vmem:[%s459 + $0x110] sm:$0xff]
        %v581 = vld [vmem:[%s459 + $0x118] sm:$0xff]
        %v582 = vld [vmem:[%s459 + $0x120] sm:$0xff]
        %v583 = vld [vmem:[%s459 + $0x128] sm:$0xff]
        %v584 = vld [vmem:[%s459 + $0x130] sm:$0xff]
        %v585 = vld [vmem:[%s459 + $0x138] sm:$0xff]
        %v586 = vld [vmem:[%s459 + $0x140] sm:$0xff]
        %v587 = vld [vmem:[%s459 + $0x148] sm:$0xff]
        %v588 = vld [vmem:[%s459 + $0x150] sm:$0xff]
        %v589 = vld [vmem:[%s459 + $0x158] sm:$0xff]
        %v590 = vld [vmem:[%s459 + $0x160] sm:$0xff]
        %v591 = vld [vmem:[%s459 + $0x168] sm:$0xff]
        %v592 = vld [vmem:[%s459 + $0x170] sm:$0xff]
        %v593 = vld [vmem:[%s459 + $0x178] sm:$0xff]
        %v594 = vld [vmem:[%s459 + $0x180] sm:$0xff]
        %v595 = vld [vmem:[%s459 + $0x188] sm:$0xff]
        %v596 = vld [vmem:[%s459 + $0x190] sm:$0xff]
        %v597 = vld [vmem:[%s459 + $0x198] sm:$0xff]
        %v598 = vld [vmem:[%s459 + $0x1a0] sm:$0xff]
        %v599 = vld [vmem:[%s459 + $0x1a8] sm:$0xff]
        %v600 = vld [vmem:[%s459 + $0x1b0] sm:$0xff]
        %v601 = vld [vmem:[%s459 + $0x1b8] sm:$0xff]
        %v602 = vld [vmem:[%s459 + $0x1c0] sm:$0xff]
        %v603 = vld [vmem:[%s459 + $0x1c8] sm:$0xff]
        %v604 = vld [vmem:[%s459 + $0x1d0] sm:$0xff]
        %v605 = vld [vmem:[%s459 + $0x1d8] sm:$0xff]
        %v606 = vld [vmem:[%s459 + $0x1e0] sm:$0xff]
        %v607 = vld [vmem:[%s459 + $0x1e8] sm:$0xff]
        %v608 = vld [vmem:[%s459 + $0x1f0] sm:$0xff]
        %v609 = vld [vmem:[%s459 + $0x1f8] sm:$0xff]
        %v610 = vld [vmem:[%s459 + $0x200] sm:$0xff]
        %v611 = vld [vmem:[%s459 + $0x208] sm:$0xff]
        %v612 = vld [vmem:[%s459 + $0x210] sm:$0xff]
        %v613 = vld [vmem:[%s459 + $0x218] sm:$0xff]
        %v614 = vld [vmem:[%s459 + $0x220] sm:$0xff]
        %v615 = vld [vmem:[%s459 + $0x228] sm:$0xff]
        %v616 = vld [vmem:[%s459 + $0x230] sm:$0xff]
        %v617 = vld [vmem:[%s459 + $0x238] sm:$0xff]
        %v618 = vld [vmem:[%s459 + $0x240] sm:$0xff]
        %v619 = vld [vmem:[%s459 + $0x248] sm:$0xff]
        %v620 = vld [vmem:[%s459 + $0x250] sm:$0xff]
        %v621 = vld [vmem:[%s459 + $0x258] sm:$0xff]
        %v622 = vld [vmem:[%s459 + $0x260] sm:$0xff]
        %v623 = vld [vmem:[%s459 + $0x268] sm:$0xff]
        %v624 = vld [vmem:[%s459 + $0x270] sm:$0xff]
        %v625 = vld [vmem:[%s459 + $0x278] sm:$0xff]
        %v626 = vld [vmem:[%s459 + $0x280] sm:$0xff]
        %v627 = vld [vmem:[%s459 + $0x288] sm:$0xff]
        %v628 = vld [vmem:[%s459 + $0x290] sm:$0xff]
        %v629 = vld [vmem:[%s459 + $0x298] sm:$0xff]
        %v630 = vld [vmem:[%s459 + $0x2a0] sm:$0xff]
        %v631 = vld [vmem:[%s459 + $0x2a8] sm:$0xff]
        %v632 = vld [vmem:[%s459 + $0x2b0] sm:$0xff]
        %v633 = vld [vmem:[%s459 + $0x2b8] sm:$0xff]
        %v634 = vld [vmem:[%s459 + $0x2c0] sm:$0xff]
        %v635 = vld [vmem:[%s459 + $0x2c8] sm:$0xff]
        %v636 = vld [vmem:[%s459 + $0x2d0] sm:$0xff]
        %v637 = vld [vmem:[%s459 + $0x2d8] sm:$0xff]
        %v638 = vld [vmem:[%s459 + $0x2e0] sm:$0xff]
        %v639 = vld [vmem:[%s459 + $0x2e8] sm:$0xff]
        %v640 = vld [vmem:[%s459 + $0x2f0] sm:$0xff]
        %v641 = vld [vmem:[%s459 + $0x2f8] sm:$0xff]
        %v642 = vld [vmem:[%s459 + $0x300] sm:$0xff]
        %v643 = vld [vmem:[%s459 + $0x308] sm:$0xff]
        %v644 = vld [vmem:[%s459 + $0x310] sm:$0xff]
        %v645 = vld [vmem:[%s459 + $0x318] sm:$0xff]
        %v646 = vld [vmem:[%s459 + $0x320] sm:$0xff]
        %v647 = vld [vmem:[%s459 + $0x328] sm:$0xff]
        %v648 = vld [vmem:[%s459 + $0x330] sm:$0xff]
        %v649 = vld [vmem:[%s459 + $0x338] sm:$0xff]
        %v650 = vld [vmem:[%s459 + $0x340] sm:$0xff]
        %v651 = vld [vmem:[%s459 + $0x348] sm:$0xff]
        %v652 = vld [vmem:[%s459 + $0x350] sm:$0xff]
        %v653 = vld [vmem:[%s459 + $0x358] sm:$0xff]
        %v654 = vld [vmem:[%s459 + $0x360] sm:$0xff]
        %v655 = vld [vmem:[%s459 + $0x368] sm:$0xff]
        %v656 = vld [vmem:[%s459 + $0x370] sm:$0xff]
        %v657 = vld [vmem:[%s459 + $0x378] sm:$0xff]
        %v658 = vld [vmem:[%s459 + $0x380] sm:$0xff]
        %v659 = vld [vmem:[%s459 + $0x388] sm:$0xff]
        %v660 = vld [vmem:[%s459 + $0x390] sm:$0xff]
        %v661 = vld [vmem:[%s459 + $0x398] sm:$0xff]
        %v662 = vld [vmem:[%s459 + $0x3a0] sm:$0xff]
        %v663 = vld [vmem:[%s459 + $0x3a8] sm:$0xff]
        %v664 = vld [vmem:[%s459 + $0x3b0] sm:$0xff]
        %v665 = vld [vmem:[%s459 + $0x3b8] sm:$0xff]
        %v666 = vld [vmem:[%s459 + $0x3c0] sm:$0xff]
        %v667 = vld [vmem:[%s459 + $0x3c8] sm:$0xff]
        %v668 = vld [vmem:[%s459 + $0x3d0] sm:$0xff]
        %v669 = vld [vmem:[%s459 + $0x3d8] sm:$0xff]
        %v670 = vld [vmem:[%s459 + $0x3e0] sm:$0xff]
        %v671 = vld [vmem:[%s459 + $0x3e8] sm:$0xff]
        %v672 = vld [vmem:[%s459 + $0x3f0] sm:$0xff]
        %v673 = vld [vmem:[%s459 + $0x3f8] sm:$0xff]
        %v674 = vpack.c.bf16 %v554, %v546
        %v675 = vpack.c.bf16 %v555, %v547
        %v676 = vpack.c.bf16 %v556, %v548
        %v677 = vpack.c.bf16 %v557, %v549
        %v678 = vpack.c.bf16 %v558, %v550
        %v679 = vpack.c.bf16 %v559, %v551
        %v680 = vpack.c.bf16 %v560, %v552
        %v681 = vpack.c.bf16 %v561, %v553
        %v682 = vpack.c.bf16 %v570, %v562
        %v683 = vpack.c.bf16 %v571, %v563
        %v684 = vpack.c.bf16 %v572, %v564
        %v685 = vpack.c.bf16 %v573, %v565
        %v686 = vpack.c.bf16 %v574, %v566
        %v687 = vpack.c.bf16 %v575, %v567
        %v688 = vpack.c.bf16 %v576, %v568
        %v689 = vpack.c.bf16 %v577, %v569
        %v690 = vpack.c.bf16 %v586, %v578
        %v691 = vpack.c.bf16 %v587, %v579
        %v692 = vpack.c.bf16 %v588, %v580
        %v693 = vpack.c.bf16 %v589, %v581
        %v694 = vpack.c.bf16 %v590, %v582
        %v695 = vpack.c.bf16 %v591, %v583
        %v696 = vpack.c.bf16 %v592, %v584
        %v697 = vpack.c.bf16 %v593, %v585
        %v698 = vpack.c.bf16 %v602, %v594
        %v699 = vpack.c.bf16 %v603, %v595
        %v700 = vpack.c.bf16 %v604, %v596
        %v701 = vpack.c.bf16 %v605, %v597
        %v702 = vpack.c.bf16 %v606, %v598
        %v703 = vpack.c.bf16 %v607, %v599
        %v704 = vpack.c.bf16 %v608, %v600
        %v705 = vpack.c.bf16 %v609, %v601
        %v706 = vpack.c.bf16 %v618, %v610
        %v707 = vpack.c.bf16 %v619, %v611
        %v708 = vpack.c.bf16 %v620, %v612
        %v709 = vpack.c.bf16 %v621, %v613
        %v710 = vpack.c.bf16 %v622, %v614
        %v711 = vpack.c.bf16 %v623, %v615
        %v712 = vpack.c.bf16 %v624, %v616
        %v713 = vpack.c.bf16 %v625, %v617
        %v714 = vpack.c.bf16 %v634, %v626
        %v715 = vpack.c.bf16 %v635, %v627
        %v716 = vpack.c.bf16 %v636, %v628
        %v717 = vpack.c.bf16 %v637, %v629
        %v718 = vpack.c.bf16 %v638, %v630
        %v719 = vpack.c.bf16 %v639, %v631
        %v720 = vpack.c.bf16 %v640, %v632
        %v721 = vpack.c.bf16 %v641, %v633
        %v722 = vpack.c.bf16 %v650, %v642
        %v723 = vpack.c.bf16 %v651, %v643
        %v724 = vpack.c.bf16 %v652, %v644
        %v725 = vpack.c.bf16 %v653, %v645
        %v726 = vpack.c.bf16 %v654, %v646
        %v727 = vpack.c.bf16 %v655, %v647
        %v728 = vpack.c.bf16 %v656, %v648
        %v729 = vpack.c.bf16 %v657, %v649
        %v730 = vpack.c.bf16 %v666, %v658
        %v731 = vpack.c.bf16 %v667, %v659
        %v732 = vpack.c.bf16 %v668, %v660
        %v733 = vpack.c.bf16 %v669, %v661
        %v734 = vpack.c.bf16 %v670, %v662
        %v735 = vpack.c.bf16 %v671, %v663
        %v736 = vpack.c.bf16 %v672, %v664
        %v737 = vpack.c.bf16 %v673, %v665
        %v738 = vld [vmem:[#allocation4] sm:$0xff]
        %v739 = vld [vmem:[#allocation4 + $0x8] sm:$0xff]
        %v740 = vld [vmem:[#allocation4 + $0x10] sm:$0xff]
        %v741 = vld [vmem:[#allocation4 + $0x18] sm:$0xff]
        %v742 = vld [vmem:[#allocation4 + $0x20] sm:$0xff]
        %v743 = vld [vmem:[#allocation4 + $0x28] sm:$0xff]
        %v744 = vld [vmem:[#allocation4 + $0x30] sm:$0xff]
        %v745 = vld [vmem:[#allocation4 + $0x38] sm:$0xff]
        %v746 = vld [vmem:[#allocation4 + $0x40] sm:$0xff]
        %v747 = vld [vmem:[#allocation4 + $0x48] sm:$0xff]
        %v748 = vld [vmem:[#allocation4 + $0x50] sm:$0xff]
        %v749 = vld [vmem:[#allocation4 + $0x58] sm:$0xff]
        %v750 = vld [vmem:[#allocation4 + $0x60] sm:$0xff]
        %v751 = vld [vmem:[#allocation4 + $0x68] sm:$0xff]
        %v752 = vld [vmem:[#allocation4 + $0x70] sm:$0xff]
        %v753 = vld [vmem:[#allocation4 + $0x78] sm:$0xff]
        %v754 = vld [vmem:[#allocation4 + $0x80] sm:$0xff]
        %v755 = vld [vmem:[#allocation4 + $0x88] sm:$0xff]
        %v756 = vld [vmem:[#allocation4 + $0x90] sm:$0xff]
        %v757 = vld [vmem:[#allocation4 + $0x98] sm:$0xff]
        %v758 = vld [vmem:[#allocation4 + $0xa0] sm:$0xff]
        %v759 = vld [vmem:[#allocation4 + $0xa8] sm:$0xff]
        %v760 = vld [vmem:[#allocation4 + $0xb0] sm:$0xff]
        %v761 = vld [vmem:[#allocation4 + $0xb8] sm:$0xff]
        %v762 = vld [vmem:[#allocation4 + $0xc0] sm:$0xff]
        %v763 = vld [vmem:[#allocation4 + $0xc8] sm:$0xff]
        %v764 = vld [vmem:[#allocation4 + $0xd0] sm:$0xff]
        %v765 = vld [vmem:[#allocation4 + $0xd8] sm:$0xff]
        %v766 = vld [vmem:[#allocation4 + $0xe0] sm:$0xff]
        %v767 = vld [vmem:[#allocation4 + $0xe8] sm:$0xff]
        %v768 = vld [vmem:[#allocation4 + $0xf0] sm:$0xff]
        %v769 = vld [vmem:[#allocation4 + $0xf8] sm:$0xff]
        %v770 = vld [vmem:[#allocation4 + $0x100] sm:$0xff]
        %v771 = vld [vmem:[#allocation4 + $0x108] sm:$0xff]
        %v772 = vld [vmem:[#allocation4 + $0x110] sm:$0xff]
        %v773 = vld [vmem:[#allocation4 + $0x118] sm:$0xff]
        %v774 = vld [vmem:[#allocation4 + $0x120] sm:$0xff]
        %v775 = vld [vmem:[#allocation4 + $0x128] sm:$0xff]
        %v776 = vld [vmem:[#allocation4 + $0x130] sm:$0xff]
        %v777 = vld [vmem:[#allocation4 + $0x138] sm:$0xff]
        %v778 = vld [vmem:[#allocation4 + $0x140] sm:$0xff]
        %v779 = vld [vmem:[#allocation4 + $0x148] sm:$0xff]
        %v780 = vld [vmem:[#allocation4 + $0x150] sm:$0xff]
        %v781 = vld [vmem:[#allocation4 + $0x158] sm:$0xff]
        %v782 = vld [vmem:[#allocation4 + $0x160] sm:$0xff]
        %v783 = vld [vmem:[#allocation4 + $0x168] sm:$0xff]
        %v784 = vld [vmem:[#allocation4 + $0x170] sm:$0xff]
        %v785 = vld [vmem:[#allocation4 + $0x178] sm:$0xff]
        %v786 = vld [vmem:[#allocation4 + $0x180] sm:$0xff]
        %v787 = vld [vmem:[#allocation4 + $0x188] sm:$0xff]
        %v788 = vld [vmem:[#allocation4 + $0x190] sm:$0xff]
        %v789 = vld [vmem:[#allocation4 + $0x198] sm:$0xff]
        %v790 = vld [vmem:[#allocation4 + $0x1a0] sm:$0xff]
        %v791 = vld [vmem:[#allocation4 + $0x1a8] sm:$0xff]
        %v792 = vld [vmem:[#allocation4 + $0x1b0] sm:$0xff]
        %v793 = vld [vmem:[#allocation4 + $0x1b8] sm:$0xff]
        %v794 = vld [vmem:[#allocation4 + $0x1c0] sm:$0xff]
        %v795 = vld [vmem:[#allocation4 + $0x1c8] sm:$0xff]
        %v796 = vld [vmem:[#allocation4 + $0x1d0] sm:$0xff]
        %v797 = vld [vmem:[#allocation4 + $0x1d8] sm:$0xff]
        %v798 = vld [vmem:[#allocation4 + $0x1e0] sm:$0xff]
        %v799 = vld [vmem:[#allocation4 + $0x1e8] sm:$0xff]
        %v800 = vld [vmem:[#allocation4 + $0x1f0] sm:$0xff]
        %v801 = vld [vmem:[#allocation4 + $0x1f8] sm:$0xff]
        %v802 = vld [vmem:[#allocation4 + $0x200] sm:$0xff]
        %v803 = vld [vmem:[#allocation4 + $0x208] sm:$0xff]
        %v804 = vld [vmem:[#allocation4 + $0x210] sm:$0xff]
        %v805 = vld [vmem:[#allocation4 + $0x218] sm:$0xff]
        %v806 = vld [vmem:[#allocation4 + $0x220] sm:$0xff]
        %v807 = vld [vmem:[#allocation4 + $0x228] sm:$0xff]
        %v808 = vld [vmem:[#allocation4 + $0x230] sm:$0xff]
        %v809 = vld [vmem:[#allocation4 + $0x238] sm:$0xff]
        %v810 = vld [vmem:[#allocation4 + $0x240] sm:$0xff]
        %v811 = vld [vmem:[#allocation4 + $0x248] sm:$0xff]
        %v812 = vld [vmem:[#allocation4 + $0x250] sm:$0xff]
        %v813 = vld [vmem:[#allocation4 + $0x258] sm:$0xff]
        %v814 = vld [vmem:[#allocation4 + $0x260] sm:$0xff]
        %v815 = vld [vmem:[#allocation4 + $0x268] sm:$0xff]
        %v816 = vld [vmem:[#allocation4 + $0x270] sm:$0xff]
        %v817 = vld [vmem:[#allocation4 + $0x278] sm:$0xff]
        %v818 = vld [vmem:[#allocation4 + $0x280] sm:$0xff]
        %v819 = vld [vmem:[#allocation4 + $0x288] sm:$0xff]
        %v820 = vld [vmem:[#allocation4 + $0x290] sm:$0xff]
        %v821 = vld [vmem:[#allocation4 + $0x298] sm:$0xff]
        %v822 = vld [vmem:[#allocation4 + $0x2a0] sm:$0xff]
        %v823 = vld [vmem:[#allocation4 + $0x2a8] sm:$0xff]
        %v824 = vld [vmem:[#allocation4 + $0x2b0] sm:$0xff]
        %v825 = vld [vmem:[#allocation4 + $0x2b8] sm:$0xff]
        %v826 = vld [vmem:[#allocation4 + $0x2c0] sm:$0xff]
        %v827 = vld [vmem:[#allocation4 + $0x2c8] sm:$0xff]
        %v828 = vld [vmem:[#allocation4 + $0x2d0] sm:$0xff]
        %v829 = vld [vmem:[#allocation4 + $0x2d8] sm:$0xff]
        %v830 = vld [vmem:[#allocation4 + $0x2e0] sm:$0xff]
        %v831 = vld [vmem:[#allocation4 + $0x2e8] sm:$0xff]
        %v832 = vld [vmem:[#allocation4 + $0x2f0] sm:$0xff]
        %v833 = vld [vmem:[#allocation4 + $0x2f8] sm:$0xff]
        %v834 = vld [vmem:[#allocation4 + $0x300] sm:$0xff]
        %v835 = vld [vmem:[#allocation4 + $0x308] sm:$0xff]
        %v836 = vld [vmem:[#allocation4 + $0x310] sm:$0xff]
        %v837 = vld [vmem:[#allocation4 + $0x318] sm:$0xff]
        %v838 = vld [vmem:[#allocation4 + $0x320] sm:$0xff]
        %v839 = vld [vmem:[#allocation4 + $0x328] sm:$0xff]
        %v840 = vld [vmem:[#allocation4 + $0x330] sm:$0xff]
        %v841 = vld [vmem:[#allocation4 + $0x338] sm:$0xff]
        %v842 = vld [vmem:[#allocation4 + $0x340] sm:$0xff]
        %v843 = vld [vmem:[#allocation4 + $0x348] sm:$0xff]
        %v844 = vld [vmem:[#allocation4 + $0x350] sm:$0xff]
        %v845 = vld [vmem:[#allocation4 + $0x358] sm:$0xff]
        %v846 = vld [vmem:[#allocation4 + $0x360] sm:$0xff]
        %v847 = vld [vmem:[#allocation4 + $0x368] sm:$0xff]
        %v848 = vld [vmem:[#allocation4 + $0x370] sm:$0xff]
        %v849 = vld [vmem:[#allocation4 + $0x378] sm:$0xff]
        %v850 = vld [vmem:[#allocation4 + $0x380] sm:$0xff]
        %v851 = vld [vmem:[#allocation4 + $0x388] sm:$0xff]
        %v852 = vld [vmem:[#allocation4 + $0x390] sm:$0xff]
        %v853 = vld [vmem:[#allocation4 + $0x398] sm:$0xff]
        %v854 = vld [vmem:[#allocation4 + $0x3a0] sm:$0xff]
        %v855 = vld [vmem:[#allocation4 + $0x3a8] sm:$0xff]
        %v856 = vld [vmem:[#allocation4 + $0x3b0] sm:$0xff]
        %v857 = vld [vmem:[#allocation4 + $0x3b8] sm:$0xff]
        %v858 = vld [vmem:[#allocation4 + $0x3c0] sm:$0xff]
        %v859 = vld [vmem:[#allocation4 + $0x3c8] sm:$0xff]
        %v860 = vld [vmem:[#allocation4 + $0x3d0] sm:$0xff]
        %v861 = vld [vmem:[#allocation4 + $0x3d8] sm:$0xff]
        %v862 = vld [vmem:[#allocation4 + $0x3e0] sm:$0xff]
        %v863 = vld [vmem:[#allocation4 + $0x3e8] sm:$0xff]
        %v864 = vld [vmem:[#allocation4 + $0x3f0] sm:$0xff]
        %v865 = vld [vmem:[#allocation4 + $0x3f8] sm:$0xff]
        %v866 = vld [vmem:[#allocation4 + $0x400] sm:$0xff]
        %v867 = vld [vmem:[#allocation4 + $0x408] sm:$0xff]
        %v868 = vld [vmem:[#allocation4 + $0x410] sm:$0xff]
        %v869 = vld [vmem:[#allocation4 + $0x418] sm:$0xff]
        %v870 = vld [vmem:[#allocation4 + $0x420] sm:$0xff]
        %v871 = vld [vmem:[#allocation4 + $0x428] sm:$0xff]
        %v872 = vld [vmem:[#allocation4 + $0x430] sm:$0xff]
        %v873 = vld [vmem:[#allocation4 + $0x438] sm:$0xff]
        %v874 = vld [vmem:[#allocation4 + $0x440] sm:$0xff]
        %v875 = vld [vmem:[#allocation4 + $0x448] sm:$0xff]
        %v876 = vld [vmem:[#allocation4 + $0x450] sm:$0xff]
        %v877 = vld [vmem:[#allocation4 + $0x458] sm:$0xff]
        %v878 = vld [vmem:[#allocation4 + $0x460] sm:$0xff]
        %v879 = vld [vmem:[#allocation4 + $0x468] sm:$0xff]
        %v880 = vld [vmem:[#allocation4 + $0x470] sm:$0xff]
        %v881 = vld [vmem:[#allocation4 + $0x478] sm:$0xff]
        %v882 = vld [vmem:[#allocation4 + $0x480] sm:$0xff]
        %v883 = vld [vmem:[#allocation4 + $0x488] sm:$0xff]
        %v884 = vld [vmem:[#allocation4 + $0x490] sm:$0xff]
        %v885 = vld [vmem:[#allocation4 + $0x498] sm:$0xff]
        %v886 = vld [vmem:[#allocation4 + $0x4a0] sm:$0xff]
        %v887 = vld [vmem:[#allocation4 + $0x4a8] sm:$0xff]
        %v888 = vld [vmem:[#allocation4 + $0x4b0] sm:$0xff]
        %v889 = vld [vmem:[#allocation4 + $0x4b8] sm:$0xff]
        %v890 = vld [vmem:[#allocation4 + $0x4c0] sm:$0xff]
        %v891 = vld [vmem:[#allocation4 + $0x4c8] sm:$0xff]
        %v892 = vld [vmem:[#allocation4 + $0x4d0] sm:$0xff]
        %v893 = vld [vmem:[#allocation4 + $0x4d8] sm:$0xff]
        %v894 = vld [vmem:[#allocation4 + $0x4e0] sm:$0xff]
        %v895 = vld [vmem:[#allocation4 + $0x4e8] sm:$0xff]
        %v896 = vld [vmem:[#allocation4 + $0x4f0] sm:$0xff]
        %v897 = vld [vmem:[#allocation4 + $0x4f8] sm:$0xff]
        %v898 = vld [vmem:[#allocation4 + $0x500] sm:$0xff]
        %v899 = vld [vmem:[#allocation4 + $0x508] sm:$0xff]
        %v900 = vld [vmem:[#allocation4 + $0x510] sm:$0xff]
        %v901 = vld [vmem:[#allocation4 + $0x518] sm:$0xff]
        %v902 = vld [vmem:[#allocation4 + $0x520] sm:$0xff]
        %v903 = vld [vmem:[#allocation4 + $0x528] sm:$0xff]
        %v904 = vld [vmem:[#allocation4 + $0x530] sm:$0xff]
        %v905 = vld [vmem:[#allocation4 + $0x538] sm:$0xff]
        %v906 = vld [vmem:[#allocation4 + $0x540] sm:$0xff]
        %v907 = vld [vmem:[#allocation4 + $0x548] sm:$0xff]
        %v908 = vld [vmem:[#allocation4 + $0x550] sm:$0xff]
        %v909 = vld [vmem:[#allocation4 + $0x558] sm:$0xff]
        %v910 = vld [vmem:[#allocation4 + $0x560] sm:$0xff]
        %v911 = vld [vmem:[#allocation4 + $0x568] sm:$0xff]
        %v912 = vld [vmem:[#allocation4 + $0x570] sm:$0xff]
        %v913 = vld [vmem:[#allocation4 + $0x578] sm:$0xff]
        %v914 = vld [vmem:[#allocation4 + $0x580] sm:$0xff]
        %v915 = vld [vmem:[#allocation4 + $0x588] sm:$0xff]
        %v916 = vld [vmem:[#allocation4 + $0x590] sm:$0xff]
        %v917 = vld [vmem:[#allocation4 + $0x598] sm:$0xff]
        %v918 = vld [vmem:[#allocation4 + $0x5a0] sm:$0xff]
        %v919 = vld [vmem:[#allocation4 + $0x5a8] sm:$0xff]
        %v920 = vld [vmem:[#allocation4 + $0x5b0] sm:$0xff]
        %v921 = vld [vmem:[#allocation4 + $0x5b8] sm:$0xff]
        %v922 = vld [vmem:[#allocation4 + $0x5c0] sm:$0xff]
        %v923 = vld [vmem:[#allocation4 + $0x5c8] sm:$0xff]
        %v924 = vld [vmem:[#allocation4 + $0x5d0] sm:$0xff]
        %v925 = vld [vmem:[#allocation4 + $0x5d8] sm:$0xff]
        %v926 = vld [vmem:[#allocation4 + $0x5e0] sm:$0xff]
        %v927 = vld [vmem:[#allocation4 + $0x5e8] sm:$0xff]
        %v928 = vld [vmem:[#allocation4 + $0x5f0] sm:$0xff]
        %v929 = vld [vmem:[#allocation4 + $0x5f8] sm:$0xff]
        %v930 = vld [vmem:[#allocation4 + $0x600] sm:$0xff]
        %v931 = vld [vmem:[#allocation4 + $0x608] sm:$0xff]
        %v932 = vld [vmem:[#allocation4 + $0x610] sm:$0xff]
        %v933 = vld [vmem:[#allocation4 + $0x618] sm:$0xff]
        %v934 = vld [vmem:[#allocation4 + $0x620] sm:$0xff]
        %v935 = vld [vmem:[#allocation4 + $0x628] sm:$0xff]
        %v936 = vld [vmem:[#allocation4 + $0x630] sm:$0xff]
        %v937 = vld [vmem:[#allocation4 + $0x638] sm:$0xff]
        %v938 = vld [vmem:[#allocation4 + $0x640] sm:$0xff]
        %v939 = vld [vmem:[#allocation4 + $0x648] sm:$0xff]
        %v940 = vld [vmem:[#allocation4 + $0x650] sm:$0xff]
        %v941 = vld [vmem:[#allocation4 + $0x658] sm:$0xff]
        %v942 = vld [vmem:[#allocation4 + $0x660] sm:$0xff]
        %v943 = vld [vmem:[#allocation4 + $0x668] sm:$0xff]
        %v944 = vld [vmem:[#allocation4 + $0x670] sm:$0xff]
        %v945 = vld [vmem:[#allocation4 + $0x678] sm:$0xff]
        %v946 = vld [vmem:[#allocation4 + $0x680] sm:$0xff]
        %v947 = vld [vmem:[#allocation4 + $0x688] sm:$0xff]
        %v948 = vld [vmem:[#allocation4 + $0x690] sm:$0xff]
        %v949 = vld [vmem:[#allocation4 + $0x698] sm:$0xff]
        %v950 = vld [vmem:[#allocation4 + $0x6a0] sm:$0xff]
        %v951 = vld [vmem:[#allocation4 + $0x6a8] sm:$0xff]
        %v952 = vld [vmem:[#allocation4 + $0x6b0] sm:$0xff]
        %v953 = vld [vmem:[#allocation4 + $0x6b8] sm:$0xff]
        %v954 = vld [vmem:[#allocation4 + $0x6c0] sm:$0xff]
        %v955 = vld [vmem:[#allocation4 + $0x6c8] sm:$0xff]
        %v956 = vld [vmem:[#allocation4 + $0x6d0] sm:$0xff]
        %v957 = vld [vmem:[#allocation4 + $0x6d8] sm:$0xff]
        %v958 = vld [vmem:[#allocation4 + $0x6e0] sm:$0xff]
        %v959 = vld [vmem:[#allocation4 + $0x6e8] sm:$0xff]
        %v960 = vld [vmem:[#allocation4 + $0x6f0] sm:$0xff]
        %v961 = vld [vmem:[#allocation4 + $0x6f8] sm:$0xff]
        %v962 = vld [vmem:[#allocation4 + $0x700] sm:$0xff]
        %v963 = vld [vmem:[#allocation4 + $0x708] sm:$0xff]
        %v964 = vld [vmem:[#allocation4 + $0x710] sm:$0xff]
        %v965 = vld [vmem:[#allocation4 + $0x718] sm:$0xff]
        %v966 = vld [vmem:[#allocation4 + $0x720] sm:$0xff]
        %v967 = vld [vmem:[#allocation4 + $0x728] sm:$0xff]
        %v968 = vld [vmem:[#allocation4 + $0x730] sm:$0xff]
        %v969 = vld [vmem:[#allocation4 + $0x738] sm:$0xff]
        %v970 = vld [vmem:[#allocation4 + $0x740] sm:$0xff]
        %v971 = vld [vmem:[#allocation4 + $0x748] sm:$0xff]
        %v972 = vld [vmem:[#allocation4 + $0x750] sm:$0xff]
        %v973 = vld [vmem:[#allocation4 + $0x758] sm:$0xff]
        %v974 = vld [vmem:[#allocation4 + $0x760] sm:$0xff]
        %v975 = vld [vmem:[#allocation4 + $0x768] sm:$0xff]
        %v976 = vld [vmem:[#allocation4 + $0x770] sm:$0xff]
        %v977 = vld [vmem:[#allocation4 + $0x778] sm:$0xff]
        %v978 = vld [vmem:[#allocation4 + $0x780] sm:$0xff]
        %v979 = vld [vmem:[#allocation4 + $0x788] sm:$0xff]
        %v980 = vld [vmem:[#allocation4 + $0x790] sm:$0xff]
        %v981 = vld [vmem:[#allocation4 + $0x798] sm:$0xff]
        %v982 = vld [vmem:[#allocation4 + $0x7a0] sm:$0xff]
        %v983 = vld [vmem:[#allocation4 + $0x7a8] sm:$0xff]
        %v984 = vld [vmem:[#allocation4 + $0x7b0] sm:$0xff]
        %v985 = vld [vmem:[#allocation4 + $0x7b8] sm:$0xff]
        %v986 = vld [vmem:[#allocation4 + $0x7c0] sm:$0xff]
        %v987 = vld [vmem:[#allocation4 + $0x7c8] sm:$0xff]
        %v988 = vld [vmem:[#allocation4 + $0x7d0] sm:$0xff]
        %v989 = vld [vmem:[#allocation4 + $0x7d8] sm:$0xff]
        %v990 = vld [vmem:[#allocation4 + $0x7e0] sm:$0xff]
        %v991 = vld [vmem:[#allocation4 + $0x7e8] sm:$0xff]
        %v992 = vld [vmem:[#allocation4 + $0x7f0] sm:$0xff]
        %v993 = vld [vmem:[#allocation4 + $0x7f8] sm:$0xff]
        %v994 = vld [vmem:[#allocation6] sm:$0xf]
        %v996 = vlaneseq
        %v997 = vshrl.u32 %v996, 7
        %v998 = vsub.s32 0, %v997
        %v999 = vrot.slane %v994, %v998
        %v1000 = vlaneseq
        %v1001 = vshrl.u32 %v1000, 7
        %v1002 = vsub.s32 1, %v1001
        %v1003 = vrot.slane %v994, %v1002
        %v1004 = vlaneseq
        %v1005 = vshrl.u32 %v1004, 7
        %v1006 = vsub.s32 2, %v1005
        %v1007 = vrot.slane %v994, %v1006
        %v1008 = vlaneseq
        %v1009 = vshrl.u32 %v1008, 7
        %v1010 = vsub.s32 3, %v1009
        %v1011 = vrot.slane %v994, %v1010
        %v1272 = vunpack.c.l.b16 %v738
        %v1273 = vunpack.c.h.b16 %v738
        %v1274 = vunpack.c.l.b16 %v739
        %v1275 = vunpack.c.h.b16 %v739
        %v1276 = vunpack.c.l.b16 %v740
        %v1277 = vunpack.c.h.b16 %v740
        %v1278 = vunpack.c.l.b16 %v741
        %v1279 = vunpack.c.h.b16 %v741
        %v1280 = vunpack.c.l.b16 %v742
        %v1281 = vunpack.c.h.b16 %v742
        %v1282 = vunpack.c.l.b16 %v743
        %v1283 = vunpack.c.h.b16 %v743
        %v1284 = vunpack.c.l.b16 %v744
        %v1285 = vunpack.c.h.b16 %v744
        %v1286 = vunpack.c.l.b16 %v745
        %v1287 = vunpack.c.h.b16 %v745
        %v1288 = vunpack.c.l.b16 %v746
        %v1289 = vunpack.c.h.b16 %v746
        %v1290 = vunpack.c.l.b16 %v747
        %v1291 = vunpack.c.h.b16 %v747
        %v1292 = vunpack.c.l.b16 %v748
        %v1293 = vunpack.c.h.b16 %v748
        %v1294 = vunpack.c.l.b16 %v749
        %v1295 = vunpack.c.h.b16 %v749
        %v1296 = vunpack.c.l.b16 %v750
        %v1297 = vunpack.c.h.b16 %v750
        %v1298 = vunpack.c.l.b16 %v751
        %v1299 = vunpack.c.h.b16 %v751
        %v1300 = vunpack.c.l.b16 %v752
        %v1301 = vunpack.c.h.b16 %v752
        %v1302 = vunpack.c.l.b16 %v753
        %v1303 = vunpack.c.h.b16 %v753
        %v1304 = vunpack.c.l.b16 %v754
        %v1305 = vunpack.c.h.b16 %v754
        %v1306 = vunpack.c.l.b16 %v755
        %v1307 = vunpack.c.h.b16 %v755
        %v1308 = vunpack.c.l.b16 %v756
        %v1309 = vunpack.c.h.b16 %v756
        %v1310 = vunpack.c.l.b16 %v757
        %v1311 = vunpack.c.h.b16 %v757
        %v1312 = vunpack.c.l.b16 %v758
        %v1313 = vunpack.c.h.b16 %v758
        %v1314 = vunpack.c.l.b16 %v759
        %v1315 = vunpack.c.h.b16 %v759
        %v1316 = vunpack.c.l.b16 %v760
        %v1317 = vunpack.c.h.b16 %v760
        %v1318 = vunpack.c.l.b16 %v761
        %v1319 = vunpack.c.h.b16 %v761
        %v1320 = vunpack.c.l.b16 %v762
        %v1321 = vunpack.c.h.b16 %v762
        %v1322 = vunpack.c.l.b16 %v763
        %v1323 = vunpack.c.h.b16 %v763
        %v1324 = vunpack.c.l.b16 %v764
        %v1325 = vunpack.c.h.b16 %v764
        %v1326 = vunpack.c.l.b16 %v765
        %v1327 = vunpack.c.h.b16 %v765
        %v1328 = vunpack.c.l.b16 %v766
        %v1329 = vunpack.c.h.b16 %v766
        %v1330 = vunpack.c.l.b16 %v767
        %v1331 = vunpack.c.h.b16 %v767
        %v1332 = vunpack.c.l.b16 %v768
        %v1333 = vunpack.c.h.b16 %v768
        %v1334 = vunpack.c.l.b16 %v769
        %v1335 = vunpack.c.h.b16 %v769
        %v1336 = vunpack.c.l.b16 %v770
        %v1337 = vunpack.c.h.b16 %v770
        %v1338 = vunpack.c.l.b16 %v771
        %v1339 = vunpack.c.h.b16 %v771
        %v1340 = vunpack.c.l.b16 %v772
        %v1341 = vunpack.c.h.b16 %v772
        %v1342 = vunpack.c.l.b16 %v773
        %v1343 = vunpack.c.h.b16 %v773
        %v1344 = vunpack.c.l.b16 %v774
        %v1345 = vunpack.c.h.b16 %v774
        %v1346 = vunpack.c.l.b16 %v775
        %v1347 = vunpack.c.h.b16 %v775
        %v1348 = vunpack.c.l.b16 %v776
        %v1349 = vunpack.c.h.b16 %v776
        %v1350 = vunpack.c.l.b16 %v777
        %v1351 = vunpack.c.h.b16 %v777
        %v1352 = vunpack.c.l.b16 %v778
        %v1353 = vunpack.c.h.b16 %v778
        %v1354 = vunpack.c.l.b16 %v779
        %v1355 = vunpack.c.h.b16 %v779
        %v1356 = vunpack.c.l.b16 %v780
        %v1357 = vunpack.c.h.b16 %v780
        %v1358 = vunpack.c.l.b16 %v781
        %v1359 = vunpack.c.h.b16 %v781
        %v1360 = vunpack.c.l.b16 %v782
        %v1361 = vunpack.c.h.b16 %v782
        %v1362 = vunpack.c.l.b16 %v783
        %v1363 = vunpack.c.h.b16 %v783
        %v1364 = vunpack.c.l.b16 %v784
        %v1365 = vunpack.c.h.b16 %v784
        %v1366 = vunpack.c.l.b16 %v785
        %v1367 = vunpack.c.h.b16 %v785
        %v1368 = vunpack.c.l.b16 %v786
        %v1369 = vunpack.c.h.b16 %v786
        %v1370 = vunpack.c.l.b16 %v787
        %v1371 = vunpack.c.h.b16 %v787
        %v1372 = vunpack.c.l.b16 %v788
        %v1373 = vunpack.c.h.b16 %v788
        %v1374 = vunpack.c.l.b16 %v789
        %v1375 = vunpack.c.h.b16 %v789
        %v1376 = vunpack.c.l.b16 %v790
        %v1377 = vunpack.c.h.b16 %v790
        %v1378 = vunpack.c.l.b16 %v791
        %v1379 = vunpack.c.h.b16 %v791
        %v1380 = vunpack.c.l.b16 %v792
        %v1381 = vunpack.c.h.b16 %v792
        %v1382 = vunpack.c.l.b16 %v793
        %v1383 = vunpack.c.h.b16 %v793
        %v1384 = vunpack.c.l.b16 %v794
        %v1385 = vunpack.c.h.b16 %v794
        %v1386 = vunpack.c.l.b16 %v795
        %v1387 = vunpack.c.h.b16 %v795
        %v1388 = vunpack.c.l.b16 %v796
        %v1389 = vunpack.c.h.b16 %v796
        %v1390 = vunpack.c.l.b16 %v797
        %v1391 = vunpack.c.h.b16 %v797
        %v1392 = vunpack.c.l.b16 %v798
        %v1393 = vunpack.c.h.b16 %v798
        %v1394 = vunpack.c.l.b16 %v799
        %v1395 = vunpack.c.h.b16 %v799
        %v1396 = vunpack.c.l.b16 %v800
        %v1397 = vunpack.c.h.b16 %v800
        %v1398 = vunpack.c.l.b16 %v801
        %v1399 = vunpack.c.h.b16 %v801
        %v1400 = vunpack.c.l.b16 %v802
        %v1401 = vunpack.c.h.b16 %v802
        %v1402 = vunpack.c.l.b16 %v803
        %v1403 = vunpack.c.h.b16 %v803
        %v1404 = vunpack.c.l.b16 %v804
        %v1405 = vunpack.c.h.b16 %v804
        %v1406 = vunpack.c.l.b16 %v805
        %v1407 = vunpack.c.h.b16 %v805
        %v1408 = vunpack.c.l.b16 %v806
        %v1409 = vunpack.c.h.b16 %v806
        %v1410 = vunpack.c.l.b16 %v807
        %v1411 = vunpack.c.h.b16 %v807
        %v1412 = vunpack.c.l.b16 %v808
        %v1413 = vunpack.c.h.b16 %v808
        %v1414 = vunpack.c.l.b16 %v809
        %v1415 = vunpack.c.h.b16 %v809
        %v1416 = vunpack.c.l.b16 %v810
        %v1417 = vunpack.c.h.b16 %v810
        %v1418 = vunpack.c.l.b16 %v811
        %v1419 = vunpack.c.h.b16 %v811
        %v1420 = vunpack.c.l.b16 %v812
        %v1421 = vunpack.c.h.b16 %v812
        %v1422 = vunpack.c.l.b16 %v813
        %v1423 = vunpack.c.h.b16 %v813
        %v1424 = vunpack.c.l.b16 %v814
        %v1425 = vunpack.c.h.b16 %v814
        %v1426 = vunpack.c.l.b16 %v815
        %v1427 = vunpack.c.h.b16 %v815
        %v1428 = vunpack.c.l.b16 %v816
        %v1429 = vunpack.c.h.b16 %v816
        %v1430 = vunpack.c.l.b16 %v817
        %v1431 = vunpack.c.h.b16 %v817
        %v1432 = vunpack.c.l.b16 %v818
        %v1433 = vunpack.c.h.b16 %v818
        %v1434 = vunpack.c.l.b16 %v819
        %v1435 = vunpack.c.h.b16 %v819
        %v1436 = vunpack.c.l.b16 %v820
        %v1437 = vunpack.c.h.b16 %v820
        %v1438 = vunpack.c.l.b16 %v821
        %v1439 = vunpack.c.h.b16 %v821
        %v1440 = vunpack.c.l.b16 %v822
        %v1441 = vunpack.c.h.b16 %v822
        %v1442 = vunpack.c.l.b16 %v823
        %v1443 = vunpack.c.h.b16 %v823
        %v1444 = vunpack.c.l.b16 %v824
        %v1445 = vunpack.c.h.b16 %v824
        %v1446 = vunpack.c.l.b16 %v825
        %v1447 = vunpack.c.h.b16 %v825
        %v1448 = vunpack.c.l.b16 %v826
        %v1449 = vunpack.c.h.b16 %v826
        %v1450 = vunpack.c.l.b16 %v827
        %v1451 = vunpack.c.h.b16 %v827
        %v1452 = vunpack.c.l.b16 %v828
        %v1453 = vunpack.c.h.b16 %v828
        %v1454 = vunpack.c.l.b16 %v829
        %v1455 = vunpack.c.h.b16 %v829
        %v1456 = vunpack.c.l.b16 %v830
        %v1457 = vunpack.c.h.b16 %v830
        %v1458 = vunpack.c.l.b16 %v831
        %v1459 = vunpack.c.h.b16 %v831
        %v1460 = vunpack.c.l.b16 %v832
        %v1461 = vunpack.c.h.b16 %v832
        %v1462 = vunpack.c.l.b16 %v833
        %v1463 = vunpack.c.h.b16 %v833
        %v1464 = vunpack.c.l.b16 %v834
        %v1465 = vunpack.c.h.b16 %v834
        %v1466 = vunpack.c.l.b16 %v835
        %v1467 = vunpack.c.h.b16 %v835
        %v1468 = vunpack.c.l.b16 %v836
        %v1469 = vunpack.c.h.b16 %v836
        %v1470 = vunpack.c.l.b16 %v837
        %v1471 = vunpack.c.h.b16 %v837
        %v1472 = vunpack.c.l.b16 %v838
        %v1473 = vunpack.c.h.b16 %v838
        %v1474 = vunpack.c.l.b16 %v839
        %v1475 = vunpack.c.h.b16 %v839
        %v1476 = vunpack.c.l.b16 %v840
        %v1477 = vunpack.c.h.b16 %v840
        %v1478 = vunpack.c.l.b16 %v841
        %v1479 = vunpack.c.h.b16 %v841
        %v1480 = vunpack.c.l.b16 %v842
        %v1481 = vunpack.c.h.b16 %v842
        %v1482 = vunpack.c.l.b16 %v843
        %v1483 = vunpack.c.h.b16 %v843
        %v1484 = vunpack.c.l.b16 %v844
        %v1485 = vunpack.c.h.b16 %v844
        %v1486 = vunpack.c.l.b16 %v845
        %v1487 = vunpack.c.h.b16 %v845
        %v1488 = vunpack.c.l.b16 %v846
        %v1489 = vunpack.c.h.b16 %v846
        %v1490 = vunpack.c.l.b16 %v847
        %v1491 = vunpack.c.h.b16 %v847
        %v1492 = vunpack.c.l.b16 %v848
        %v1493 = vunpack.c.h.b16 %v848
        %v1494 = vunpack.c.l.b16 %v849
        %v1495 = vunpack.c.h.b16 %v849
        %v1496 = vunpack.c.l.b16 %v850
        %v1497 = vunpack.c.h.b16 %v850
        %v1498 = vunpack.c.l.b16 %v851
        %v1499 = vunpack.c.h.b16 %v851
        %v1500 = vunpack.c.l.b16 %v852
        %v1501 = vunpack.c.h.b16 %v852
        %v1502 = vunpack.c.l.b16 %v853
        %v1503 = vunpack.c.h.b16 %v853
        %v1504 = vunpack.c.l.b16 %v854
        %v1505 = vunpack.c.h.b16 %v854
        %v1506 = vunpack.c.l.b16 %v855
        %v1507 = vunpack.c.h.b16 %v855
        %v1508 = vunpack.c.l.b16 %v856
        %v1509 = vunpack.c.h.b16 %v856
        %v1510 = vunpack.c.l.b16 %v857
        %v1511 = vunpack.c.h.b16 %v857
        %v1512 = vunpack.c.l.b16 %v858
        %v1513 = vunpack.c.h.b16 %v858
        %v1514 = vunpack.c.l.b16 %v859
        %v1515 = vunpack.c.h.b16 %v859
        %v1516 = vunpack.c.l.b16 %v860
        %v1517 = vunpack.c.h.b16 %v860
        %v1518 = vunpack.c.l.b16 %v861
        %v1519 = vunpack.c.h.b16 %v861
        %v1520 = vunpack.c.l.b16 %v862
        %v1521 = vunpack.c.h.b16 %v862
        %v1522 = vunpack.c.l.b16 %v863
        %v1523 = vunpack.c.h.b16 %v863
        %v1524 = vunpack.c.l.b16 %v864
        %v1525 = vunpack.c.h.b16 %v864
        %v1526 = vunpack.c.l.b16 %v865
        %v1527 = vunpack.c.h.b16 %v865
        %v1528 = vunpack.c.l.b16 %v866
        %v1529 = vunpack.c.h.b16 %v866
        %v1530 = vunpack.c.l.b16 %v867
        %v1531 = vunpack.c.h.b16 %v867
        %v1532 = vunpack.c.l.b16 %v868
        %v1533 = vunpack.c.h.b16 %v868
        %v1534 = vunpack.c.l.b16 %v869
        %v1535 = vunpack.c.h.b16 %v869
        %v1536 = vunpack.c.l.b16 %v870
        %v1537 = vunpack.c.h.b16 %v870
        %v1538 = vunpack.c.l.b16 %v871
        %v1539 = vunpack.c.h.b16 %v871
        %v1540 = vunpack.c.l.b16 %v872
        %v1541 = vunpack.c.h.b16 %v872
        %v1542 = vunpack.c.l.b16 %v873
        %v1543 = vunpack.c.h.b16 %v873
        %v1544 = vunpack.c.l.b16 %v874
        %v1545 = vunpack.c.h.b16 %v874
        %v1546 = vunpack.c.l.b16 %v875
        %v1547 = vunpack.c.h.b16 %v875
        %v1548 = vunpack.c.l.b16 %v876
        %v1549 = vunpack.c.h.b16 %v876
        %v1550 = vunpack.c.l.b16 %v877
        %v1551 = vunpack.c.h.b16 %v877
        %v1552 = vunpack.c.l.b16 %v878
        %v1553 = vunpack.c.h.b16 %v878
        %v1554 = vunpack.c.l.b16 %v879
        %v1555 = vunpack.c.h.b16 %v879
        %v1556 = vunpack.c.l.b16 %v880
        %v1557 = vunpack.c.h.b16 %v880
        %v1558 = vunpack.c.l.b16 %v881
        %v1559 = vunpack.c.h.b16 %v881
        %v1560 = vunpack.c.l.b16 %v882
        %v1561 = vunpack.c.h.b16 %v882
        %v1562 = vunpack.c.l.b16 %v883
        %v1563 = vunpack.c.h.b16 %v883
        %v1564 = vunpack.c.l.b16 %v884
        %v1565 = vunpack.c.h.b16 %v884
        %v1566 = vunpack.c.l.b16 %v885
        %v1567 = vunpack.c.h.b16 %v885
        %v1568 = vunpack.c.l.b16 %v886
        %v1569 = vunpack.c.h.b16 %v886
        %v1570 = vunpack.c.l.b16 %v887
        %v1571 = vunpack.c.h.b16 %v887
        %v1572 = vunpack.c.l.b16 %v888
        %v1573 = vunpack.c.h.b16 %v888
        %v1574 = vunpack.c.l.b16 %v889
        %v1575 = vunpack.c.h.b16 %v889
        %v1576 = vunpack.c.l.b16 %v890
        %v1577 = vunpack.c.h.b16 %v890
        %v1578 = vunpack.c.l.b16 %v891
        %v1579 = vunpack.c.h.b16 %v891
        %v1580 = vunpack.c.l.b16 %v892
        %v1581 = vunpack.c.h.b16 %v892
        %v1582 = vunpack.c.l.b16 %v893
        %v1583 = vunpack.c.h.b16 %v893
        %v1584 = vunpack.c.l.b16 %v894
        %v1585 = vunpack.c.h.b16 %v894
        %v1586 = vunpack.c.l.b16 %v895
        %v1587 = vunpack.c.h.b16 %v895
        %v1588 = vunpack.c.l.b16 %v896
        %v1589 = vunpack.c.h.b16 %v896
        %v1590 = vunpack.c.l.b16 %v897
        %v1591 = vunpack.c.h.b16 %v897
        %v1592 = vunpack.c.l.b16 %v898
        %v1593 = vunpack.c.h.b16 %v898
        %v1594 = vunpack.c.l.b16 %v899
        %v1595 = vunpack.c.h.b16 %v899
        %v1596 = vunpack.c.l.b16 %v900
        %v1597 = vunpack.c.h.b16 %v900
        %v1598 = vunpack.c.l.b16 %v901
        %v1599 = vunpack.c.h.b16 %v901
        %v1600 = vunpack.c.l.b16 %v902
        %v1601 = vunpack.c.h.b16 %v902
        %v1602 = vunpack.c.l.b16 %v903
        %v1603 = vunpack.c.h.b16 %v903
        %v1604 = vunpack.c.l.b16 %v904
        %v1605 = vunpack.c.h.b16 %v904
        %v1606 = vunpack.c.l.b16 %v905
        %v1607 = vunpack.c.h.b16 %v905
        %v1608 = vunpack.c.l.b16 %v906
        %v1609 = vunpack.c.h.b16 %v906
        %v1610 = vunpack.c.l.b16 %v907
        %v1611 = vunpack.c.h.b16 %v907
        %v1612 = vunpack.c.l.b16 %v908
        %v1613 = vunpack.c.h.b16 %v908
        %v1614 = vunpack.c.l.b16 %v909
        %v1615 = vunpack.c.h.b16 %v909
        %v1616 = vunpack.c.l.b16 %v910
        %v1617 = vunpack.c.h.b16 %v910
        %v1618 = vunpack.c.l.b16 %v911
        %v1619 = vunpack.c.h.b16 %v911
        %v1620 = vunpack.c.l.b16 %v912
        %v1621 = vunpack.c.h.b16 %v912
        %v1622 = vunpack.c.l.b16 %v913
        %v1623 = vunpack.c.h.b16 %v913
        %v1624 = vunpack.c.l.b16 %v914
        %v1625 = vunpack.c.h.b16 %v914
        %v1626 = vunpack.c.l.b16 %v915
        %v1627 = vunpack.c.h.b16 %v915
        %v1628 = vunpack.c.l.b16 %v916
        %v1629 = vunpack.c.h.b16 %v916
        %v1630 = vunpack.c.l.b16 %v917
        %v1631 = vunpack.c.h.b16 %v917
        %v1632 = vunpack.c.l.b16 %v918
        %v1633 = vunpack.c.h.b16 %v918
        %v1634 = vunpack.c.l.b16 %v919
        %v1635 = vunpack.c.h.b16 %v919
        %v1636 = vunpack.c.l.b16 %v920
        %v1637 = vunpack.c.h.b16 %v920
        %v1638 = vunpack.c.l.b16 %v921
        %v1639 = vunpack.c.h.b16 %v921
        %v1640 = vunpack.c.l.b16 %v922
        %v1641 = vunpack.c.h.b16 %v922
        %v1642 = vunpack.c.l.b16 %v923
        %v1643 = vunpack.c.h.b16 %v923
        %v1644 = vunpack.c.l.b16 %v924
        %v1645 = vunpack.c.h.b16 %v924
        %v1646 = vunpack.c.l.b16 %v925
        %v1647 = vunpack.c.h.b16 %v925
        %v1648 = vunpack.c.l.b16 %v926
        %v1649 = vunpack.c.h.b16 %v926
        %v1650 = vunpack.c.l.b16 %v927
        %v1651 = vunpack.c.h.b16 %v927
        %v1652 = vunpack.c.l.b16 %v928
        %v1653 = vunpack.c.h.b16 %v928
        %v1654 = vunpack.c.l.b16 %v929
        %v1655 = vunpack.c.h.b16 %v929
        %v1656 = vunpack.c.l.b16 %v930
        %v1657 = vunpack.c.h.b16 %v930
        %v1658 = vunpack.c.l.b16 %v931
        %v1659 = vunpack.c.h.b16 %v931
        %v1660 = vunpack.c.l.b16 %v932
        %v1661 = vunpack.c.h.b16 %v932
        %v1662 = vunpack.c.l.b16 %v933
        %v1663 = vunpack.c.h.b16 %v933
        %v1664 = vunpack.c.l.b16 %v934
        %v1665 = vunpack.c.h.b16 %v934
        %v1666 = vunpack.c.l.b16 %v935
        %v1667 = vunpack.c.h.b16 %v935
        %v1668 = vunpack.c.l.b16 %v936
        %v1669 = vunpack.c.h.b16 %v936
        %v1670 = vunpack.c.l.b16 %v937
        %v1671 = vunpack.c.h.b16 %v937
        %v1672 = vunpack.c.l.b16 %v938
        %v1673 = vunpack.c.h.b16 %v938
        %v1674 = vunpack.c.l.b16 %v939
        %v1675 = vunpack.c.h.b16 %v939
        %v1676 = vunpack.c.l.b16 %v940
        %v1677 = vunpack.c.h.b16 %v940
        %v1678 = vunpack.c.l.b16 %v941
        %v1679 = vunpack.c.h.b16 %v941
        %v1680 = vunpack.c.l.b16 %v942
        %v1681 = vunpack.c.h.b16 %v942
        %v1682 = vunpack.c.l.b16 %v943
        %v1683 = vunpack.c.h.b16 %v943
        %v1684 = vunpack.c.l.b16 %v944
        %v1685 = vunpack.c.h.b16 %v944
        %v1686 = vunpack.c.l.b16 %v945
        %v1687 = vunpack.c.h.b16 %v945
        %v1688 = vunpack.c.l.b16 %v946
        %v1689 = vunpack.c.h.b16 %v946
        %v1690 = vunpack.c.l.b16 %v947
        %v1691 = vunpack.c.h.b16 %v947
        %v1692 = vunpack.c.l.b16 %v948
        %v1693 = vunpack.c.h.b16 %v948
        %v1694 = vunpack.c.l.b16 %v949
        %v1695 = vunpack.c.h.b16 %v949
        %v1696 = vunpack.c.l.b16 %v950
        %v1697 = vunpack.c.h.b16 %v950
        %v1698 = vunpack.c.l.b16 %v951
        %v1699 = vunpack.c.h.b16 %v951
        %v1700 = vunpack.c.l.b16 %v952
        %v1701 = vunpack.c.h.b16 %v952
        %v1702 = vunpack.c.l.b16 %v953
        %v1703 = vunpack.c.h.b16 %v953
        %v1704 = vunpack.c.l.b16 %v954
        %v1705 = vunpack.c.h.b16 %v954
        %v1706 = vunpack.c.l.b16 %v955
        %v1707 = vunpack.c.h.b16 %v955
        %v1708 = vunpack.c.l.b16 %v956
        %v1709 = vunpack.c.h.b16 %v956
        %v1710 = vunpack.c.l.b16 %v957
        %v1711 = vunpack.c.h.b16 %v957
        %v1712 = vunpack.c.l.b16 %v958
        %v1713 = vunpack.c.h.b16 %v958
        %v1714 = vunpack.c.l.b16 %v959
        %v1715 = vunpack.c.h.b16 %v959
        %v1716 = vunpack.c.l.b16 %v960
        %v1717 = vunpack.c.h.b16 %v960
        %v1718 = vunpack.c.l.b16 %v961
        %v1719 = vunpack.c.h.b16 %v961
        %v1720 = vunpack.c.l.b16 %v962
        %v1721 = vunpack.c.h.b16 %v962
        %v1722 = vunpack.c.l.b16 %v963
        %v1723 = vunpack.c.h.b16 %v963
        %v1724 = vunpack.c.l.b16 %v964
        %v1725 = vunpack.c.h.b16 %v964
        %v1726 = vunpack.c.l.b16 %v965
        %v1727 = vunpack.c.h.b16 %v965
        %v1728 = vunpack.c.l.b16 %v966
        %v1729 = vunpack.c.h.b16 %v966
        %v1730 = vunpack.c.l.b16 %v967
        %v1731 = vunpack.c.h.b16 %v967
        %v1732 = vunpack.c.l.b16 %v968
        %v1733 = vunpack.c.h.b16 %v968
        %v1734 = vunpack.c.l.b16 %v969
        %v1735 = vunpack.c.h.b16 %v969
        %v1736 = vunpack.c.l.b16 %v970
        %v1737 = vunpack.c.h.b16 %v970
        %v1738 = vunpack.c.l.b16 %v971
        %v1739 = vunpack.c.h.b16 %v971
        %v1740 = vunpack.c.l.b16 %v972
        %v1741 = vunpack.c.h.b16 %v972
        %v1742 = vunpack.c.l.b16 %v973
        %v1743 = vunpack.c.h.b16 %v973
        %v1744 = vunpack.c.l.b16 %v974
        %v1745 = vunpack.c.h.b16 %v974
        %v1746 = vunpack.c.l.b16 %v975
        %v1747 = vunpack.c.h.b16 %v975
        %v1748 = vunpack.c.l.b16 %v976
        %v1749 = vunpack.c.h.b16 %v976
        %v1750 = vunpack.c.l.b16 %v977
        %v1751 = vunpack.c.h.b16 %v977
        %v1752 = vunpack.c.l.b16 %v978
        %v1753 = vunpack.c.h.b16 %v978
        %v1754 = vunpack.c.l.b16 %v979
        %v1755 = vunpack.c.h.b16 %v979
        %v1756 = vunpack.c.l.b16 %v980
        %v1757 = vunpack.c.h.b16 %v980
        %v1758 = vunpack.c.l.b16 %v981
        %v1759 = vunpack.c.h.b16 %v981
        %v1760 = vunpack.c.l.b16 %v982
        %v1761 = vunpack.c.h.b16 %v982
        %v1762 = vunpack.c.l.b16 %v983
        %v1763 = vunpack.c.h.b16 %v983
        %v1764 = vunpack.c.l.b16 %v984
        %v1765 = vunpack.c.h.b16 %v984
        %v1766 = vunpack.c.l.b16 %v985
        %v1767 = vunpack.c.h.b16 %v985
        %v1768 = vunpack.c.l.b16 %v986
        %v1769 = vunpack.c.h.b16 %v986
        %v1770 = vunpack.c.l.b16 %v987
        %v1771 = vunpack.c.h.b16 %v987
        %v1772 = vunpack.c.l.b16 %v988
        %v1773 = vunpack.c.h.b16 %v988
        %v1774 = vunpack.c.l.b16 %v989
        %v1775 = vunpack.c.h.b16 %v989
        %v1776 = vunpack.c.l.b16 %v990
        %v1777 = vunpack.c.h.b16 %v990
        %v1778 = vunpack.c.l.b16 %v991
        %v1779 = vunpack.c.h.b16 %v991
        %v1780 = vunpack.c.l.b16 %v992
        %v1781 = vunpack.c.h.b16 %v992
        %v1782 = vunpack.c.l.b16 %v993
        %v1783 = vunpack.c.h.b16 %v993
        %v1784 = vpack.c.b16 %v1276, %v1272
        %v1785 = vpack.c.b16 %v1277, %v1273
        %v1786 = vpack.c.b16 %v1278, %v1274
        %v1787 = vpack.c.b16 %v1279, %v1275
        %v1788 = vpack.c.b16 %v1284, %v1280
        %v1789 = vpack.c.b16 %v1285, %v1281
        %v1790 = vpack.c.b16 %v1286, %v1282
        %v1791 = vpack.c.b16 %v1287, %v1283
        %v1792 = vpack.c.b16 %v1292, %v1288
        %v1793 = vpack.c.b16 %v1293, %v1289
        %v1794 = vpack.c.b16 %v1294, %v1290
        %v1795 = vpack.c.b16 %v1295, %v1291
        %v1796 = vpack.c.b16 %v1300, %v1296
        %v1797 = vpack.c.b16 %v1301, %v1297
        %v1798 = vpack.c.b16 %v1302, %v1298
        %v1799 = vpack.c.b16 %v1303, %v1299
        %v1800 = vpack.c.b16 %v1308, %v1304
        %v1801 = vpack.c.b16 %v1309, %v1305
        %v1802 = vpack.c.b16 %v1310, %v1306
        %v1803 = vpack.c.b16 %v1311, %v1307
        %v1804 = vpack.c.b16 %v1316, %v1312
        %v1805 = vpack.c.b16 %v1317, %v1313
        %v1806 = vpack.c.b16 %v1318, %v1314
        %v1807 = vpack.c.b16 %v1319, %v1315
        %v1808 = vpack.c.b16 %v1324, %v1320
        %v1809 = vpack.c.b16 %v1325, %v1321
        %v1810 = vpack.c.b16 %v1326, %v1322
        %v1811 = vpack.c.b16 %v1327, %v1323
        %v1812 = vpack.c.b16 %v1332, %v1328
        %v1813 = vpack.c.b16 %v1333, %v1329
        %v1814 = vpack.c.b16 %v1334, %v1330
        %v1815 = vpack.c.b16 %v1335, %v1331
        %v1816 = vpack.c.b16 %v1340, %v1336
        %v1817 = vpack.c.b16 %v1341, %v1337
        %v1818 = vpack.c.b16 %v1342, %v1338
        %v1819 = vpack.c.b16 %v1343, %v1339
        %v1820 = vpack.c.b16 %v1348, %v1344
        %v1821 = vpack.c.b16 %v1349, %v1345
        %v1822 = vpack.c.b16 %v1350, %v1346
        %v1823 = vpack.c.b16 %v1351, %v1347
        %v1824 = vpack.c.b16 %v1356, %v1352
        %v1825 = vpack.c.b16 %v1357, %v1353
        %v1826 = vpack.c.b16 %v1358, %v1354
        %v1827 = vpack.c.b16 %v1359, %v1355
        %v1828 = vpack.c.b16 %v1364, %v1360
        %v1829 = vpack.c.b16 %v1365, %v1361
        %v1830 = vpack.c.b16 %v1366, %v1362
        %v1831 = vpack.c.b16 %v1367, %v1363
        %v1832 = vpack.c.b16 %v1372, %v1368
        %v1833 = vpack.c.b16 %v1373, %v1369
        %v1834 = vpack.c.b16 %v1374, %v1370
        %v1835 = vpack.c.b16 %v1375, %v1371
        %v1836 = vpack.c.b16 %v1380, %v1376
        %v1837 = vpack.c.b16 %v1381, %v1377
        %v1838 = vpack.c.b16 %v1382, %v1378
        %v1839 = vpack.c.b16 %v1383, %v1379
        %v1840 = vpack.c.b16 %v1388, %v1384
        %v1841 = vpack.c.b16 %v1389, %v1385
        %v1842 = vpack.c.b16 %v1390, %v1386
        %v1843 = vpack.c.b16 %v1391, %v1387
        %v1844 = vpack.c.b16 %v1396, %v1392
        %v1845 = vpack.c.b16 %v1397, %v1393
        %v1846 = vpack.c.b16 %v1398, %v1394
        %v1847 = vpack.c.b16 %v1399, %v1395
        %v1848 = vpack.c.b16 %v1404, %v1400
        %v1849 = vpack.c.b16 %v1405, %v1401
        %v1850 = vpack.c.b16 %v1406, %v1402
        %v1851 = vpack.c.b16 %v1407, %v1403
        %v1852 = vpack.c.b16 %v1412, %v1408
        %v1853 = vpack.c.b16 %v1413, %v1409
        %v1854 = vpack.c.b16 %v1414, %v1410
        %v1855 = vpack.c.b16 %v1415, %v1411
        %v1856 = vpack.c.b16 %v1420, %v1416
        %v1857 = vpack.c.b16 %v1421, %v1417
        %v1858 = vpack.c.b16 %v1422, %v1418
        %v1859 = vpack.c.b16 %v1423, %v1419
        %v1860 = vpack.c.b16 %v1428, %v1424
        %v1861 = vpack.c.b16 %v1429, %v1425
        %v1862 = vpack.c.b16 %v1430, %v1426
        %v1863 = vpack.c.b16 %v1431, %v1427
        %v1864 = vpack.c.b16 %v1436, %v1432
        %v1865 = vpack.c.b16 %v1437, %v1433
        %v1866 = vpack.c.b16 %v1438, %v1434
        %v1867 = vpack.c.b16 %v1439, %v1435
        %v1868 = vpack.c.b16 %v1444, %v1440
        %v1869 = vpack.c.b16 %v1445, %v1441
        %v1870 = vpack.c.b16 %v1446, %v1442
        %v1871 = vpack.c.b16 %v1447, %v1443
        %v1872 = vpack.c.b16 %v1452, %v1448
        %v1873 = vpack.c.b16 %v1453, %v1449
        %v1874 = vpack.c.b16 %v1454, %v1450
        %v1875 = vpack.c.b16 %v1455, %v1451
        %v1876 = vpack.c.b16 %v1460, %v1456
        %v1877 = vpack.c.b16 %v1461, %v1457
        %v1878 = vpack.c.b16 %v1462, %v1458
        %v1879 = vpack.c.b16 %v1463, %v1459
        %v1880 = vpack.c.b16 %v1468, %v1464
        %v1881 = vpack.c.b16 %v1469, %v1465
        %v1882 = vpack.c.b16 %v1470, %v1466
        %v1883 = vpack.c.b16 %v1471, %v1467
        %v1884 = vpack.c.b16 %v1476, %v1472
        %v1885 = vpack.c.b16 %v1477, %v1473
        %v1886 = vpack.c.b16 %v1478, %v1474
        %v1887 = vpack.c.b16 %v1479, %v1475
        %v1888 = vpack.c.b16 %v1484, %v1480
        %v1889 = vpack.c.b16 %v1485, %v1481
        %v1890 = vpack.c.b16 %v1486, %v1482
        %v1891 = vpack.c.b16 %v1487, %v1483
        %v1892 = vpack.c.b16 %v1492, %v1488
        %v1893 = vpack.c.b16 %v1493, %v1489
        %v1894 = vpack.c.b16 %v1494, %v1490
        %v1895 = vpack.c.b16 %v1495, %v1491
        %v1896 = vpack.c.b16 %v1500, %v1496
        %v1897 = vpack.c.b16 %v1501, %v1497
        %v1898 = vpack.c.b16 %v1502, %v1498
        %v1899 = vpack.c.b16 %v1503, %v1499
        %v1900 = vpack.c.b16 %v1508, %v1504
        %v1901 = vpack.c.b16 %v1509, %v1505
        %v1902 = vpack.c.b16 %v1510, %v1506
        %v1903 = vpack.c.b16 %v1511, %v1507
        %v1904 = vpack.c.b16 %v1516, %v1512
        %v1905 = vpack.c.b16 %v1517, %v1513
        %v1906 = vpack.c.b16 %v1518, %v1514
        %v1907 = vpack.c.b16 %v1519, %v1515
        %v1908 = vpack.c.b16 %v1524, %v1520
        %v1909 = vpack.c.b16 %v1525, %v1521
        %v1910 = vpack.c.b16 %v1526, %v1522
        %v1911 = vpack.c.b16 %v1527, %v1523
        %v1912 = vpack.c.b16 %v1532, %v1528
        %v1913 = vpack.c.b16 %v1533, %v1529
        %v1914 = vpack.c.b16 %v1534, %v1530
        %v1915 = vpack.c.b16 %v1535, %v1531
        %v1916 = vpack.c.b16 %v1540, %v1536
        %v1917 = vpack.c.b16 %v1541, %v1537
        %v1918 = vpack.c.b16 %v1542, %v1538
        %v1919 = vpack.c.b16 %v1543, %v1539
        %v1920 = vpack.c.b16 %v1548, %v1544
        %v1921 = vpack.c.b16 %v1549, %v1545
        %v1922 = vpack.c.b16 %v1550, %v1546
        %v1923 = vpack.c.b16 %v1551, %v1547
        %v1924 = vpack.c.b16 %v1556, %v1552
        %v1925 = vpack.c.b16 %v1557, %v1553
        %v1926 = vpack.c.b16 %v1558, %v1554
        %v1927 = vpack.c.b16 %v1559, %v1555
        %v1928 = vpack.c.b16 %v1564, %v1560
        %v1929 = vpack.c.b16 %v1565, %v1561
        %v1930 = vpack.c.b16 %v1566, %v1562
        %v1931 = vpack.c.b16 %v1567, %v1563
        %v1932 = vpack.c.b16 %v1572, %v1568
        %v1933 = vpack.c.b16 %v1573, %v1569
        %v1934 = vpack.c.b16 %v1574, %v1570
        %v1935 = vpack.c.b16 %v1575, %v1571
        %v1936 = vpack.c.b16 %v1580, %v1576
        %v1937 = vpack.c.b16 %v1581, %v1577
        %v1938 = vpack.c.b16 %v1582, %v1578
        %v1939 = vpack.c.b16 %v1583, %v1579
        %v1940 = vpack.c.b16 %v1588, %v1584
        %v1941 = vpack.c.b16 %v1589, %v1585
        %v1942 = vpack.c.b16 %v1590, %v1586
        %v1943 = vpack.c.b16 %v1591, %v1587
        %v1944 = vpack.c.b16 %v1596, %v1592
        %v1945 = vpack.c.b16 %v1597, %v1593
        %v1946 = vpack.c.b16 %v1598, %v1594
        %v1947 = vpack.c.b16 %v1599, %v1595
        %v1948 = vpack.c.b16 %v1604, %v1600
        %v1949 = vpack.c.b16 %v1605, %v1601
        %v1950 = vpack.c.b16 %v1606, %v1602
        %v1951 = vpack.c.b16 %v1607, %v1603
        %v1952 = vpack.c.b16 %v1612, %v1608
        %v1953 = vpack.c.b16 %v1613, %v1609
        %v1954 = vpack.c.b16 %v1614, %v1610
        %v1955 = vpack.c.b16 %v1615, %v1611
        %v1956 = vpack.c.b16 %v1620, %v1616
        %v1957 = vpack.c.b16 %v1621, %v1617
        %v1958 = vpack.c.b16 %v1622, %v1618
        %v1959 = vpack.c.b16 %v1623, %v1619
        %v1960 = vpack.c.b16 %v1628, %v1624
        %v1961 = vpack.c.b16 %v1629, %v1625
        %v1962 = vpack.c.b16 %v1630, %v1626
        %v1963 = vpack.c.b16 %v1631, %v1627
        %v1964 = vpack.c.b16 %v1636, %v1632
        %v1965 = vpack.c.b16 %v1637, %v1633
        %v1966 = vpack.c.b16 %v1638, %v1634
        %v1967 = vpack.c.b16 %v1639, %v1635
        %v1968 = vpack.c.b16 %v1644, %v1640
        %v1969 = vpack.c.b16 %v1645, %v1641
        %v1970 = vpack.c.b16 %v1646, %v1642
        %v1971 = vpack.c.b16 %v1647, %v1643
        %v1972 = vpack.c.b16 %v1652, %v1648
        %v1973 = vpack.c.b16 %v1653, %v1649
        %v1974 = vpack.c.b16 %v1654, %v1650
        %v1975 = vpack.c.b16 %v1655, %v1651
        %v1976 = vpack.c.b16 %v1660, %v1656
        %v1977 = vpack.c.b16 %v1661, %v1657
        %v1978 = vpack.c.b16 %v1662, %v1658
        %v1979 = vpack.c.b16 %v1663, %v1659
        %v1980 = vpack.c.b16 %v1668, %v1664
        %v1981 = vpack.c.b16 %v1669, %v1665
        %v1982 = vpack.c.b16 %v1670, %v1666
        %v1983 = vpack.c.b16 %v1671, %v1667
        %v1984 = vpack.c.b16 %v1676, %v1672
        %v1985 = vpack.c.b16 %v1677, %v1673
        %v1986 = vpack.c.b16 %v1678, %v1674
        %v1987 = vpack.c.b16 %v1679, %v1675
        %v1988 = vpack.c.b16 %v1684, %v1680
        %v1989 = vpack.c.b16 %v1685, %v1681
        %v1990 = vpack.c.b16 %v1686, %v1682
        %v1991 = vpack.c.b16 %v1687, %v1683
        %v1992 = vpack.c.b16 %v1692, %v1688
        %v1993 = vpack.c.b16 %v1693, %v1689
        %v1994 = vpack.c.b16 %v1694, %v1690
        %v1995 = vpack.c.b16 %v1695, %v1691
        %v1996 = vpack.c.b16 %v1700, %v1696
        %v1997 = vpack.c.b16 %v1701, %v1697
        %v1998 = vpack.c.b16 %v1702, %v1698
        %v1999 = vpack.c.b16 %v1703, %v1699
        %v2000 = vpack.c.b16 %v1708, %v1704
        %v2001 = vpack.c.b16 %v1709, %v1705
        %v2002 = vpack.c.b16 %v1710, %v1706
        %v2003 = vpack.c.b16 %v1711, %v1707
        %v2004 = vpack.c.b16 %v1716, %v1712
        %v2005 = vpack.c.b16 %v1717, %v1713
        %v2006 = vpack.c.b16 %v1718, %v1714
        %v2007 = vpack.c.b16 %v1719, %v1715
        %v2008 = vpack.c.b16 %v1724, %v1720
        %v2009 = vpack.c.b16 %v1725, %v1721
        %v2010 = vpack.c.b16 %v1726, %v1722
        %v2011 = vpack.c.b16 %v1727, %v1723
        %v2012 = vpack.c.b16 %v1732, %v1728
        %v2013 = vpack.c.b16 %v1733, %v1729
        %v2014 = vpack.c.b16 %v1734, %v1730
        %v2015 = vpack.c.b16 %v1735, %v1731
        %v2016 = vpack.c.b16 %v1740, %v1736
        %v2017 = vpack.c.b16 %v1741, %v1737
        %v2018 = vpack.c.b16 %v1742, %v1738
        %v2019 = vpack.c.b16 %v1743, %v1739
        %v2020 = vpack.c.b16 %v1748, %v1744
        %v2021 = vpack.c.b16 %v1749, %v1745
        %v2022 = vpack.c.b16 %v1750, %v1746
        %v2023 = vpack.c.b16 %v1751, %v1747
        %v2024 = vpack.c.b16 %v1756, %v1752
        %v2025 = vpack.c.b16 %v1757, %v1753
        %v2026 = vpack.c.b16 %v1758, %v1754
        %v2027 = vpack.c.b16 %v1759, %v1755
        %v2028 = vpack.c.b16 %v1764, %v1760
        %v2029 = vpack.c.b16 %v1765, %v1761
        %v2030 = vpack.c.b16 %v1766, %v1762
        %v2031 = vpack.c.b16 %v1767, %v1763
        %v2032 = vpack.c.b16 %v1772, %v1768
        %v2033 = vpack.c.b16 %v1773, %v1769
        %v2034 = vpack.c.b16 %v1774, %v1770
        %v2035 = vpack.c.b16 %v1775, %v1771
        %v2036 = vpack.c.b16 %v1780, %v1776
        %v2037 = vpack.c.b16 %v1781, %v1777
        %v2038 = vpack.c.b16 %v1782, %v1778
        %v2039 = vpack.c.b16 %v1783, %v1779
        %2296 = vmatprep.subr.bf16.mxu0 %v1785
        %2297 = vmatpush1.bf16.msra.mxu0 %v1784
        %2298 = vmatprep.subr.bf16.mxu0 %v1789
        %2299 = vmatpush1.bf16.msra.mxu0 %v1788
        %2300 = vmatprep.subr.bf16.mxu0 %v1793
        %2301 = vmatpush1.bf16.msra.mxu0 %v1792
        %2302 = vmatprep.subr.bf16.mxu0 %v1797
        %2303 = vmatpush1.bf16.msra.mxu0 %v1796
        %2304 = vmatprep.subr.bf16.mxu0 %v1801
        %2305 = vmatpush1.bf16.msra.mxu0 %v1800
        %2306 = vmatprep.subr.bf16.mxu0 %v1805
        %2307 = vmatpush1.bf16.msra.mxu0 %v1804
        %2308 = vmatprep.subr.bf16.mxu0 %v1809
        %2309 = vmatpush1.bf16.msra.mxu0 %v1808
        %2310 = vmatprep.subr.bf16.mxu0 %v1813
        %2311 = vmatpush1.bf16.msra.mxu0 %v1812
        %2312 = vmatprep.subr.bf16.mxu0 %v1817
        %2313 = vmatpush1.bf16.msra.mxu0 %v1816
        %2314 = vmatprep.subr.bf16.mxu0 %v1821
        %2315 = vmatpush1.bf16.msra.mxu0 %v1820
        %2316 = vmatprep.subr.bf16.mxu0 %v1825
        %2317 = vmatpush1.bf16.msra.mxu0 %v1824
        %2318 = vmatprep.subr.bf16.mxu0 %v1829
        %2319 = vmatpush1.bf16.msra.mxu0 %v1828
        %2320 = vmatprep.subr.bf16.mxu0 %v1833
        %2321 = vmatpush1.bf16.msra.mxu0 %v1832
        %2322 = vmatprep.subr.bf16.mxu0 %v1837
        %2323 = vmatpush1.bf16.msra.mxu0 %v1836
        %2324 = vmatprep.subr.bf16.mxu0 %v1841
        %2325 = vmatpush1.bf16.msra.mxu0 %v1840
        %2326 = vmatprep.subr.bf16.mxu0 %v1845
        %2327 = vmatpush1.bf16.msra.mxu0 %v1844
        %2328 = vmatprep.mubr.bf16.mxu0 %v675
        %2329 = vmatmul.mubr.bf16.gmra.mrb[0].mxu0 %v674
        %v2330 = vpop.f32.mrb[0].mxu0
        %v2331 = vadd.f32 %v999, %v2330
        %v2332 = vpop.f32.mrb[0].mxu0
        %v2333 = vadd.f32 %v1003, %v2332
        %v2334 = vpop.f32.mrb[0].mxu0
        %v2335 = vadd.f32 %v999, %v2334
        %v2336 = vpop.f32.mrb[0].mxu0
        %v2337 = vadd.f32 %v1003, %v2336
        %2338 = vmatprep.mubr.bf16.mxu0 %v683
        %2339 = vmatmul.mubr.bf16.gmra.mrb[0].mxu0 %v682
        %v2340 = vpop.f32.mrb[0].mxu0
        %v2341 = vadd.f32 %v999, %v2340
        %v2342 = vpop.f32.mrb[0].mxu0
        %v2343 = vadd.f32 %v1003, %v2342
        %v2344 = vpop.f32.mrb[0].mxu0
        %v2345 = vadd.f32 %v999, %v2344
        %v2346 = vpop.f32.mrb[0].mxu0
        %v2347 = vadd.f32 %v1003, %v2346
        %2348 = vmatprep.mubr.bf16.mxu0 %v691
        %2349 = vmatmul.mubr.bf16.gmra.mrb[0].mxu0 %v690
        %v2350 = vpop.f32.mrb[0].mxu0
        %v2351 = vadd.f32 %v999, %v2350
        %v2352 = vpop.f32.mrb[0].mxu0
        %v2353 = vadd.f32 %v1003, %v2352
        %v2354 = vpop.f32.mrb[0].mxu0
        %v2355 = vadd.f32 %v999, %v2354
        %v2356 = vpop.f32.mrb[0].mxu0
        %v2357 = vadd.f32 %v1003, %v2356
        %2358 = vmatprep.mubr.bf16.mxu0 %v699
        %2359 = vmatmul.mubr.bf16.gmra.mrb[0].mxu0 %v698
        %v2360 = vpop.f32.mrb[0].mxu0
        %v2361 = vadd.f32 %v999, %v2360
        %v2362 = vpop.f32.mrb[0].mxu0
        %v2363 = vadd.f32 %v1003, %v2362
        %v2364 = vpop.f32.mrb[0].mxu0
        %v2365 = vadd.f32 %v999, %v2364
        %v2366 = vpop.f32.mrb[0].mxu0
        %v2367 = vadd.f32 %v1003, %v2366
        %2368 = vmatprep.mubr.bf16.mxu0 %v707
        %2369 = vmatmul.mubr.bf16.gmra.mrb[0].mxu0 %v706
        %v2370 = vpop.f32.mrb[0].mxu0
        %v2371 = vadd.f32 %v999, %v2370
        %v2372 = vpop.f32.mrb[0].mxu0
        %v2373 = vadd.f32 %v1003, %v2372
        %v2374 = vpop.f32.mrb[0].mxu0
        %v2375 = vadd.f32 %v999, %v2374
        %v2376 = vpop.f32.mrb[0].mxu0
        %v2377 = vadd.f32 %v1003, %v2376
        %2378 = vmatprep.mubr.bf16.mxu0 %v715
        %2379 = vmatmul.mubr.bf16.gmra.mrb[0].mxu0 %v714
        %v2380 = vpop.f32.mrb[0].mxu0
        %v2381 = vadd.f32 %v999, %v2380
        %v2382 = vpop.f32.mrb[0].mxu0
        %v2383 = vadd.f32 %v1003, %v2382
        %v2384 = vpop.f32.mrb[0].mxu0
        %v2385 = vadd.f32 %v999, %v2384
        %v2386 = vpop.f32.mrb[0].mxu0
        %v2387 = vadd.f32 %v1003, %v2386
        %2388 = vmatprep.mubr.bf16.mxu0 %v723
        %2389 = vmatmul.mubr.bf16.gmra.mrb[0].mxu0 %v722
        %v2390 = vpop.f32.mrb[0].mxu0
        %v2391 = vadd.f32 %v999, %v2390
        %v2392 = vpop.f32.mrb[0].mxu0
        %v2393 = vadd.f32 %v1003, %v2392
        %v2394 = vpop.f32.mrb[0].mxu0
        %v2395 = vadd.f32 %v999, %v2394
        %v2396 = vpop.f32.mrb[0].mxu0
        %v2397 = vadd.f32 %v1003, %v2396
        %2398 = vmatprep.mubr.bf16.mxu0 %v731
        %2399 = vmatmul.mubr.bf16.gmra.mrb[0].mxu0 %v730
        %v2400 = vpop.f32.mrb[0].mxu0
        %v2401 = vadd.f32 %v999, %v2400
        %v2402 = vpop.f32.mrb[0].mxu0
        %v2403 = vadd.f32 %v1003, %v2402
        %v2404 = vpop.f32.mrb[0].mxu0
        %v2405 = vadd.f32 %v999, %v2404
        %v2406 = vpop.f32.mrb[0].mxu0
        %v2407 = vadd.f32 %v1003, %v2406
        %2408 = vdwg.mxu0
        %2409 = vmatprep.subr.bf16.mxu0 %v1849
        %2410 = vmatpush1.bf16.msra.mxu0 %v1848
        %2411 = vmatprep.subr.bf16.mxu0 %v1853
        %2412 = vmatpush1.bf16.msra.mxu0 %v1852
        %2413 = vmatprep.subr.bf16.mxu0 %v1857
        %2414 = vmatpush1.bf16.msra.mxu0 %v1856
        %2415 = vmatprep.subr.bf16.mxu0 %v1861
        %2416 = vmatpush1.bf16.msra.mxu0 %v1860
        %2417 = vmatprep.subr.bf16.mxu0 %v1865
        %2418 = vmatpush1.bf16.msra.mxu0 %v1864
        %2419 = vmatprep.subr.bf16.mxu0 %v1869
        %2420 = vmatpush1.bf16.msra.mxu0 %v1868
        %2421 = vmatprep.subr.bf16.mxu0 %v1873
        %2422 = vmatpush1.bf16.msra.mxu0 %v1872
        %2423 = vmatprep.subr.bf16.mxu0 %v1877
        %2424 = vmatpush1.bf16.msra.mxu0 %v1876
        %2425 = vmatprep.subr.bf16.mxu0 %v1881
        %2426 = vmatpush1.bf16.msra.mxu0 %v1880
        %2427 = vmatprep.subr.bf16.mxu0 %v1885
        %2428 = vmatpush1.bf16.msra.mxu0 %v1884
        %2429 = vmatprep.subr.bf16.mxu0 %v1889
        %2430 = vmatpush1.bf16.msra.mxu0 %v1888
        %2431 = vmatprep.subr.bf16.mxu0 %v1893
        %2432 = vmatpush1.bf16.msra.mxu0 %v1892
        %2433 = vmatprep.subr.bf16.mxu0 %v1897
        %2434 = vmatpush1.bf16.msra.mxu0 %v1896
        %2435 = vmatprep.subr.bf16.mxu0 %v1901
        %2436 = vmatpush1.bf16.msra.mxu0 %v1900
        %2437 = vmatprep.subr.bf16.mxu0 %v1905
        %2438 = vmatpush1.bf16.msra.mxu0 %v1904
        %2439 = vmatprep.subr.bf16.mxu0 %v1909
        %2440 = vmatpush1.bf16.msra.mxu0 %v1908
        %2441 = vmatprep.mubr.bf16.mxu0 %v677
        %2442 = vmatmul.mubr.bf16.gmra.mrb[0].mxu0 %v676
        %v2443 = vpop.f32.mrb[0].mxu0
        %v2444 = vadd.f32 %v2331, %v2443
        %v2445 = vpop.f32.mrb[0].mxu0
        %v2446 = vadd.f32 %v2333, %v2445
        %v2447 = vpop.f32.mrb[0].mxu0
        %v2448 = vadd.f32 %v2335, %v2447
        %v2449 = vpop.f32.mrb[0].mxu0
        %v2450 = vadd.f32 %v2337, %v2449
        %2451 = vmatprep.mubr.bf16.mxu0 %v685
        %2452 = vmatmul.mubr.bf16.gmra.mrb[0].mxu0 %v684
        %v2453 = vpop.f32.mrb[0].mxu0
        %v2454 = vadd.f32 %v2341, %v2453
        %v2455 = vpop.f32.mrb[0].mxu0
        %v2456 = vadd.f32 %v2343, %v2455
        %v2457 = vpop.f32.mrb[0].mxu0
        %v2458 = vadd.f32 %v2345, %v2457
        %v2459 = vpop.f32.mrb[0].mxu0
        %v2460 = vadd.f32 %v2347, %v2459
        %2461 = vmatprep.mubr.bf16.mxu0 %v693
        %2462 = vmatmul.mubr.bf16.gmra.mrb[0].mxu0 %v692
        %v2463 = vpop.f32.mrb[0].mxu0
        %v2464 = vadd.f32 %v2351, %v2463
        %v2465 = vpop.f32.mrb[0].mxu0
        %v2466 = vadd.f32 %v2353, %v2465
        %v2467 = vpop.f32.mrb[0].mxu0
        %v2468 = vadd.f32 %v2355, %v2467
        %v2469 = vpop.f32.mrb[0].mxu0
        %v2470 = vadd.f32 %v2357, %v2469
        %2471 = vmatprep.mubr.bf16.mxu0 %v701
        %2472 = vmatmul.mubr.bf16.gmra.mrb[0].mxu0 %v700
        %v2473 = vpop.f32.mrb[0].mxu0
        %v2474 = vadd.f32 %v2361, %v2473
        %v2475 = vpop.f32.mrb[0].mxu0
        %v2476 = vadd.f32 %v2363, %v2475
        %v2477 = vpop.f32.mrb[0].mxu0
        %v2478 = vadd.f32 %v2365, %v2477
        %v2479 = vpop.f32.mrb[0].mxu0
        %v2480 = vadd.f32 %v2367, %v2479
        %2481 = vmatprep.mubr.bf16.mxu0 %v709
        %2482 = vmatmul.mubr.bf16.gmra.mrb[0].mxu0 %v708
        %v2483 = vpop.f32.mrb[0].mxu0
        %v2484 = vadd.f32 %v2371, %v2483
        %v2485 = vpop.f32.mrb[0].mxu0
        %v2486 = vadd.f32 %v2373, %v2485
        %v2487 = vpop.f32.mrb[0].mxu0
        %v2488 = vadd.f32 %v2375, %v2487
        %v2489 = vpop.f32.mrb[0].mxu0
        %v2490 = vadd.f32 %v2377, %v2489
        %2491 = vmatprep.mubr.bf16.mxu0 %v717
        %2492 = vmatmul.mubr.bf16.gmra.mrb[0].mxu0 %v716
        %v2493 = vpop.f32.mrb[0].mxu0
        %v2494 = vadd.f32 %v2381, %v2493
        %v2495 = vpop.f32.mrb[0].mxu0
        %v2496 = vadd.f32 %v2383, %v2495
        %v2497 = vpop.f32.mrb[0].mxu0
        %v2498 = vadd.f32 %v2385, %v2497
        %v2499 = vpop.f32.mrb[0].mxu0
        %v2500 = vadd.f32 %v2387, %v2499
        %2501 = vmatprep.mubr.bf16.mxu0 %v725
        %2502 = vmatmul.mubr.bf16.gmra.mrb[0].mxu0 %v724
        %v2503 = vpop.f32.mrb[0].mxu0
        %v2504 = vadd.f32 %v2391, %v2503
        %v2505 = vpop.f32.mrb[0].mxu0
        %v2506 = vadd.f32 %v2393, %v2505
        %v2507 = vpop.f32.mrb[0].mxu0
        %v2508 = vadd.f32 %v2395, %v2507
        %v2509 = vpop.f32.mrb[0].mxu0
        %v2510 = vadd.f32 %v2397, %v2509
        %2511 = vmatprep.mubr.bf16.mxu0 %v733
        %2512 = vmatmul.mubr.bf16.gmra.mrb[0].mxu0 %v732
        %v2513 = vpop.f32.mrb[0].mxu0
        %v2514 = vadd.f32 %v2401, %v2513
        %v2515 = vpop.f32.mrb[0].mxu0
        %v2516 = vadd.f32 %v2403, %v2515
        %v2517 = vpop.f32.mrb[0].mxu0
        %v2518 = vadd.f32 %v2405, %v2517
        %v2519 = vpop.f32.mrb[0].mxu0
        %v2520 = vadd.f32 %v2407, %v2519
        %2521 = vdwg.mxu0
        %2522 = vmatprep.subr.bf16.mxu0 %v1913
        %2523 = vmatpush1.bf16.msra.mxu0 %v1912
        %2524 = vmatprep.subr.bf16.mxu0 %v1917
        %2525 = vmatpush1.bf16.msra.mxu0 %v1916
        %2526 = vmatprep.subr.bf16.mxu0 %v1921
        %2527 = vmatpush1.bf16.msra.mxu0 %v1920
        %2528 = vmatprep.subr.bf16.mxu0 %v1925
        %2529 = vmatpush1.bf16.msra.mxu0 %v1924
        %2530 = vmatprep.subr.bf16.mxu0 %v1929
        %2531 = vmatpush1.bf16.msra.mxu0 %v1928
        %2532 = vmatprep.subr.bf16.mxu0 %v1933
        %2533 = vmatpush1.bf16.msra.mxu0 %v1932
        %2534 = vmatprep.subr.bf16.mxu0 %v1937
        %2535 = vmatpush1.bf16.msra.mxu0 %v1936
        %2536 = vmatprep.subr.bf16.mxu0 %v1941
        %2537 = vmatpush1.bf16.msra.mxu0 %v1940
        %2538 = vmatprep.subr.bf16.mxu0 %v1945
        %2539 = vmatpush1.bf16.msra.mxu0 %v1944
        %2540 = vmatprep.subr.bf16.mxu0 %v1949
        %2541 = vmatpush1.bf16.msra.mxu0 %v1948
        %2542 = vmatprep.subr.bf16.mxu0 %v1953
        %2543 = vmatpush1.bf16.msra.mxu0 %v1952
        %2544 = vmatprep.subr.bf16.mxu0 %v1957
        %2545 = vmatpush1.bf16.msra.mxu0 %v1956
        %2546 = vmatprep.subr.bf16.mxu0 %v1961
        %2547 = vmatpush1.bf16.msra.mxu0 %v1960
        %2548 = vmatprep.subr.bf16.mxu0 %v1965
        %2549 = vmatpush1.bf16.msra.mxu0 %v1964
        %2550 = vmatprep.subr.bf16.mxu0 %v1969
        %2551 = vmatpush1.bf16.msra.mxu0 %v1968
        %2552 = vmatprep.subr.bf16.mxu0 %v1973
        %2553 = vmatpush1.bf16.msra.mxu0 %v1972
        %2554 = vmatprep.mubr.bf16.mxu0 %v679
        %2555 = vmatmul.mubr.bf16.gmra.mrb[0].mxu0 %v678
        %v2556 = vpop.f32.mrb[0].mxu0
        %v2557 = vadd.f32 %v2444, %v2556
        %v2558 = vpop.f32.mrb[0].mxu0
        %v2559 = vadd.f32 %v2446, %v2558
        %v2560 = vpop.f32.mrb[0].mxu0
        %v2561 = vadd.f32 %v2448, %v2560
        %v2562 = vpop.f32.mrb[0].mxu0
        %v2563 = vadd.f32 %v2450, %v2562
        %2564 = vmatprep.mubr.bf16.mxu0 %v687
        %2565 = vmatmul.mubr.bf16.gmra.mrb[0].mxu0 %v686
        %v2566 = vpop.f32.mrb[0].mxu0
        %v2567 = vadd.f32 %v2454, %v2566
        %v2568 = vpop.f32.mrb[0].mxu0
        %v2569 = vadd.f32 %v2456, %v2568
        %v2570 = vpop.f32.mrb[0].mxu0
        %v2571 = vadd.f32 %v2458, %v2570
        %v2572 = vpop.f32.mrb[0].mxu0
        %v2573 = vadd.f32 %v2460, %v2572
        %2574 = vmatprep.mubr.bf16.mxu0 %v695
        %2575 = vmatmul.mubr.bf16.gmra.mrb[0].mxu0 %v694
        %v2576 = vpop.f32.mrb[0].mxu0
        %v2577 = vadd.f32 %v2464, %v2576
        %v2578 = vpop.f32.mrb[0].mxu0
        %v2579 = vadd.f32 %v2466, %v2578
        %v2580 = vpop.f32.mrb[0].mxu0
        %v2581 = vadd.f32 %v2468, %v2580
        %v2582 = vpop.f32.mrb[0].mxu0
        %v2583 = vadd.f32 %v2470, %v2582
        %2584 = vmatprep.mubr.bf16.mxu0 %v703
        %2585 = vmatmul.mubr.bf16.gmra.mrb[0].mxu0 %v702
        %v2586 = vpop.f32.mrb[0].mxu0
        %v2587 = vadd.f32 %v2474, %v2586
        %v2588 = vpop.f32.mrb[0].mxu0
        %v2589 = vadd.f32 %v2476, %v2588
        %v2590 = vpop.f32.mrb[0].mxu0
        %v2591 = vadd.f32 %v2478, %v2590
        %v2592 = vpop.f32.mrb[0].mxu0
        %v2593 = vadd.f32 %v2480, %v2592
        %2594 = vmatprep.mubr.bf16.mxu0 %v711
        %2595 = vmatmul.mubr.bf16.gmra.mrb[0].mxu0 %v710
        %v2596 = vpop.f32.mrb[0].mxu0
        %v2597 = vadd.f32 %v2484, %v2596
        %v2598 = vpop.f32.mrb[0].mxu0
        %v2599 = vadd.f32 %v2486, %v2598
        %v2600 = vpop.f32.mrb[0].mxu0
        %v2601 = vadd.f32 %v2488, %v2600
        %v2602 = vpop.f32.mrb[0].mxu0
        %v2603 = vadd.f32 %v2490, %v2602
        %2604 = vmatprep.mubr.bf16.mxu0 %v719
        %2605 = vmatmul.mubr.bf16.gmra.mrb[0].mxu0 %v718
        %v2606 = vpop.f32.mrb[0].mxu0
        %v2607 = vadd.f32 %v2494, %v2606
        %v2608 = vpop.f32.mrb[0].mxu0
        %v2609 = vadd.f32 %v2496, %v2608
        %v2610 = vpop.f32.mrb[0].mxu0
        %v2611 = vadd.f32 %v2498, %v2610
        %v2612 = vpop.f32.mrb[0].mxu0
        %v2613 = vadd.f32 %v2500, %v2612
        %2614 = vmatprep.mubr.bf16.mxu0 %v727
        %2615 = vmatmul.mubr.bf16.gmra.mrb[0].mxu0 %v726
        %v2616 = vpop.f32.mrb[0].mxu0
        %v2617 = vadd.f32 %v2504, %v2616
        %v2618 = vpop.f32.mrb[0].mxu0
        %v2619 = vadd.f32 %v2506, %v2618
        %v2620 = vpop.f32.mrb[0].mxu0
        %v2621 = vadd.f32 %v2508, %v2620
        %v2622 = vpop.f32.mrb[0].mxu0
        %v2623 = vadd.f32 %v2510, %v2622
        %2624 = vmatprep.mubr.bf16.mxu0 %v735
        %2625 = vmatmul.mubr.bf16.gmra.mrb[0].mxu0 %v734
        %v2626 = vpop.f32.mrb[0].mxu0
        %v2627 = vadd.f32 %v2514, %v2626
        %v2628 = vpop.f32.mrb[0].mxu0
        %v2629 = vadd.f32 %v2516, %v2628
        %v2630 = vpop.f32.mrb[0].mxu0
        %v2631 = vadd.f32 %v2518, %v2630
        %v2632 = vpop.f32.mrb[0].mxu0
        %v2633 = vadd.f32 %v2520, %v2632
        %2634 = vdwg.mxu0
        %2635 = vmatprep.subr.bf16.mxu0 %v1977
        %2636 = vmatpush1.bf16.msra.mxu0 %v1976
        %2637 = vmatprep.subr.bf16.mxu0 %v1981
        %2638 = vmatpush1.bf16.msra.mxu0 %v1980
        %2639 = vmatprep.subr.bf16.mxu0 %v1985
        %2640 = vmatpush1.bf16.msra.mxu0 %v1984
        %2641 = vmatprep.subr.bf16.mxu0 %v1989
        %2642 = vmatpush1.bf16.msra.mxu0 %v1988
        %2643 = vmatprep.subr.bf16.mxu0 %v1993
        %2644 = vmatpush1.bf16.msra.mxu0 %v1992
        %2645 = vmatprep.subr.bf16.mxu0 %v1997
        %2646 = vmatpush1.bf16.msra.mxu0 %v1996
        %2647 = vmatprep.subr.bf16.mxu0 %v2001
        %2648 = vmatpush1.bf16.msra.mxu0 %v2000
        %2649 = vmatprep.subr.bf16.mxu0 %v2005
        %2650 = vmatpush1.bf16.msra.mxu0 %v2004
        %2651 = vmatprep.subr.bf16.mxu0 %v2009
        %2652 = vmatpush1.bf16.msra.mxu0 %v2008
        %2653 = vmatprep.subr.bf16.mxu0 %v2013
        %2654 = vmatpush1.bf16.msra.mxu0 %v2012
        %2655 = vmatprep.subr.bf16.mxu0 %v2017
        %2656 = vmatpush1.bf16.msra.mxu0 %v2016
        %2657 = vmatprep.subr.bf16.mxu0 %v2021
        %2658 = vmatpush1.bf16.msra.mxu0 %v2020
        %2659 = vmatprep.subr.bf16.mxu0 %v2025
        %2660 = vmatpush1.bf16.msra.mxu0 %v2024
        %2661 = vmatprep.subr.bf16.mxu0 %v2029
        %2662 = vmatpush1.bf16.msra.mxu0 %v2028
        %2663 = vmatprep.subr.bf16.mxu0 %v2033
        %2664 = vmatpush1.bf16.msra.mxu0 %v2032
        %2665 = vmatprep.subr.bf16.mxu0 %v2037
        %2666 = vmatpush1.bf16.msra.mxu0 %v2036
        %2667 = vmatprep.mubr.bf16.mxu0 %v681
        %2668 = vmatmul.mubr.bf16.gmra.mrb[0].mxu0 %v680
        %v2669 = vpop.f32.mrb[0].mxu0
        %v2670 = vadd.f32 %v2557, %v2669
        %v2671 = vpop.f32.mrb[0].mxu0
        %v2672 = vadd.f32 %v2559, %v2671
        %v2673 = vpop.f32.mrb[0].mxu0
        %v2674 = vadd.f32 %v2561, %v2673
        %v2675 = vpop.f32.mrb[0].mxu0
        %v2676 = vadd.f32 %v2563, %v2675
        %2677 = vmatprep.mubr.bf16.mxu0 %v689
        %2678 = vmatmul.mubr.bf16.gmra.mrb[0].mxu0 %v688
        %v2679 = vpop.f32.mrb[0].mxu0
        %v2680 = vadd.f32 %v2567, %v2679
        %v2681 = vpop.f32.mrb[0].mxu0
        %v2682 = vadd.f32 %v2569, %v2681
        %v2683 = vpop.f32.mrb[0].mxu0
        %v2684 = vadd.f32 %v2571, %v2683
        %v2685 = vpop.f32.mrb[0].mxu0
        %v2686 = vadd.f32 %v2573, %v2685
        %2687 = vmatprep.mubr.bf16.mxu0 %v697
        %2688 = vmatmul.mubr.bf16.gmra.mrb[0].mxu0 %v696
        %v2689 = vpop.f32.mrb[0].mxu0
        %v2690 = vadd.f32 %v2577, %v2689
        %v2691 = vpop.f32.mrb[0].mxu0
        %v2692 = vadd.f32 %v2579, %v2691
        %v2693 = vpop.f32.mrb[0].mxu0
        %v2694 = vadd.f32 %v2581, %v2693
        %v2695 = vpop.f32.mrb[0].mxu0
        %v2696 = vadd.f32 %v2583, %v2695
        %2697 = vmatprep.mubr.bf16.mxu0 %v705
        %2698 = vmatmul.mubr.bf16.gmra.mrb[0].mxu0 %v704
        %v2699 = vpop.f32.mrb[0].mxu0
        %v2700 = vadd.f32 %v2587, %v2699
        %v2701 = vpop.f32.mrb[0].mxu0
        %v2702 = vadd.f32 %v2589, %v2701
        %v2703 = vpop.f32.mrb[0].mxu0
        %v2704 = vadd.f32 %v2591, %v2703
        %v2705 = vpop.f32.mrb[0].mxu0
        %v2706 = vadd.f32 %v2593, %v2705
        %2707 = vmatprep.mubr.bf16.mxu0 %v713
        %2708 = vmatmul.mubr.bf16.gmra.mrb[0].mxu0 %v712
        %v2709 = vpop.f32.mrb[0].mxu0
        %v2710 = vadd.f32 %v2597, %v2709
        %v2711 = vpop.f32.mrb[0].mxu0
        %v2712 = vadd.f32 %v2599, %v2711
        %v2713 = vpop.f32.mrb[0].mxu0
        %v2714 = vadd.f32 %v2601, %v2713
        %v2715 = vpop.f32.mrb[0].mxu0
        %v2716 = vadd.f32 %v2603, %v2715
        %2717 = vmatprep.mubr.bf16.mxu0 %v721
        %2718 = vmatmul.mubr.bf16.gmra.mrb[0].mxu0 %v720
        %v2719 = vpop.f32.mrb[0].mxu0
        %v2720 = vadd.f32 %v2607, %v2719
        %v2721 = vpop.f32.mrb[0].mxu0
        %v2722 = vadd.f32 %v2609, %v2721
        %v2723 = vpop.f32.mrb[0].mxu0
        %v2724 = vadd.f32 %v2611, %v2723
        %v2725 = vpop.f32.mrb[0].mxu0
        %v2726 = vadd.f32 %v2613, %v2725
        %2727 = vmatprep.mubr.bf16.mxu0 %v729
        %2728 = vmatmul.mubr.bf16.gmra.mrb[0].mxu0 %v728
        %v2729 = vpop.f32.mrb[0].mxu0
        %v2730 = vadd.f32 %v2617, %v2729
        %v2731 = vpop.f32.mrb[0].mxu0
        %v2732 = vadd.f32 %v2619, %v2731
        %v2733 = vpop.f32.mrb[0].mxu0
        %v2734 = vadd.f32 %v2621, %v2733
        %v2735 = vpop.f32.mrb[0].mxu0
        %v2736 = vadd.f32 %v2623, %v2735
        %2737 = vmatprep.mubr.bf16.mxu0 %v737
        %2738 = vmatmul.mubr.bf16.gmra.mrb[0].mxu0 %v736
        %v2739 = vpop.f32.mrb[0].mxu0
        %v2740 = vadd.f32 %v2627, %v2739
        %v2741 = vpop.f32.mrb[0].mxu0
        %v2742 = vadd.f32 %v2629, %v2741
        %v2743 = vpop.f32.mrb[0].mxu0
        %v2744 = vadd.f32 %v2631, %v2743
        %v2745 = vpop.f32.mrb[0].mxu0
        %v2746 = vadd.f32 %v2633, %v2745
        %2747 = vdwg.mxu0
        %2748 = vmatprep.subr.bf16.mxu0 %v1787
        %2749 = vmatpush1.bf16.msra.mxu0 %v1786
        %2750 = vmatprep.subr.bf16.mxu0 %v1791
        %2751 = vmatpush1.bf16.msra.mxu0 %v1790
        %2752 = vmatprep.subr.bf16.mxu0 %v1795
        %2753 = vmatpush1.bf16.msra.mxu0 %v1794
        %2754 = vmatprep.subr.bf16.mxu0 %v1799
        %2755 = vmatpush1.bf16.msra.mxu0 %v1798
        %2756 = vmatprep.subr.bf16.mxu0 %v1803
        %2757 = vmatpush1.bf16.msra.mxu0 %v1802
        %2758 = vmatprep.subr.bf16.mxu0 %v1807
        %2759 = vmatpush1.bf16.msra.mxu0 %v1806
        %2760 = vmatprep.subr.bf16.mxu0 %v1811
        %2761 = vmatpush1.bf16.msra.mxu0 %v1810
        %2762 = vmatprep.subr.bf16.mxu0 %v1815
        %2763 = vmatpush1.bf16.msra.mxu0 %v1814
        %2764 = vmatprep.subr.bf16.mxu0 %v1819
        %2765 = vmatpush1.bf16.msra.mxu0 %v1818
        %2766 = vmatprep.subr.bf16.mxu0 %v1823
        %2767 = vmatpush1.bf16.msra.mxu0 %v1822
        %2768 = vmatprep.subr.bf16.mxu0 %v1827
        %2769 = vmatpush1.bf16.msra.mxu0 %v1826
        %2770 = vmatprep.subr.bf16.mxu0 %v1831
        %2771 = vmatpush1.bf16.msra.mxu0 %v1830
        %2772 = vmatprep.subr.bf16.mxu0 %v1835
        %2773 = vmatpush1.bf16.msra.mxu0 %v1834
        %2774 = vmatprep.subr.bf16.mxu0 %v1839
        %2775 = vmatpush1.bf16.msra.mxu0 %v1838
        %2776 = vmatprep.subr.bf16.mxu0 %v1843
        %2777 = vmatpush1.bf16.msra.mxu0 %v1842
        %2778 = vmatprep.subr.bf16.mxu0 %v1847
        %2779 = vmatpush1.bf16.msra.mxu0 %v1846
        %2780 = vmatprep.mubr.bf16.mxu0 %v675
        %2781 = vmatmul.mubr.bf16.gmra.mrb[0].mxu0 %v674
        %v2782 = vpop.f32.mrb[0].mxu0
        %v2783 = vadd.f32 %v1007, %v2782
        %v2784 = vpop.f32.mrb[0].mxu0
        %v2785 = vadd.f32 %v1011, %v2784
        %v2786 = vpop.f32.mrb[0].mxu0
        %v2787 = vadd.f32 %v1007, %v2786
        %v2788 = vpop.f32.mrb[0].mxu0
        %v2789 = vadd.f32 %v1011, %v2788
        %2790 = vmatprep.mubr.bf16.mxu0 %v683
        %2791 = vmatmul.mubr.bf16.gmra.mrb[0].mxu0 %v682
        %v2792 = vpop.f32.mrb[0].mxu0
        %v2793 = vadd.f32 %v1007, %v2792
        %v2794 = vpop.f32.mrb[0].mxu0
        %v2795 = vadd.f32 %v1011, %v2794
        %v2796 = vpop.f32.mrb[0].mxu0
        %v2797 = vadd.f32 %v1007, %v2796
        %v2798 = vpop.f32.mrb[0].mxu0
        %v2799 = vadd.f32 %v1011, %v2798
        %2800 = vmatprep.mubr.bf16.mxu0 %v691
        %2801 = vmatmul.mubr.bf16.gmra.mrb[0].mxu0 %v690
        %v2802 = vpop.f32.mrb[0].mxu0
        %v2803 = vadd.f32 %v1007, %v2802
        %v2804 = vpop.f32.mrb[0].mxu0
        %v2805 = vadd.f32 %v1011, %v2804
        %v2806 = vpop.f32.mrb[0].mxu0
        %v2807 = vadd.f32 %v1007, %v2806
        %v2808 = vpop.f32.mrb[0].mxu0
        %v2809 = vadd.f32 %v1011, %v2808
        %2810 = vmatprep.mubr.bf16.mxu0 %v699
        %2811 = vmatmul.mubr.bf16.gmra.mrb[0].mxu0 %v698
        %v2812 = vpop.f32.mrb[0].mxu0
        %v2813 = vadd.f32 %v1007, %v2812
        %v2814 = vpop.f32.mrb[0].mxu0
        %v2815 = vadd.f32 %v1011, %v2814
        %v2816 = vpop.f32.mrb[0].mxu0
        %v2817 = vadd.f32 %v1007, %v2816
        %v2818 = vpop.f32.mrb[0].mxu0
        %v2819 = vadd.f32 %v1011, %v2818
        %2820 = vmatprep.mubr.bf16.mxu0 %v707
        %2821 = vmatmul.mubr.bf16.gmra.mrb[0].mxu0 %v706
        %v2822 = vpop.f32.mrb[0].mxu0
        %v2823 = vadd.f32 %v1007, %v2822
        %v2824 = vpop.f32.mrb[0].mxu0
        %v2825 = vadd.f32 %v1011, %v2824
        %v2826 = vpop.f32.mrb[0].mxu0
        %v2827 = vadd.f32 %v1007, %v2826
        %v2828 = vpop.f32.mrb[0].mxu0
        %v2829 = vadd.f32 %v1011, %v2828
        %2830 = vmatprep.mubr.bf16.mxu0 %v715
        %2831 = vmatmul.mubr.bf16.gmra.mrb[0].mxu0 %v714
        %v2832 = vpop.f32.mrb[0].mxu0
        %v2833 = vadd.f32 %v1007, %v2832
        %v2834 = vpop.f32.mrb[0].mxu0
        %v2835 = vadd.f32 %v1011, %v2834
        %v2836 = vpop.f32.mrb[0].mxu0
        %v2837 = vadd.f32 %v1007, %v2836
        %v2838 = vpop.f32.mrb[0].mxu0
        %v2839 = vadd.f32 %v1011, %v2838
        %2840 = vmatprep.mubr.bf16.mxu0 %v723
        %2841 = vmatmul.mubr.bf16.gmra.mrb[0].mxu0 %v722
        %v2842 = vpop.f32.mrb[0].mxu0
        %v2843 = vadd.f32 %v1007, %v2842
        %v2844 = vpop.f32.mrb[0].mxu0
        %v2845 = vadd.f32 %v1011, %v2844
        %v2846 = vpop.f32.mrb[0].mxu0
        %v2847 = vadd.f32 %v1007, %v2846
        %v2848 = vpop.f32.mrb[0].mxu0
        %v2849 = vadd.f32 %v1011, %v2848
        %2850 = vmatprep.mubr.bf16.mxu0 %v731
        %2851 = vmatmul.mubr.bf16.gmra.mrb[0].mxu0 %v730
        %v2852 = vpop.f32.mrb[0].mxu0
        %v2853 = vadd.f32 %v1007, %v2852
        %v2854 = vpop.f32.mrb[0].mxu0
        %v2855 = vadd.f32 %v1011, %v2854
        %v2856 = vpop.f32.mrb[0].mxu0
        %v2857 = vadd.f32 %v1007, %v2856
        %v2858 = vpop.f32.mrb[0].mxu0
        %v2859 = vadd.f32 %v1011, %v2858
        %2860 = vdwg.mxu0
        %2861 = vmatprep.subr.bf16.mxu0 %v1851
        %2862 = vmatpush1.bf16.msra.mxu0 %v1850
        %2863 = vmatprep.subr.bf16.mxu0 %v1855
        %2864 = vmatpush1.bf16.msra.mxu0 %v1854
        %2865 = vmatprep.subr.bf16.mxu0 %v1859
        %2866 = vmatpush1.bf16.msra.mxu0 %v1858
        %2867 = vmatprep.subr.bf16.mxu0 %v1863
        %2868 = vmatpush1.bf16.msra.mxu0 %v1862
        %2869 = vmatprep.subr.bf16.mxu0 %v1867
        %2870 = vmatpush1.bf16.msra.mxu0 %v1866
        %2871 = vmatprep.subr.bf16.mxu0 %v1871
        %2872 = vmatpush1.bf16.msra.mxu0 %v1870
        %2873 = vmatprep.subr.bf16.mxu0 %v1875
        %2874 = vmatpush1.bf16.msra.mxu0 %v1874
        %2875 = vmatprep.subr.bf16.mxu0 %v1879
        %2876 = vmatpush1.bf16.msra.mxu0 %v1878
        %2877 = vmatprep.subr.bf16.mxu0 %v1883
        %2878 = vmatpush1.bf16.msra.mxu0 %v1882
        %2879 = vmatprep.subr.bf16.mxu0 %v1887
        %2880 = vmatpush1.bf16.msra.mxu0 %v1886
        %2881 = vmatprep.subr.bf16.mxu0 %v1891
        %2882 = vmatpush1.bf16.msra.mxu0 %v1890
        %2883 = vmatprep.subr.bf16.mxu0 %v1895
        %2884 = vmatpush1.bf16.msra.mxu0 %v1894
        %2885 = vmatprep.subr.bf16.mxu0 %v1899
        %2886 = vmatpush1.bf16.msra.mxu0 %v1898
        %2887 = vmatprep.subr.bf16.mxu0 %v1903
        %2888 = vmatpush1.bf16.msra.mxu0 %v1902
        %2889 = vmatprep.subr.bf16.mxu0 %v1907
        %2890 = vmatpush1.bf16.msra.mxu0 %v1906
        %2891 = vmatprep.subr.bf16.mxu0 %v1911
        %2892 = vmatpush1.bf16.msra.mxu0 %v1910
        %2893 = vmatprep.mubr.bf16.mxu0 %v677
        %2894 = vmatmul.mubr.bf16.gmra.mrb[0].mxu0 %v676
        %v2895 = vpop.f32.mrb[0].mxu0
        %v2896 = vadd.f32 %v2783, %v2895
        %v2897 = vpop.f32.mrb[0].mxu0
        %v2898 = vadd.f32 %v2785, %v2897
        %v2899 = vpop.f32.mrb[0].mxu0
        %v2900 = vadd.f32 %v2787, %v2899
        %v2901 = vpop.f32.mrb[0].mxu0
        %v2902 = vadd.f32 %v2789, %v2901
        %2903 = vmatprep.mubr.bf16.mxu0 %v685
        %2904 = vmatmul.mubr.bf16.gmra.mrb[0].mxu0 %v684
        %v2905 = vpop.f32.mrb[0].mxu0
        %v2906 = vadd.f32 %v2793, %v2905
        %v2907 = vpop.f32.mrb[0].mxu0
        %v2908 = vadd.f32 %v2795, %v2907
        %v2909 = vpop.f32.mrb[0].mxu0
        %v2910 = vadd.f32 %v2797, %v2909
        %v2911 = vpop.f32.mrb[0].mxu0
        %v2912 = vadd.f32 %v2799, %v2911
        %2913 = vmatprep.mubr.bf16.mxu0 %v693
        %2914 = vmatmul.mubr.bf16.gmra.mrb[0].mxu0 %v692
        %v2915 = vpop.f32.mrb[0].mxu0
        %v2916 = vadd.f32 %v2803, %v2915
        %v2917 = vpop.f32.mrb[0].mxu0
        %v2918 = vadd.f32 %v2805, %v2917
        %v2919 = vpop.f32.mrb[0].mxu0
        %v2920 = vadd.f32 %v2807, %v2919
        %v2921 = vpop.f32.mrb[0].mxu0
        %v2922 = vadd.f32 %v2809, %v2921
        %2923 = vmatprep.mubr.bf16.mxu0 %v701
        %2924 = vmatmul.mubr.bf16.gmra.mrb[0].mxu0 %v700
        %v2925 = vpop.f32.mrb[0].mxu0
        %v2926 = vadd.f32 %v2813, %v2925
        %v2927 = vpop.f32.mrb[0].mxu0
        %v2928 = vadd.f32 %v2815, %v2927
        %v2929 = vpop.f32.mrb[0].mxu0
        %v2930 = vadd.f32 %v2817, %v2929
        %v2931 = vpop.f32.mrb[0].mxu0
        %v2932 = vadd.f32 %v2819, %v2931
        %2933 = vmatprep.mubr.bf16.mxu0 %v709
        %2934 = vmatmul.mubr.bf16.gmra.mrb[0].mxu0 %v708
        %v2935 = vpop.f32.mrb[0].mxu0
        %v2936 = vadd.f32 %v2823, %v2935
        %v2937 = vpop.f32.mrb[0].mxu0
        %v2938 = vadd.f32 %v2825, %v2937
        %v2939 = vpop.f32.mrb[0].mxu0
        %v2940 = vadd.f32 %v2827, %v2939
        %v2941 = vpop.f32.mrb[0].mxu0
        %v2942 = vadd.f32 %v2829, %v2941
        %2943 = vmatprep.mubr.bf16.mxu0 %v717
        %2944 = vmatmul.mubr.bf16.gmra.mrb[0].mxu0 %v716
        %v2945 = vpop.f32.mrb[0].mxu0
        %v2946 = vadd.f32 %v2833, %v2945
        %v2947 = vpop.f32.mrb[0].mxu0
        %v2948 = vadd.f32 %v2835, %v2947
        %v2949 = vpop.f32.mrb[0].mxu0
        %v2950 = vadd.f32 %v2837, %v2949
        %v2951 = vpop.f32.mrb[0].mxu0
        %v2952 = vadd.f32 %v2839, %v2951
        %2953 = vmatprep.mubr.bf16.mxu0 %v725
        %2954 = vmatmul.mubr.bf16.gmra.mrb[0].mxu0 %v724
        %v2955 = vpop.f32.mrb[0].mxu0
        %v2956 = vadd.f32 %v2843, %v2955
        %v2957 = vpop.f32.mrb[0].mxu0
        %v2958 = vadd.f32 %v2845, %v2957
        %v2959 = vpop.f32.mrb[0].mxu0
        %v2960 = vadd.f32 %v2847, %v2959
        %v2961 = vpop.f32.mrb[0].mxu0
        %v2962 = vadd.f32 %v2849, %v2961
        %2963 = vmatprep.mubr.bf16.mxu0 %v733
        %2964 = vmatmul.mubr.bf16.gmra.mrb[0].mxu0 %v732
        %v2965 = vpop.f32.mrb[0].mxu0
        %v2966 = vadd.f32 %v2853, %v2965
        %v2967 = vpop.f32.mrb[0].mxu0
        %v2968 = vadd.f32 %v2855, %v2967
        %v2969 = vpop.f32.mrb[0].mxu0
        %v2970 = vadd.f32 %v2857, %v2969
        %v2971 = vpop.f32.mrb[0].mxu0
        %v2972 = vadd.f32 %v2859, %v2971
        %2973 = vdwg.mxu0
        %2974 = vmatprep.subr.bf16.mxu0 %v1915
        %2975 = vmatpush1.bf16.msra.mxu0 %v1914
        %2976 = vmatprep.subr.bf16.mxu0 %v1919
        %2977 = vmatpush1.bf16.msra.mxu0 %v1918
        %2978 = vmatprep.subr.bf16.mxu0 %v1923
        %2979 = vmatpush1.bf16.msra.mxu0 %v1922
        %2980 = vmatprep.subr.bf16.mxu0 %v1927
        %2981 = vmatpush1.bf16.msra.mxu0 %v1926
        %2982 = vmatprep.subr.bf16.mxu0 %v1931
        %2983 = vmatpush1.bf16.msra.mxu0 %v1930
        %2984 = vmatprep.subr.bf16.mxu0 %v1935
        %2985 = vmatpush1.bf16.msra.mxu0 %v1934
        %2986 = vmatprep.subr.bf16.mxu0 %v1939
        %2987 = vmatpush1.bf16.msra.mxu0 %v1938
        %2988 = vmatprep.subr.bf16.mxu0 %v1943
        %2989 = vmatpush1.bf16.msra.mxu0 %v1942
        %2990 = vmatprep.subr.bf16.mxu0 %v1947
        %2991 = vmatpush1.bf16.msra.mxu0 %v1946
        %2992 = vmatprep.subr.bf16.mxu0 %v1951
        %2993 = vmatpush1.bf16.msra.mxu0 %v1950
        %2994 = vmatprep.subr.bf16.mxu0 %v1955
        %2995 = vmatpush1.bf16.msra.mxu0 %v1954
        %2996 = vmatprep.subr.bf16.mxu0 %v1959
        %2997 = vmatpush1.bf16.msra.mxu0 %v1958
        %2998 = vmatprep.subr.bf16.mxu0 %v1963
        %2999 = vmatpush1.bf16.msra.mxu0 %v1962
        %3000 = vmatprep.subr.bf16.mxu0 %v1967
        %3001 = vmatpush1.bf16.msra.mxu0 %v1966
        %3002 = vmatprep.subr.bf16.mxu0 %v1971
        %3003 = vmatpush1.bf16.msra.mxu0 %v1970
        %3004 = vmatprep.subr.bf16.mxu0 %v1975
        %3005 = vmatpush1.bf16.msra.mxu0 %v1974
        %3006 = vmatprep.mubr.bf16.mxu0 %v679
        %3007 = vmatmul.mubr.bf16.gmra.mrb[0].mxu0 %v678
        %v3008 = vpop.f32.mrb[0].mxu0
        %v3009 = vadd.f32 %v2896, %v3008
        %v3010 = vpop.f32.mrb[0].mxu0
        %v3011 = vadd.f32 %v2898, %v3010
        %v3012 = vpop.f32.mrb[0].mxu0
        %v3013 = vadd.f32 %v2900, %v3012
        %v3014 = vpop.f32.mrb[0].mxu0
        %v3015 = vadd.f32 %v2902, %v3014
        %3016 = vmatprep.mubr.bf16.mxu0 %v687
        %3017 = vmatmul.mubr.bf16.gmra.mrb[0].mxu0 %v686
        %v3018 = vpop.f32.mrb[0].mxu0
        %v3019 = vadd.f32 %v2906, %v3018
        %v3020 = vpop.f32.mrb[0].mxu0
        %v3021 = vadd.f32 %v2908, %v3020
        %v3022 = vpop.f32.mrb[0].mxu0
        %v3023 = vadd.f32 %v2910, %v3022
        %v3024 = vpop.f32.mrb[0].mxu0
        %v3025 = vadd.f32 %v2912, %v3024
        %3026 = vmatprep.mubr.bf16.mxu0 %v695
        %3027 = vmatmul.mubr.bf16.gmra.mrb[0].mxu0 %v694
        %v3028 = vpop.f32.mrb[0].mxu0
        %v3029 = vadd.f32 %v2916, %v3028
        %v3030 = vpop.f32.mrb[0].mxu0
        %v3031 = vadd.f32 %v2918, %v3030
        %v3032 = vpop.f32.mrb[0].mxu0
        %v3033 = vadd.f32 %v2920, %v3032
        %v3034 = vpop.f32.mrb[0].mxu0
        %v3035 = vadd.f32 %v2922, %v3034
        %3036 = vmatprep.mubr.bf16.mxu0 %v703
        %3037 = vmatmul.mubr.bf16.gmra.mrb[0].mxu0 %v702
        %v3038 = vpop.f32.mrb[0].mxu0
        %v3039 = vadd.f32 %v2926, %v3038
        %v3040 = vpop.f32.mrb[0].mxu0
        %v3041 = vadd.f32 %v2928, %v3040
        %v3042 = vpop.f32.mrb[0].mxu0
        %v3043 = vadd.f32 %v2930, %v3042
        %v3044 = vpop.f32.mrb[0].mxu0
        %v3045 = vadd.f32 %v2932, %v3044
        %3046 = vmatprep.mubr.bf16.mxu0 %v711
        %3047 = vmatmul.mubr.bf16.gmra.mrb[0].mxu0 %v710
        %v3048 = vpop.f32.mrb[0].mxu0
        %v3049 = vadd.f32 %v2936, %v3048
        %v3050 = vpop.f32.mrb[0].mxu0
        %v3051 = vadd.f32 %v2938, %v3050
        %v3052 = vpop.f32.mrb[0].mxu0
        %v3053 = vadd.f32 %v2940, %v3052
        %v3054 = vpop.f32.mrb[0].mxu0
        %v3055 = vadd.f32 %v2942, %v3054
        %3056 = vmatprep.mubr.bf16.mxu0 %v719
        %3057 = vmatmul.mubr.bf16.gmra.mrb[0].mxu0 %v718
        %v3058 = vpop.f32.mrb[0].mxu0
        %v3059 = vadd.f32 %v2946, %v3058
        %v3060 = vpop.f32.mrb[0].mxu0
        %v3061 = vadd.f32 %v2948, %v3060
        %v3062 = vpop.f32.mrb[0].mxu0
        %v3063 = vadd.f32 %v2950, %v3062
        %v3064 = vpop.f32.mrb[0].mxu0
        %v3065 = vadd.f32 %v2952, %v3064
        %3066 = vmatprep.mubr.bf16.mxu0 %v727
        %3067 = vmatmul.mubr.bf16.gmra.mrb[0].mxu0 %v726
        %v3068 = vpop.f32.mrb[0].mxu0
        %v3069 = vadd.f32 %v2956, %v3068
        %v3070 = vpop.f32.mrb[0].mxu0
        %v3071 = vadd.f32 %v2958, %v3070
        %v3072 = vpop.f32.mrb[0].mxu0
        %v3073 = vadd.f32 %v2960, %v3072
        %v3074 = vpop.f32.mrb[0].mxu0
        %v3075 = vadd.f32 %v2962, %v3074
        %3076 = vmatprep.mubr.bf16.mxu0 %v735
        %3077 = vmatmul.mubr.bf16.gmra.mrb[0].mxu0 %v734
        %v3078 = vpop.f32.mrb[0].mxu0
        %v3079 = vadd.f32 %v2966, %v3078
        %v3080 = vpop.f32.mrb[0].mxu0
        %v3081 = vadd.f32 %v2968, %v3080
        %v3082 = vpop.f32.mrb[0].mxu0
        %v3083 = vadd.f32 %v2970, %v3082
        %v3084 = vpop.f32.mrb[0].mxu0
        %v3085 = vadd.f32 %v2972, %v3084
        %3086 = vdwg.mxu0
        %3087 = vmatprep.subr.bf16.mxu0 %v1979
        %3088 = vmatpush1.bf16.msra.mxu0 %v1978
        %3089 = vmatprep.subr.bf16.mxu0 %v1983
        %3090 = vmatpush1.bf16.msra.mxu0 %v1982
        %3091 = vmatprep.subr.bf16.mxu0 %v1987
        %3092 = vmatpush1.bf16.msra.mxu0 %v1986
        %3093 = vmatprep.subr.bf16.mxu0 %v1991
        %3094 = vmatpush1.bf16.msra.mxu0 %v1990
        %3095 = vmatprep.subr.bf16.mxu0 %v1995
        %3096 = vmatpush1.bf16.msra.mxu0 %v1994
        %3097 = vmatprep.subr.bf16.mxu0 %v1999
        %3098 = vmatpush1.bf16.msra.mxu0 %v1998
        %3099 = vmatprep.subr.bf16.mxu0 %v2003
        %3100 = vmatpush1.bf16.msra.mxu0 %v2002
        %3101 = vmatprep.subr.bf16.mxu0 %v2007
        %3102 = vmatpush1.bf16.msra.mxu0 %v2006
        %3103 = vmatprep.subr.bf16.mxu0 %v2011
        %3104 = vmatpush1.bf16.msra.mxu0 %v2010
        %3105 = vmatprep.subr.bf16.mxu0 %v2015
        %3106 = vmatpush1.bf16.msra.mxu0 %v2014
        %3107 = vmatprep.subr.bf16.mxu0 %v2019
        %3108 = vmatpush1.bf16.msra.mxu0 %v2018
        %3109 = vmatprep.subr.bf16.mxu0 %v2023
        %3110 = vmatpush1.bf16.msra.mxu0 %v2022
        %3111 = vmatprep.subr.bf16.mxu0 %v2027
        %3112 = vmatpush1.bf16.msra.mxu0 %v2026
        %3113 = vmatprep.subr.bf16.mxu0 %v2031
        %3114 = vmatpush1.bf16.msra.mxu0 %v2030
        %3115 = vmatprep.subr.bf16.mxu0 %v2035
        %3116 = vmatpush1.bf16.msra.mxu0 %v2034
        %3117 = vmatprep.subr.bf16.mxu0 %v2039
        %3118 = vmatpush1.bf16.msra.mxu0 %v2038
        %3119 = vmatprep.mubr.bf16.mxu0 %v681
        %3120 = vmatmul.mubr.bf16.gmra.mrb[0].mxu0 %v680
        %v3121 = vpop.f32.mrb[0].mxu0
        %v3122 = vadd.f32 %v3009, %v3121
        %v3123 = vpop.f32.mrb[0].mxu0
        %v3124 = vadd.f32 %v3011, %v3123
        %v3125 = vpop.f32.mrb[0].mxu0
        %v3126 = vadd.f32 %v3013, %v3125
        %v3127 = vpop.f32.mrb[0].mxu0
        %v3128 = vadd.f32 %v3015, %v3127
        %3129 = vmatprep.mubr.bf16.mxu0 %v689
        %3130 = vmatmul.mubr.bf16.gmra.mrb[0].mxu0 %v688
        %v3131 = vpop.f32.mrb[0].mxu0
        %v3132 = vadd.f32 %v3019, %v3131
        %v3133 = vpop.f32.mrb[0].mxu0
        %v3134 = vadd.f32 %v3021, %v3133
        %v3135 = vpop.f32.mrb[0].mxu0
        %v3136 = vadd.f32 %v3023, %v3135
        %v3137 = vpop.f32.mrb[0].mxu0
        %v3138 = vadd.f32 %v3025, %v3137
        %3139 = vmatprep.mubr.bf16.mxu0 %v697
        %3140 = vmatmul.mubr.bf16.gmra.mrb[0].mxu0 %v696
        %v3141 = vpop.f32.mrb[0].mxu0
        %v3142 = vadd.f32 %v3029, %v3141
        %v3143 = vpop.f32.mrb[0].mxu0
        %v3144 = vadd.f32 %v3031, %v3143
        %v3145 = vpop.f32.mrb[0].mxu0
        %v3146 = vadd.f32 %v3033, %v3145
        %v3147 = vpop.f32.mrb[0].mxu0
        %v3148 = vadd.f32 %v3035, %v3147
        %3149 = vmatprep.mubr.bf16.mxu0 %v705
        %3150 = vmatmul.mubr.bf16.gmra.mrb[0].mxu0 %v704
        %v3151 = vpop.f32.mrb[0].mxu0
        %v3152 = vadd.f32 %v3039, %v3151
        %v3153 = vpop.f32.mrb[0].mxu0
        %v3154 = vadd.f32 %v3041, %v3153
        %v3155 = vpop.f32.mrb[0].mxu0
        %v3156 = vadd.f32 %v3043, %v3155
        %v3157 = vpop.f32.mrb[0].mxu0
        %v3158 = vadd.f32 %v3045, %v3157
        %3159 = vmatprep.mubr.bf16.mxu0 %v713
        %3160 = vmatmul.mubr.bf16.gmra.mrb[0].mxu0 %v712
        %v3161 = vpop.f32.mrb[0].mxu0
        %v3162 = vadd.f32 %v3049, %v3161
        %v3163 = vpop.f32.mrb[0].mxu0
        %v3164 = vadd.f32 %v3051, %v3163
        %v3165 = vpop.f32.mrb[0].mxu0
        %v3166 = vadd.f32 %v3053, %v3165
        %v3167 = vpop.f32.mrb[0].mxu0
        %v3168 = vadd.f32 %v3055, %v3167
        %3169 = vmatprep.mubr.bf16.mxu0 %v721
        %3170 = vmatmul.mubr.bf16.gmra.mrb[0].mxu0 %v720
        %v3171 = vpop.f32.mrb[0].mxu0
        %v3172 = vadd.f32 %v3059, %v3171
        %v3173 = vpop.f32.mrb[0].mxu0
        %v3174 = vadd.f32 %v3061, %v3173
        %v3175 = vpop.f32.mrb[0].mxu0
        %v3176 = vadd.f32 %v3063, %v3175
        %v3177 = vpop.f32.mrb[0].mxu0
        %v3178 = vadd.f32 %v3065, %v3177
        %3179 = vmatprep.mubr.bf16.mxu0 %v729
        %3180 = vmatmul.mubr.bf16.gmra.mrb[0].mxu0 %v728
        %v3181 = vpop.f32.mrb[0].mxu0
        %v3182 = vadd.f32 %v3069, %v3181
        %v3183 = vpop.f32.mrb[0].mxu0
        %v3184 = vadd.f32 %v3071, %v3183
        %v3185 = vpop.f32.mrb[0].mxu0
        %v3186 = vadd.f32 %v3073, %v3185
        %v3187 = vpop.f32.mrb[0].mxu0
        %v3188 = vadd.f32 %v3075, %v3187
        %3189 = vmatprep.mubr.bf16.mxu0 %v737
        %3190 = vmatmul.mubr.bf16.gmra.mrb[0].mxu0 %v736
        %v3191 = vpop.f32.mrb[0].mxu0
        %v3192 = vadd.f32 %v3079, %v3191
        %v3193 = vpop.f32.mrb[0].mxu0
        %v3194 = vadd.f32 %v3081, %v3193
        %v3195 = vpop.f32.mrb[0].mxu0
        %v3196 = vadd.f32 %v3083, %v3195
        %v3197 = vpop.f32.mrb[0].mxu0
        %v3198 = vadd.f32 %v3085, %v3197
        %3199 = vdwg.mxu0
        %v3200 = vmax.f32 %v2670, 0.0
        %v3201 = vmax.f32 %v2672, 0.0
        %v3202 = vmax.f32 %v3122, 0.0
        %v3203 = vmax.f32 %v3124, 0.0
        %v3204 = vmax.f32 %v2674, 0.0
        %v3205 = vmax.f32 %v2676, 0.0
        %v3206 = vmax.f32 %v3126, 0.0
        %v3207 = vmax.f32 %v3128, 0.0
        %v3208 = vmax.f32 %v2680, 0.0
        %v3209 = vmax.f32 %v2682, 0.0
        %v3210 = vmax.f32 %v3132, 0.0
        %v3211 = vmax.f32 %v3134, 0.0
        %v3212 = vmax.f32 %v2684, 0.0
        %v3213 = vmax.f32 %v2686, 0.0
        %v3214 = vmax.f32 %v3136, 0.0
        %v3215 = vmax.f32 %v3138, 0.0
        %v3216 = vmax.f32 %v2690, 0.0
        %v3217 = vmax.f32 %v2692, 0.0
        %v3218 = vmax.f32 %v3142, 0.0
        %v3219 = vmax.f32 %v3144, 0.0
        %v3220 = vmax.f32 %v2694, 0.0
        %v3221 = vmax.f32 %v2696, 0.0
        %v3222 = vmax.f32 %v3146, 0.0
        %v3223 = vmax.f32 %v3148, 0.0
        %v3224 = vmax.f32 %v2700, 0.0
        %v3225 = vmax.f32 %v2702, 0.0
        %v3226 = vmax.f32 %v3152, 0.0
        %v3227 = vmax.f32 %v3154, 0.0
        %v3228 = vmax.f32 %v2704, 0.0
        %v3229 = vmax.f32 %v2706, 0.0
        %v3230 = vmax.f32 %v3156, 0.0
        %v3231 = vmax.f32 %v3158, 0.0
        %v3232 = vmax.f32 %v2710, 0.0
        %v3233 = vmax.f32 %v2712, 0.0
        %v3234 = vmax.f32 %v3162, 0.0
        %v3235 = vmax.f32 %v3164, 0.0
        %v3236 = vmax.f32 %v2714, 0.0
        %v3237 = vmax.f32 %v2716, 0.0
        %v3238 = vmax.f32 %v3166, 0.0
        %v3239 = vmax.f32 %v3168, 0.0
        %v3240 = vmax.f32 %v2720, 0.0
        %v3241 = vmax.f32 %v2722, 0.0
        %v3242 = vmax.f32 %v3172, 0.0
        %v3243 = vmax.f32 %v3174, 0.0
        %v3244 = vmax.f32 %v2724, 0.0
        %v3245 = vmax.f32 %v2726, 0.0
        %v3246 = vmax.f32 %v3176, 0.0
        %v3247 = vmax.f32 %v3178, 0.0
        %v3248 = vmax.f32 %v2730, 0.0
        %v3249 = vmax.f32 %v2732, 0.0
        %v3250 = vmax.f32 %v3182, 0.0
        %v3251 = vmax.f32 %v3184, 0.0
        %v3252 = vmax.f32 %v2734, 0.0
        %v3253 = vmax.f32 %v2736, 0.0
        %v3254 = vmax.f32 %v3186, 0.0
        %v3255 = vmax.f32 %v3188, 0.0
        %v3256 = vmax.f32 %v2740, 0.0
        %v3257 = vmax.f32 %v2742, 0.0
        %v3258 = vmax.f32 %v3192, 0.0
        %v3259 = vmax.f32 %v3194, 0.0
        %v3260 = vmax.f32 %v2744, 0.0
        %v3261 = vmax.f32 %v2746, 0.0
        %v3262 = vmax.f32 %v3196, 0.0
        %v3263 = vmax.f32 %v3198, 0.0
        %v3264 = vpack.c.bf16 %v3204, %v3200
        %v3265 = vpack.c.bf16 %v3205, %v3201
        %v3266 = vpack.c.bf16 %v3206, %v3202
        %v3267 = vpack.c.bf16 %v3207, %v3203
        %v3268 = vpack.c.bf16 %v3212, %v3208
        %v3269 = vpack.c.bf16 %v3213, %v3209
        %v3270 = vpack.c.bf16 %v3214, %v3210
        %v3271 = vpack.c.bf16 %v3215, %v3211
        %v3272 = vpack.c.bf16 %v3220, %v3216
        %v3273 = vpack.c.bf16 %v3221, %v3217
        %v3274 = vpack.c.bf16 %v3222, %v3218
        %v3275 = vpack.c.bf16 %v3223, %v3219
        %v3276 = vpack.c.bf16 %v3228, %v3224
        %v3277 = vpack.c.bf16 %v3229, %v3225
        %v3278 = vpack.c.bf16 %v3230, %v3226
        %v3279 = vpack.c.bf16 %v3231, %v3227
        %v3280 = vpack.c.bf16 %v3236, %v3232
        %v3281 = vpack.c.bf16 %v3237, %v3233
        %v3282 = vpack.c.bf16 %v3238, %v3234
        %v3283 = vpack.c.bf16 %v3239, %v3235
        %v3284 = vpack.c.bf16 %v3244, %v3240
        %v3285 = vpack.c.bf16 %v3245, %v3241
        %v3286 = vpack.c.bf16 %v3246, %v3242
        %v3287 = vpack.c.bf16 %v3247, %v3243
        %v3288 = vpack.c.bf16 %v3252, %v3248
        %v3289 = vpack.c.bf16 %v3253, %v3249
        %v3290 = vpack.c.bf16 %v3254, %v3250
        %v3291 = vpack.c.bf16 %v3255, %v3251
        %v3292 = vpack.c.bf16 %v3260, %v3256
        %v3293 = vpack.c.bf16 %v3261, %v3257
        %v3294 = vpack.c.bf16 %v3262, %v3258
        %v3295 = vpack.c.bf16 %v3263, %v3259
        %v3296 = vld [vmem:[#allocation7] sm:$0xff]
        %v3297 = vld [vmem:[#allocation7 + $0x8] sm:$0xff]
        %v3298 = vld [vmem:[#allocation7 + $0x10] sm:$0xff]
        %v3299 = vld [vmem:[#allocation7 + $0x18] sm:$0xff]
        %v3300 = vld [vmem:[#allocation7 + $0x20] sm:$0xff]
        %v3301 = vld [vmem:[#allocation7 + $0x28] sm:$0xff]
        %v3302 = vld [vmem:[#allocation7 + $0x30] sm:$0xff]
        %v3303 = vld [vmem:[#allocation7 + $0x38] sm:$0xff]
        %v3304 = vld [vmem:[#allocation7 + $0x40] sm:$0xff]
        %v3305 = vld [vmem:[#allocation7 + $0x48] sm:$0xff]
        %v3306 = vld [vmem:[#allocation7 + $0x50] sm:$0xff]
        %v3307 = vld [vmem:[#allocation7 + $0x58] sm:$0xff]
        %v3308 = vld [vmem:[#allocation7 + $0x60] sm:$0xff]
        %v3309 = vld [vmem:[#allocation7 + $0x68] sm:$0xff]
        %v3310 = vld [vmem:[#allocation7 + $0x70] sm:$0xff]
        %v3311 = vld [vmem:[#allocation7 + $0x78] sm:$0xff]
        %v3312 = vld [vmem:[#allocation7 + $0x80] sm:$0xff]
        %v3313 = vld [vmem:[#allocation7 + $0x88] sm:$0xff]
        %v3314 = vld [vmem:[#allocation7 + $0x90] sm:$0xff]
        %v3315 = vld [vmem:[#allocation7 + $0x98] sm:$0xff]
        %v3316 = vld [vmem:[#allocation7 + $0xa0] sm:$0xff]
        %v3317 = vld [vmem:[#allocation7 + $0xa8] sm:$0xff]
        %v3318 = vld [vmem:[#allocation7 + $0xb0] sm:$0xff]
        %v3319 = vld [vmem:[#allocation7 + $0xb8] sm:$0xff]
        %v3320 = vld [vmem:[#allocation7 + $0xc0] sm:$0xff]
        %v3321 = vld [vmem:[#allocation7 + $0xc8] sm:$0xff]
        %v3322 = vld [vmem:[#allocation7 + $0xd0] sm:$0xff]
        %v3323 = vld [vmem:[#allocation7 + $0xd8] sm:$0xff]
        %v3324 = vld [vmem:[#allocation7 + $0xe0] sm:$0xff]
        %v3325 = vld [vmem:[#allocation7 + $0xe8] sm:$0xff]
        %v3326 = vld [vmem:[#allocation7 + $0xf0] sm:$0xff]
        %v3327 = vld [vmem:[#allocation7 + $0xf8] sm:$0xff]
        %v3328 = vld [vmem:[#allocation7 + $0x100] sm:$0xff]
        %v3329 = vld [vmem:[#allocation7 + $0x108] sm:$0xff]
        %v3330 = vld [vmem:[#allocation7 + $0x110] sm:$0xff]
        %v3331 = vld [vmem:[#allocation7 + $0x118] sm:$0xff]
        %v3332 = vld [vmem:[#allocation7 + $0x120] sm:$0xff]
        %v3333 = vld [vmem:[#allocation7 + $0x128] sm:$0xff]
        %v3334 = vld [vmem:[#allocation7 + $0x130] sm:$0xff]
        %v3335 = vld [vmem:[#allocation7 + $0x138] sm:$0xff]
        %v3336 = vld [vmem:[#allocation7 + $0x140] sm:$0xff]
        %v3337 = vld [vmem:[#allocation7 + $0x148] sm:$0xff]
        %v3338 = vld [vmem:[#allocation7 + $0x150] sm:$0xff]
        %v3339 = vld [vmem:[#allocation7 + $0x158] sm:$0xff]
        %v3340 = vld [vmem:[#allocation7 + $0x160] sm:$0xff]
        %v3341 = vld [vmem:[#allocation7 + $0x168] sm:$0xff]
        %v3342 = vld [vmem:[#allocation7 + $0x170] sm:$0xff]
        %v3343 = vld [vmem:[#allocation7 + $0x178] sm:$0xff]
        %v3344 = vld [vmem:[#allocation7 + $0x180] sm:$0xff]
        %v3345 = vld [vmem:[#allocation7 + $0x188] sm:$0xff]
        %v3346 = vld [vmem:[#allocation7 + $0x190] sm:$0xff]
        %v3347 = vld [vmem:[#allocation7 + $0x198] sm:$0xff]
        %v3348 = vld [vmem:[#allocation7 + $0x1a0] sm:$0xff]
        %v3349 = vld [vmem:[#allocation7 + $0x1a8] sm:$0xff]
        %v3350 = vld [vmem:[#allocation7 + $0x1b0] sm:$0xff]
        %v3351 = vld [vmem:[#allocation7 + $0x1b8] sm:$0xff]
        %v3352 = vld [vmem:[#allocation7 + $0x1c0] sm:$0xff]
        %v3353 = vld [vmem:[#allocation7 + $0x1c8] sm:$0xff]
        %v3354 = vld [vmem:[#allocation7 + $0x1d0] sm:$0xff]
        %v3355 = vld [vmem:[#allocation7 + $0x1d8] sm:$0xff]
        %v3356 = vld [vmem:[#allocation7 + $0x1e0] sm:$0xff]
        %v3357 = vld [vmem:[#allocation7 + $0x1e8] sm:$0xff]
        %v3358 = vld [vmem:[#allocation7 + $0x1f0] sm:$0xff]
        %v3359 = vld [vmem:[#allocation7 + $0x1f8] sm:$0xff]
        %v3360 = vld [vmem:[#allocation9] sm:$0x3]
        %v3362 = vlaneseq
        %v3363 = vshrl.u32 %v3362, 7
        %v3364 = vsub.s32 0, %v3363
        %v3365 = vrot.slane %v3360, %v3364
        %v3366 = vlaneseq
        %v3367 = vshrl.u32 %v3366, 7
        %v3368 = vsub.s32 1, %v3367
        %v3369 = vrot.slane %v3360, %v3368
        %v3436 = vunpack.c.l.b16 %v3296
        %v3437 = vunpack.c.h.b16 %v3296
        %v3438 = vunpack.c.l.b16 %v3297
        %v3439 = vunpack.c.h.b16 %v3297
        %v3440 = vunpack.c.l.b16 %v3298
        %v3441 = vunpack.c.h.b16 %v3298
        %v3442 = vunpack.c.l.b16 %v3299
        %v3443 = vunpack.c.h.b16 %v3299
        %v3444 = vunpack.c.l.b16 %v3300
        %v3445 = vunpack.c.h.b16 %v3300
        %v3446 = vunpack.c.l.b16 %v3301
        %v3447 = vunpack.c.h.b16 %v3301
        %v3448 = vunpack.c.l.b16 %v3302
        %v3449 = vunpack.c.h.b16 %v3302
        %v3450 = vunpack.c.l.b16 %v3303
        %v3451 = vunpack.c.h.b16 %v3303
        %v3452 = vunpack.c.l.b16 %v3304
        %v3453 = vunpack.c.h.b16 %v3304
        %v3454 = vunpack.c.l.b16 %v3305
        %v3455 = vunpack.c.h.b16 %v3305
        %v3456 = vunpack.c.l.b16 %v3306
        %v3457 = vunpack.c.h.b16 %v3306
        %v3458 = vunpack.c.l.b16 %v3307
        %v3459 = vunpack.c.h.b16 %v3307
        %v3460 = vunpack.c.l.b16 %v3308
        %v3461 = vunpack.c.h.b16 %v3308
        %v3462 = vunpack.c.l.b16 %v3309
        %v3463 = vunpack.c.h.b16 %v3309
        %v3464 = vunpack.c.l.b16 %v3310
        %v3465 = vunpack.c.h.b16 %v3310
        %v3466 = vunpack.c.l.b16 %v3311
        %v3467 = vunpack.c.h.b16 %v3311
        %v3468 = vunpack.c.l.b16 %v3312
        %v3469 = vunpack.c.h.b16 %v3312
        %v3470 = vunpack.c.l.b16 %v3313
        %v3471 = vunpack.c.h.b16 %v3313
        %v3472 = vunpack.c.l.b16 %v3314
        %v3473 = vunpack.c.h.b16 %v3314
        %v3474 = vunpack.c.l.b16 %v3315
        %v3475 = vunpack.c.h.b16 %v3315
        %v3476 = vunpack.c.l.b16 %v3316
        %v3477 = vunpack.c.h.b16 %v3316
        %v3478 = vunpack.c.l.b16 %v3317
        %v3479 = vunpack.c.h.b16 %v3317
        %v3480 = vunpack.c.l.b16 %v3318
        %v3481 = vunpack.c.h.b16 %v3318
        %v3482 = vunpack.c.l.b16 %v3319
        %v3483 = vunpack.c.h.b16 %v3319
        %v3484 = vunpack.c.l.b16 %v3320
        %v3485 = vunpack.c.h.b16 %v3320
        %v3486 = vunpack.c.l.b16 %v3321
        %v3487 = vunpack.c.h.b16 %v3321
        %v3488 = vunpack.c.l.b16 %v3322
        %v3489 = vunpack.c.h.b16 %v3322
        %v3490 = vunpack.c.l.b16 %v3323
        %v3491 = vunpack.c.h.b16 %v3323
        %v3492 = vunpack.c.l.b16 %v3324
        %v3493 = vunpack.c.h.b16 %v3324
        %v3494 = vunpack.c.l.b16 %v3325
        %v3495 = vunpack.c.h.b16 %v3325
        %v3496 = vunpack.c.l.b16 %v3326
        %v3497 = vunpack.c.h.b16 %v3326
        %v3498 = vunpack.c.l.b16 %v3327
        %v3499 = vunpack.c.h.b16 %v3327
        %v3500 = vunpack.c.l.b16 %v3328
        %v3501 = vunpack.c.h.b16 %v3328
        %v3502 = vunpack.c.l.b16 %v3329
        %v3503 = vunpack.c.h.b16 %v3329
        %v3504 = vunpack.c.l.b16 %v3330
        %v3505 = vunpack.c.h.b16 %v3330
        %v3506 = vunpack.c.l.b16 %v3331
        %v3507 = vunpack.c.h.b16 %v3331
        %v3508 = vunpack.c.l.b16 %v3332
        %v3509 = vunpack.c.h.b16 %v3332
        %v3510 = vunpack.c.l.b16 %v3333
        %v3511 = vunpack.c.h.b16 %v3333
        %v3512 = vunpack.c.l.b16 %v3334
        %v3513 = vunpack.c.h.b16 %v3334
        %v3514 = vunpack.c.l.b16 %v3335
        %v3515 = vunpack.c.h.b16 %v3335
        %v3516 = vunpack.c.l.b16 %v3336
        %v3517 = vunpack.c.h.b16 %v3336
        %v3518 = vunpack.c.l.b16 %v3337
        %v3519 = vunpack.c.h.b16 %v3337
        %v3520 = vunpack.c.l.b16 %v3338
        %v3521 = vunpack.c.h.b16 %v3338
        %v3522 = vunpack.c.l.b16 %v3339
        %v3523 = vunpack.c.h.b16 %v3339
        %v3524 = vunpack.c.l.b16 %v3340
        %v3525 = vunpack.c.h.b16 %v3340
        %v3526 = vunpack.c.l.b16 %v3341
        %v3527 = vunpack.c.h.b16 %v3341
        %v3528 = vunpack.c.l.b16 %v3342
        %v3529 = vunpack.c.h.b16 %v3342
        %v3530 = vunpack.c.l.b16 %v3343
        %v3531 = vunpack.c.h.b16 %v3343
        %v3532 = vunpack.c.l.b16 %v3344
        %v3533 = vunpack.c.h.b16 %v3344
        %v3534 = vunpack.c.l.b16 %v3345
        %v3535 = vunpack.c.h.b16 %v3345
        %v3536 = vunpack.c.l.b16 %v3346
        %v3537 = vunpack.c.h.b16 %v3346
        %v3538 = vunpack.c.l.b16 %v3347
        %v3539 = vunpack.c.h.b16 %v3347
        %v3540 = vunpack.c.l.b16 %v3348
        %v3541 = vunpack.c.h.b16 %v3348
        %v3542 = vunpack.c.l.b16 %v3349
        %v3543 = vunpack.c.h.b16 %v3349
        %v3544 = vunpack.c.l.b16 %v3350
        %v3545 = vunpack.c.h.b16 %v3350
        %v3546 = vunpack.c.l.b16 %v3351
        %v3547 = vunpack.c.h.b16 %v3351
        %v3548 = vunpack.c.l.b16 %v3352
        %v3549 = vunpack.c.h.b16 %v3352
        %v3550 = vunpack.c.l.b16 %v3353
        %v3551 = vunpack.c.h.b16 %v3353
        %v3552 = vunpack.c.l.b16 %v3354
        %v3553 = vunpack.c.h.b16 %v3354
        %v3554 = vunpack.c.l.b16 %v3355
        %v3555 = vunpack.c.h.b16 %v3355
        %v3556 = vunpack.c.l.b16 %v3356
        %v3557 = vunpack.c.h.b16 %v3356
        %v3558 = vunpack.c.l.b16 %v3357
        %v3559 = vunpack.c.h.b16 %v3357
        %v3560 = vunpack.c.l.b16 %v3358
        %v3561 = vunpack.c.h.b16 %v3358
        %v3562 = vunpack.c.l.b16 %v3359
        %v3563 = vunpack.c.h.b16 %v3359
        %v3564 = vpack.c.b16 %v3438, %v3436
        %v3565 = vpack.c.b16 %v3439, %v3437
        %v3566 = vpack.c.b16 %v3442, %v3440
        %v3567 = vpack.c.b16 %v3443, %v3441
        %v3568 = vpack.c.b16 %v3446, %v3444
        %v3569 = vpack.c.b16 %v3447, %v3445
        %v3570 = vpack.c.b16 %v3450, %v3448
        %v3571 = vpack.c.b16 %v3451, %v3449
        %v3572 = vpack.c.b16 %v3454, %v3452
        %v3573 = vpack.c.b16 %v3455, %v3453
        %v3574 = vpack.c.b16 %v3458, %v3456
        %v3575 = vpack.c.b16 %v3459, %v3457
        %v3576 = vpack.c.b16 %v3462, %v3460
        %v3577 = vpack.c.b16 %v3463, %v3461
        %v3578 = vpack.c.b16 %v3466, %v3464
        %v3579 = vpack.c.b16 %v3467, %v3465
        %v3580 = vpack.c.b16 %v3470, %v3468
        %v3581 = vpack.c.b16 %v3471, %v3469
        %v3582 = vpack.c.b16 %v3474, %v3472
        %v3583 = vpack.c.b16 %v3475, %v3473
        %v3584 = vpack.c.b16 %v3478, %v3476
        %v3585 = vpack.c.b16 %v3479, %v3477
        %v3586 = vpack.c.b16 %v3482, %v3480
        %v3587 = vpack.c.b16 %v3483, %v3481
        %v3588 = vpack.c.b16 %v3486, %v3484
        %v3589 = vpack.c.b16 %v3487, %v3485
        %v3590 = vpack.c.b16 %v3490, %v3488
        %v3591 = vpack.c.b16 %v3491, %v3489
        %v3592 = vpack.c.b16 %v3494, %v3492
        %v3593 = vpack.c.b16 %v3495, %v3493
        %v3594 = vpack.c.b16 %v3498, %v3496
        %v3595 = vpack.c.b16 %v3499, %v3497
        %v3596 = vpack.c.b16 %v3502, %v3500
        %v3597 = vpack.c.b16 %v3503, %v3501
        %v3598 = vpack.c.b16 %v3506, %v3504
        %v3599 = vpack.c.b16 %v3507, %v3505
        %v3600 = vpack.c.b16 %v3510, %v3508
        %v3601 = vpack.c.b16 %v3511, %v3509
        %v3602 = vpack.c.b16 %v3514, %v3512
        %v3603 = vpack.c.b16 %v3515, %v3513
        %v3604 = vpack.c.b16 %v3518, %v3516
        %v3605 = vpack.c.b16 %v3519, %v3517
        %v3606 = vpack.c.b16 %v3522, %v3520
        %v3607 = vpack.c.b16 %v3523, %v3521
        %v3608 = vpack.c.b16 %v3526, %v3524
        %v3609 = vpack.c.b16 %v3527, %v3525
        %v3610 = vpack.c.b16 %v3530, %v3528
        %v3611 = vpack.c.b16 %v3531, %v3529
        %v3612 = vpack.c.b16 %v3534, %v3532
        %v3613 = vpack.c.b16 %v3535, %v3533
        %v3614 = vpack.c.b16 %v3538, %v3536
        %v3615 = vpack.c.b16 %v3539, %v3537
        %v3616 = vpack.c.b16 %v3542, %v3540
        %v3617 = vpack.c.b16 %v3543, %v3541
        %v3618 = vpack.c.b16 %v3546, %v3544
        %v3619 = vpack.c.b16 %v3547, %v3545
        %v3620 = vpack.c.b16 %v3550, %v3548
        %v3621 = vpack.c.b16 %v3551, %v3549
        %v3622 = vpack.c.b16 %v3554, %v3552
        %v3623 = vpack.c.b16 %v3555, %v3553
        %v3624 = vpack.c.b16 %v3558, %v3556
        %v3625 = vpack.c.b16 %v3559, %v3557
        %v3626 = vpack.c.b16 %v3562, %v3560
        %v3627 = vpack.c.b16 %v3563, %v3561
        %3692 = vmatprep.subr.bf16.mxu0 %v3565
        %3693 = vmatpush1.bf16.msra.mxu0 %v3564
        %3694 = vmatprep.subr.bf16.mxu0 %v3567
        %3695 = vmatpush1.bf16.msra.mxu0 %v3566
        %3696 = vmatprep.subr.bf16.mxu0 %v3569
        %3697 = vmatpush1.bf16.msra.mxu0 %v3568
        %3698 = vmatprep.subr.bf16.mxu0 %v3571
        %3699 = vmatpush1.bf16.msra.mxu0 %v3570
        %3700 = vmatprep.subr.bf16.mxu0 %v3573
        %3701 = vmatpush1.bf16.msra.mxu0 %v3572
        %3702 = vmatprep.subr.bf16.mxu0 %v3575
        %3703 = vmatpush1.bf16.msra.mxu0 %v3574
        %3704 = vmatprep.subr.bf16.mxu0 %v3577
        %3705 = vmatpush1.bf16.msra.mxu0 %v3576
        %3706 = vmatprep.subr.bf16.mxu0 %v3579
        %3707 = vmatpush1.bf16.msra.mxu0 %v3578
        %3708 = vmatprep.subr.bf16.mxu0 %v3581
        %3709 = vmatpush1.bf16.msra.mxu0 %v3580
        %3710 = vmatprep.subr.bf16.mxu0 %v3583
        %3711 = vmatpush1.bf16.msra.mxu0 %v3582
        %3712 = vmatprep.subr.bf16.mxu0 %v3585
        %3713 = vmatpush1.bf16.msra.mxu0 %v3584
        %3714 = vmatprep.subr.bf16.mxu0 %v3587
        %3715 = vmatpush1.bf16.msra.mxu0 %v3586
        %3716 = vmatprep.subr.bf16.mxu0 %v3589
        %3717 = vmatpush1.bf16.msra.mxu0 %v3588
        %3718 = vmatprep.subr.bf16.mxu0 %v3591
        %3719 = vmatpush1.bf16.msra.mxu0 %v3590
        %3720 = vmatprep.subr.bf16.mxu0 %v3593
        %3721 = vmatpush1.bf16.msra.mxu0 %v3592
        %3722 = vmatprep.subr.bf16.mxu0 %v3595
        %3723 = vmatpush1.bf16.msra.mxu0 %v3594
        %3724 = vmatprep.mubr.bf16.mxu0 %v3265
        %3725 = vmatmul.mubr.bf16.gmra.mrb[0].mxu0 %v3264
        %v3726 = vpop.f32.mrb[0].mxu0
        %v3727 = vadd.f32 %v3365, %v3726
        %v3728 = vpop.f32.mrb[0].mxu0
        %v3729 = vadd.f32 %v3369, %v3728
        %v3730 = vpop.f32.mrb[0].mxu0
        %v3731 = vadd.f32 %v3365, %v3730
        %v3732 = vpop.f32.mrb[0].mxu0
        %v3733 = vadd.f32 %v3369, %v3732
        %3734 = vmatprep.mubr.bf16.mxu0 %v3269
        %3735 = vmatmul.mubr.bf16.gmra.mrb[0].mxu0 %v3268
        %v3736 = vpop.f32.mrb[0].mxu0
        %v3737 = vadd.f32 %v3365, %v3736
        %v3738 = vpop.f32.mrb[0].mxu0
        %v3739 = vadd.f32 %v3369, %v3738
        %v3740 = vpop.f32.mrb[0].mxu0
        %v3741 = vadd.f32 %v3365, %v3740
        %v3742 = vpop.f32.mrb[0].mxu0
        %v3743 = vadd.f32 %v3369, %v3742
        %3744 = vmatprep.mubr.bf16.mxu0 %v3273
        %3745 = vmatmul.mubr.bf16.gmra.mrb[0].mxu0 %v3272
        %v3746 = vpop.f32.mrb[0].mxu0
        %v3747 = vadd.f32 %v3365, %v3746
        %v3748 = vpop.f32.mrb[0].mxu0
        %v3749 = vadd.f32 %v3369, %v3748
        %v3750 = vpop.f32.mrb[0].mxu0
        %v3751 = vadd.f32 %v3365, %v3750
        %v3752 = vpop.f32.mrb[0].mxu0
        %v3753 = vadd.f32 %v3369, %v3752
        %3754 = vmatprep.mubr.bf16.mxu0 %v3277
        %3755 = vmatmul.mubr.bf16.gmra.mrb[0].mxu0 %v3276
        %v3756 = vpop.f32.mrb[0].mxu0
        %v3757 = vadd.f32 %v3365, %v3756
        %v3758 = vpop.f32.mrb[0].mxu0
        %v3759 = vadd.f32 %v3369, %v3758
        %v3760 = vpop.f32.mrb[0].mxu0
        %v3761 = vadd.f32 %v3365, %v3760
        %v3762 = vpop.f32.mrb[0].mxu0
        %v3763 = vadd.f32 %v3369, %v3762
        %3764 = vmatprep.mubr.bf16.mxu0 %v3281
        %3765 = vmatmul.mubr.bf16.gmra.mrb[0].mxu0 %v3280
        %v3766 = vpop.f32.mrb[0].mxu0
        %v3767 = vadd.f32 %v3365, %v3766
        %v3768 = vpop.f32.mrb[0].mxu0
        %v3769 = vadd.f32 %v3369, %v3768
        %v3770 = vpop.f32.mrb[0].mxu0
        %v3771 = vadd.f32 %v3365, %v3770
        %v3772 = vpop.f32.mrb[0].mxu0
        %v3773 = vadd.f32 %v3369, %v3772
        %3774 = vmatprep.mubr.bf16.mxu0 %v3285
        %3775 = vmatmul.mubr.bf16.gmra.mrb[0].mxu0 %v3284
        %v3776 = vpop.f32.mrb[0].mxu0
        %v3777 = vadd.f32 %v3365, %v3776
        %v3778 = vpop.f32.mrb[0].mxu0
        %v3779 = vadd.f32 %v3369, %v3778
        %v3780 = vpop.f32.mrb[0].mxu0
        %v3781 = vadd.f32 %v3365, %v3780
        %v3782 = vpop.f32.mrb[0].mxu0
        %v3783 = vadd.f32 %v3369, %v3782
        %3784 = vmatprep.mubr.bf16.mxu0 %v3289
        %3785 = vmatmul.mubr.bf16.gmra.mrb[0].mxu0 %v3288
        %v3786 = vpop.f32.mrb[0].mxu0
        %v3787 = vadd.f32 %v3365, %v3786
        %v3788 = vpop.f32.mrb[0].mxu0
        %v3789 = vadd.f32 %v3369, %v3788
        %v3790 = vpop.f32.mrb[0].mxu0
        %v3791 = vadd.f32 %v3365, %v3790
        %v3792 = vpop.f32.mrb[0].mxu0
        %v3793 = vadd.f32 %v3369, %v3792
        %3794 = vmatprep.mubr.bf16.mxu0 %v3293
        %3795 = vmatmul.mubr.bf16.gmra.mrb[0].mxu0 %v3292
        %v3796 = vpop.f32.mrb[0].mxu0
        %v3797 = vadd.f32 %v3365, %v3796
        %v3798 = vpop.f32.mrb[0].mxu0
        %v3799 = vadd.f32 %v3369, %v3798
        %v3800 = vpop.f32.mrb[0].mxu0
        %v3801 = vadd.f32 %v3365, %v3800
        %v3802 = vpop.f32.mrb[0].mxu0
        %v3803 = vadd.f32 %v3369, %v3802
        %3804 = vdwg.mxu0
        %3805 = vmatprep.subr.bf16.mxu0 %v3597
        %3806 = vmatpush1.bf16.msra.mxu0 %v3596
        %3807 = vmatprep.subr.bf16.mxu0 %v3599
        %3808 = vmatpush1.bf16.msra.mxu0 %v3598
        %3809 = vmatprep.subr.bf16.mxu0 %v3601
        %3810 = vmatpush1.bf16.msra.mxu0 %v3600
        %3811 = vmatprep.subr.bf16.mxu0 %v3603
        %3812 = vmatpush1.bf16.msra.mxu0 %v3602
        %3813 = vmatprep.subr.bf16.mxu0 %v3605
        %3814 = vmatpush1.bf16.msra.mxu0 %v3604
        %3815 = vmatprep.subr.bf16.mxu0 %v3607
        %3816 = vmatpush1.bf16.msra.mxu0 %v3606
        %3817 = vmatprep.subr.bf16.mxu0 %v3609
        %3818 = vmatpush1.bf16.msra.mxu0 %v3608
        %3819 = vmatprep.subr.bf16.mxu0 %v3611
        %3820 = vmatpush1.bf16.msra.mxu0 %v3610
        %3821 = vmatprep.subr.bf16.mxu0 %v3613
        %3822 = vmatpush1.bf16.msra.mxu0 %v3612
        %3823 = vmatprep.subr.bf16.mxu0 %v3615
        %3824 = vmatpush1.bf16.msra.mxu0 %v3614
        %3825 = vmatprep.subr.bf16.mxu0 %v3617
        %3826 = vmatpush1.bf16.msra.mxu0 %v3616
        %3827 = vmatprep.subr.bf16.mxu0 %v3619
        %3828 = vmatpush1.bf16.msra.mxu0 %v3618
        %3829 = vmatprep.subr.bf16.mxu0 %v3621
        %3830 = vmatpush1.bf16.msra.mxu0 %v3620
        %3831 = vmatprep.subr.bf16.mxu0 %v3623
        %3832 = vmatpush1.bf16.msra.mxu0 %v3622
        %3833 = vmatprep.subr.bf16.mxu0 %v3625
        %3834 = vmatpush1.bf16.msra.mxu0 %v3624
        %3835 = vmatprep.subr.bf16.mxu0 %v3627
        %3836 = vmatpush1.bf16.msra.mxu0 %v3626
        %3837 = vmatprep.mubr.bf16.mxu0 %v3267
        %3838 = vmatmul.mubr.bf16.gmra.mrb[0].mxu0 %v3266
        %v3839 = vpop.f32.mrb[0].mxu0
        %v3840 = vadd.f32 %v3727, %v3839
        %v3841 = vpop.f32.mrb[0].mxu0
        %v3842 = vadd.f32 %v3729, %v3841
        %v3843 = vpop.f32.mrb[0].mxu0
        %v3844 = vadd.f32 %v3731, %v3843
        %v3845 = vpop.f32.mrb[0].mxu0
        %v3846 = vadd.f32 %v3733, %v3845
        %3847 = vmatprep.mubr.bf16.mxu0 %v3271
        %3848 = vmatmul.mubr.bf16.gmra.mrb[0].mxu0 %v3270
        %v3849 = vpop.f32.mrb[0].mxu0
        %v3850 = vadd.f32 %v3737, %v3849
        %v3851 = vpop.f32.mrb[0].mxu0
        %v3852 = vadd.f32 %v3739, %v3851
        %v3853 = vpop.f32.mrb[0].mxu0
        %v3854 = vadd.f32 %v3741, %v3853
        %v3855 = vpop.f32.mrb[0].mxu0
        %v3856 = vadd.f32 %v3743, %v3855
        %3857 = vmatprep.mubr.bf16.mxu0 %v3275
        %3858 = vmatmul.mubr.bf16.gmra.mrb[0].mxu0 %v3274
        %v3859 = vpop.f32.mrb[0].mxu0
        %v3860 = vadd.f32 %v3747, %v3859
        %v3861 = vpop.f32.mrb[0].mxu0
        %v3862 = vadd.f32 %v3749, %v3861
        %v3863 = vpop.f32.mrb[0].mxu0
        %v3864 = vadd.f32 %v3751, %v3863
        %v3865 = vpop.f32.mrb[0].mxu0
        %v3866 = vadd.f32 %v3753, %v3865
        %3867 = vmatprep.mubr.bf16.mxu0 %v3279
        %3868 = vmatmul.mubr.bf16.gmra.mrb[0].mxu0 %v3278
        %v3869 = vpop.f32.mrb[0].mxu0
        %v3870 = vadd.f32 %v3757, %v3869
        %v3871 = vpop.f32.mrb[0].mxu0
        %v3872 = vadd.f32 %v3759, %v3871
        %v3873 = vpop.f32.mrb[0].mxu0
        %v3874 = vadd.f32 %v3761, %v3873
        %v3875 = vpop.f32.mrb[0].mxu0
        %v3876 = vadd.f32 %v3763, %v3875
        %3877 = vmatprep.mubr.bf16.mxu0 %v3283
        %3878 = vmatmul.mubr.bf16.gmra.mrb[0].mxu0 %v3282
        %v3879 = vpop.f32.mrb[0].mxu0
        %v3880 = vadd.f32 %v3767, %v3879
        %v3881 = vpop.f32.mrb[0].mxu0
        %v3882 = vadd.f32 %v3769, %v3881
        %v3883 = vpop.f32.mrb[0].mxu0
        %v3884 = vadd.f32 %v3771, %v3883
        %v3885 = vpop.f32.mrb[0].mxu0
        %v3886 = vadd.f32 %v3773, %v3885
        %3887 = vmatprep.mubr.bf16.mxu0 %v3287
        %3888 = vmatmul.mubr.bf16.gmra.mrb[0].mxu0 %v3286
        %v3889 = vpop.f32.mrb[0].mxu0
        %v3890 = vadd.f32 %v3777, %v3889
        %v3891 = vpop.f32.mrb[0].mxu0
        %v3892 = vadd.f32 %v3779, %v3891
        %v3893 = vpop.f32.mrb[0].mxu0
        %v3894 = vadd.f32 %v3781, %v3893
        %v3895 = vpop.f32.mrb[0].mxu0
        %v3896 = vadd.f32 %v3783, %v3895
        %3897 = vmatprep.mubr.bf16.mxu0 %v3291
        %3898 = vmatmul.mubr.bf16.gmra.mrb[0].mxu0 %v3290
        %v3899 = vpop.f32.mrb[0].mxu0
        %v3900 = vadd.f32 %v3787, %v3899
        %v3901 = vpop.f32.mrb[0].mxu0
        %v3902 = vadd.f32 %v3789, %v3901
        %v3903 = vpop.f32.mrb[0].mxu0
        %v3904 = vadd.f32 %v3791, %v3903
        %v3905 = vpop.f32.mrb[0].mxu0
        %v3906 = vadd.f32 %v3793, %v3905
        %3907 = vmatprep.mubr.bf16.mxu0 %v3295
        %3908 = vmatmul.mubr.bf16.gmra.mrb[0].mxu0 %v3294
        %v3909 = vpop.f32.mrb[0].mxu0
        %v3910 = vadd.f32 %v3797, %v3909
        %v3911 = vpop.f32.mrb[0].mxu0
        %v3912 = vadd.f32 %v3799, %v3911
        %v3913 = vpop.f32.mrb[0].mxu0
        %v3914 = vadd.f32 %v3801, %v3913
        %v3915 = vpop.f32.mrb[0].mxu0
        %v3916 = vadd.f32 %v3803, %v3915
        %3917 = vdwg.mxu0
        %v3918 = vmax.f32 %v3840, 0.0
        %v3919 = vmax.f32 %v3842, 0.0
        %v3920 = vmax.f32 %v3844, 0.0
        %v3921 = vmax.f32 %v3846, 0.0
        %v3922 = vmax.f32 %v3850, 0.0
        %v3923 = vmax.f32 %v3852, 0.0
        %v3924 = vmax.f32 %v3854, 0.0
        %v3925 = vmax.f32 %v3856, 0.0
        %v3926 = vmax.f32 %v3860, 0.0
        %v3927 = vmax.f32 %v3862, 0.0
        %v3928 = vmax.f32 %v3864, 0.0
        %v3929 = vmax.f32 %v3866, 0.0
        %v3930 = vmax.f32 %v3870, 0.0
        %v3931 = vmax.f32 %v3872, 0.0
        %v3932 = vmax.f32 %v3874, 0.0
        %v3933 = vmax.f32 %v3876, 0.0
        %v3934 = vmax.f32 %v3880, 0.0
        %v3935 = vmax.f32 %v3882, 0.0
        %v3936 = vmax.f32 %v3884, 0.0
        %v3937 = vmax.f32 %v3886, 0.0
        %v3938 = vmax.f32 %v3890, 0.0
        %v3939 = vmax.f32 %v3892, 0.0
        %v3940 = vmax.f32 %v3894, 0.0
        %v3941 = vmax.f32 %v3896, 0.0
        %v3942 = vmax.f32 %v3900, 0.0
        %v3943 = vmax.f32 %v3902, 0.0
        %v3944 = vmax.f32 %v3904, 0.0
        %v3945 = vmax.f32 %v3906, 0.0
        %v3946 = vmax.f32 %v3910, 0.0
        %v3947 = vmax.f32 %v3912, 0.0
        %v3948 = vmax.f32 %v3914, 0.0
        %v3949 = vmax.f32 %v3916, 0.0
        %v3950 = vpack.c.bf16 %v3920, %v3918
        %v3951 = vpack.c.bf16 %v3921, %v3919
        %v3952 = vpack.c.bf16 %v3924, %v3922
        %v3953 = vpack.c.bf16 %v3925, %v3923
        %v3954 = vpack.c.bf16 %v3928, %v3926
        %v3955 = vpack.c.bf16 %v3929, %v3927
        %v3956 = vpack.c.bf16 %v3932, %v3930
        %v3957 = vpack.c.bf16 %v3933, %v3931
        %v3958 = vpack.c.bf16 %v3936, %v3934
        %v3959 = vpack.c.bf16 %v3937, %v3935
        %v3960 = vpack.c.bf16 %v3940, %v3938
        %v3961 = vpack.c.bf16 %v3941, %v3939
        %v3962 = vpack.c.bf16 %v3944, %v3942
        %v3963 = vpack.c.bf16 %v3945, %v3943
        %v3964 = vpack.c.bf16 %v3948, %v3946
        %v3965 = vpack.c.bf16 %v3949, %v3947
        %v3966 = vld [vmem:[#allocation10] sm:$0xf]
        %v3967 = vld [vmem:[#allocation10 + $0x4] sm:$0xf]
        %v3968 = vld [vmem:[#allocation10 + $0x8] sm:$0xf]
        %v3969 = vld [vmem:[#allocation10 + $0xc] sm:$0xf]
        %v3970 = vld [vmem:[#allocation10 + $0x10] sm:$0xf]
        %v3971 = vld [vmem:[#allocation10 + $0x14] sm:$0xf]
        %v3972 = vld [vmem:[#allocation10 + $0x18] sm:$0xf]
        %v3973 = vld [vmem:[#allocation10 + $0x1c] sm:$0xf]
        %v3974 = vld [vmem:[#allocation10 + $0x20] sm:$0xf]
        %v3975 = vld [vmem:[#allocation10 + $0x24] sm:$0xf]
        %v3976 = vld [vmem:[#allocation10 + $0x28] sm:$0xf]
        %v3977 = vld [vmem:[#allocation10 + $0x2c] sm:$0xf]
        %v3978 = vld [vmem:[#allocation10 + $0x30] sm:$0xf]
        %v3979 = vld [vmem:[#allocation10 + $0x34] sm:$0xf]
        %v3980 = vld [vmem:[#allocation10 + $0x38] sm:$0xf]
        %v3981 = vld [vmem:[#allocation10 + $0x3c] sm:$0xf]
        %v3982 = vld [vmem:[#allocation10 + $0x40] sm:$0xf]
        %v3983 = vld [vmem:[#allocation10 + $0x44] sm:$0xf]
        %v3984 = vld [vmem:[#allocation10 + $0x48] sm:$0xf]
        %v3985 = vld [vmem:[#allocation10 + $0x4c] sm:$0xf]
        %v3986 = vld [vmem:[#allocation10 + $0x50] sm:$0xf]
        %v3987 = vld [vmem:[#allocation10 + $0x54] sm:$0xf]
        %v3988 = vld [vmem:[#allocation10 + $0x58] sm:$0xf]
        %v3989 = vld [vmem:[#allocation10 + $0x5c] sm:$0xf]
        %v3990 = vld [vmem:[#allocation10 + $0x60] sm:$0xf]
        %v3991 = vld [vmem:[#allocation10 + $0x64] sm:$0xf]
        %v3992 = vld [vmem:[#allocation10 + $0x68] sm:$0xf]
        %v3993 = vld [vmem:[#allocation10 + $0x6c] sm:$0xf]
        %v3994 = vld [vmem:[#allocation10 + $0x70] sm:$0xf]
        %v3995 = vld [vmem:[#allocation10 + $0x74] sm:$0xf]
        %v3996 = vld [vmem:[#allocation10 + $0x78] sm:$0xf]
        %v3997 = vld [vmem:[#allocation10 + $0x7c] sm:$0xf]
        %v3998 = vld [vmem:[#allocation12] sm:$0x1]
        %v4000 = vlaneseq
        %v4001 = vshrl.u32 %v4000, 7
        %v4002 = vsub.s32 0, %v4001
        %v4003 = vrot.slane %v3998, %v4002
        %v4037 = vunpack.c.l.b16 %v3966
        %v4038 = vunpack.c.l.b16 %v3967
        %v4039 = vunpack.c.l.b16 %v3968
        %v4040 = vunpack.c.l.b16 %v3969
        %v4041 = vunpack.c.l.b16 %v3970
        %v4042 = vunpack.c.l.b16 %v3971
        %v4043 = vunpack.c.l.b16 %v3972
        %v4044 = vunpack.c.l.b16 %v3973
        %v4045 = vunpack.c.l.b16 %v3974
        %v4046 = vunpack.c.l.b16 %v3975
        %v4047 = vunpack.c.l.b16 %v3976
        %v4048 = vunpack.c.l.b16 %v3977
        %v4049 = vunpack.c.l.b16 %v3978
        %v4050 = vunpack.c.l.b16 %v3979
        %v4051 = vunpack.c.l.b16 %v3980
        %v4052 = vunpack.c.l.b16 %v3981
        %v4053 = vunpack.c.l.b16 %v3982
        %v4054 = vunpack.c.l.b16 %v3983
        %v4055 = vunpack.c.l.b16 %v3984
        %v4056 = vunpack.c.l.b16 %v3985
        %v4057 = vunpack.c.l.b16 %v3986
        %v4058 = vunpack.c.l.b16 %v3987
        %v4059 = vunpack.c.l.b16 %v3988
        %v4060 = vunpack.c.l.b16 %v3989
        %v4061 = vunpack.c.l.b16 %v3990
        %v4062 = vunpack.c.l.b16 %v3991
        %v4063 = vunpack.c.l.b16 %v3992
        %v4064 = vunpack.c.l.b16 %v3993
        %v4065 = vunpack.c.l.b16 %v3994
        %v4066 = vunpack.c.l.b16 %v3995
        %v4067 = vunpack.c.l.b16 %v3996
        %v4068 = vunpack.c.l.b16 %v3997
        %v4069 = vpack.c.b16 %v4038, %v4037
        %v4070 = vpack.c.b16 %v4040, %v4039
        %v4071 = vpack.c.b16 %v4042, %v4041
        %v4072 = vpack.c.b16 %v4044, %v4043
        %v4073 = vpack.c.b16 %v4046, %v4045
        %v4074 = vpack.c.b16 %v4048, %v4047
        %v4075 = vpack.c.b16 %v4050, %v4049
        %v4076 = vpack.c.b16 %v4052, %v4051
        %v4077 = vpack.c.b16 %v4054, %v4053
        %v4078 = vpack.c.b16 %v4056, %v4055
        %v4079 = vpack.c.b16 %v4058, %v4057
        %v4080 = vpack.c.b16 %v4060, %v4059
        %v4081 = vpack.c.b16 %v4062, %v4061
        %v4082 = vpack.c.b16 %v4064, %v4063
        %v4083 = vpack.c.b16 %v4066, %v4065
        %v4084 = vpack.c.b16 %v4068, %v4067
        %4101 = vmatprep.subr.bf16.mxu0 0
        %4102 = vmatpush1.bf16.msra.mxu0 %v4069
        %4103 = vmatprep.subr.bf16.mxu0 0
        %4104 = vmatpush1.bf16.msra.mxu0 %v4070
        %4105 = vmatprep.subr.bf16.mxu0 0
        %4106 = vmatpush1.bf16.msra.mxu0 %v4071
        %4107 = vmatprep.subr.bf16.mxu0 0
        %4108 = vmatpush1.bf16.msra.mxu0 %v4072
        %4109 = vmatprep.subr.bf16.mxu0 0
        %4110 = vmatpush1.bf16.msra.mxu0 %v4073
        %4111 = vmatprep.subr.bf16.mxu0 0
        %4112 = vmatpush1.bf16.msra.mxu0 %v4074
        %4113 = vmatprep.subr.bf16.mxu0 0
        %4114 = vmatpush1.bf16.msra.mxu0 %v4075
        %4115 = vmatprep.subr.bf16.mxu0 0
        %4116 = vmatpush1.bf16.msra.mxu0 %v4076
        %4117 = vmatprep.subr.bf16.mxu0 0
        %4118 = vmatpush1.bf16.msra.mxu0 %v4077
        %4119 = vmatprep.subr.bf16.mxu0 0
        %4120 = vmatpush1.bf16.msra.mxu0 %v4078
        %4121 = vmatprep.subr.bf16.mxu0 0
        %4122 = vmatpush1.bf16.msra.mxu0 %v4079
        %4123 = vmatprep.subr.bf16.mxu0 0
        %4124 = vmatpush1.bf16.msra.mxu0 %v4080
        %4125 = vmatprep.subr.bf16.mxu0 0
        %4126 = vmatpush1.bf16.msra.mxu0 %v4081
        %4127 = vmatprep.subr.bf16.mxu0 0
        %4128 = vmatpush1.bf16.msra.mxu0 %v4082
        %4129 = vmatprep.subr.bf16.mxu0 0
        %4130 = vmatpush1.bf16.msra.mxu0 %v4083
        %4131 = vmatprep.subr.bf16.mxu0 0
        %4132 = vmatpush1.bf16.msra.mxu0 %v4084
        %4133 = vmatprep.mubr.bf16.mxu0 %v3951
        %4134 = vmatmul.mubr.bf16.gmra.mrb[0].mxu0 %v3950
        %v4135 = vpop.f32.mrb[0].mxu0
        %v4136 = vadd.f32 %v4003, %v4135
        %v4137 = vpop.f32.mrb[0].mxu0
        %v4138 = vpop.f32.mrb[0].mxu0
        %v4139 = vadd.f32 %v4003, %v4138
        %v4140 = vpop.f32.mrb[0].mxu0
        %4141 = vmatprep.mubr.bf16.mxu0 %v3953
        %4142 = vmatmul.mubr.bf16.gmra.mrb[0].mxu0 %v3952
        %v4143 = vpop.f32.mrb[0].mxu0
        %v4144 = vadd.f32 %v4003, %v4143
        %v4145 = vpop.f32.mrb[0].mxu0
        %v4146 = vpop.f32.mrb[0].mxu0
        %v4147 = vadd.f32 %v4003, %v4146
        %v4148 = vpop.f32.mrb[0].mxu0
        %4149 = vmatprep.mubr.bf16.mxu0 %v3955
        %4150 = vmatmul.mubr.bf16.gmra.mrb[0].mxu0 %v3954
        %v4151 = vpop.f32.mrb[0].mxu0
        %v4152 = vadd.f32 %v4003, %v4151
        %v4153 = vpop.f32.mrb[0].mxu0
        %v4154 = vpop.f32.mrb[0].mxu0
        %v4155 = vadd.f32 %v4003, %v4154
        %v4156 = vpop.f32.mrb[0].mxu0
        %4157 = vmatprep.mubr.bf16.mxu0 %v3957
        %4158 = vmatmul.mubr.bf16.gmra.mrb[0].mxu0 %v3956
        %v4159 = vpop.f32.mrb[0].mxu0
        %v4160 = vadd.f32 %v4003, %v4159
        %v4161 = vpop.f32.mrb[0].mxu0
        %v4162 = vpop.f32.mrb[0].mxu0
        %v4163 = vadd.f32 %v4003, %v4162
        %v4164 = vpop.f32.mrb[0].mxu0
        %4165 = vmatprep.mubr.bf16.mxu0 %v3959
        %4166 = vmatmul.mubr.bf16.gmra.mrb[0].mxu0 %v3958
        %v4167 = vpop.f32.mrb[0].mxu0
        %v4168 = vadd.f32 %v4003, %v4167
        %v4169 = vpop.f32.mrb[0].mxu0
        %v4170 = vpop.f32.mrb[0].mxu0
        %v4171 = vadd.f32 %v4003, %v4170
        %v4172 = vpop.f32.mrb[0].mxu0
        %4173 = vmatprep.mubr.bf16.mxu0 %v3961
        %4174 = vmatmul.mubr.bf16.gmra.mrb[0].mxu0 %v3960
        %v4175 = vpop.f32.mrb[0].mxu0
        %v4176 = vadd.f32 %v4003, %v4175
        %v4177 = vpop.f32.mrb[0].mxu0
        %v4178 = vpop.f32.mrb[0].mxu0
        %v4179 = vadd.f32 %v4003, %v4178
        %v4180 = vpop.f32.mrb[0].mxu0
        %4181 = vmatprep.mubr.bf16.mxu0 %v3963
        %4182 = vmatmul.mubr.bf16.gmra.mrb[0].mxu0 %v3962
        %v4183 = vpop.f32.mrb[0].mxu0
        %v4184 = vadd.f32 %v4003, %v4183
        %v4185 = vpop.f32.mrb[0].mxu0
        %v4186 = vpop.f32.mrb[0].mxu0
        %v4187 = vadd.f32 %v4003, %v4186
        %v4188 = vpop.f32.mrb[0].mxu0
        %4189 = vmatprep.mubr.bf16.mxu0 %v3965
        %4190 = vmatmul.mubr.bf16.gmra.mrb[0].mxu0 %v3964
        %v4191 = vpop.f32.mrb[0].mxu0
        %v4192 = vadd.f32 %v4003, %v4191
        %v4193 = vpop.f32.mrb[0].mxu0
        %v4194 = vpop.f32.mrb[0].mxu0
        %v4195 = vadd.f32 %v4003, %v4194
        %v4196 = vpop.f32.mrb[0].mxu0
        %4197 = vdwg.mxu0
        %v4198 = vmax.f32 %v4136, 0.0
        %v4199 = vmax.f32 %v4139, 0.0
        %v4200 = vmax.f32 %v4144, 0.0
        %v4201 = vmax.f32 %v4147, 0.0
        %v4202 = vmax.f32 %v4152, 0.0
        %v4203 = vmax.f32 %v4155, 0.0
        %v4204 = vmax.f32 %v4160, 0.0
        %v4205 = vmax.f32 %v4163, 0.0
        %v4206 = vmax.f32 %v4168, 0.0
        %v4207 = vmax.f32 %v4171, 0.0
        %v4208 = vmax.f32 %v4176, 0.0
        %v4209 = vmax.f32 %v4179, 0.0
        %v4210 = vmax.f32 %v4184, 0.0
        %v4211 = vmax.f32 %v4187, 0.0
        %v4212 = vmax.f32 %v4192, 0.0
        %v4213 = vmax.f32 %v4195, 0.0
        %v4214 = vpack.c.bf16 %v4199, %v4198
        %v4215 = vpack.c.bf16 %v4201, %v4200
        %v4216 = vpack.c.bf16 %v4203, %v4202
        %v4217 = vpack.c.bf16 %v4205, %v4204
        %v4218 = vpack.c.bf16 %v4207, %v4206
        %v4219 = vpack.c.bf16 %v4209, %v4208
        %v4220 = vpack.c.bf16 %v4211, %v4210
        %v4221 = vpack.c.bf16 %v4213, %v4212
        %v4222 = vld [vmem:[#allocation13] sm:$0xf]
        %v4223 = vld [vmem:[#allocation13 + $0x4] sm:$0xf]
        %v4224 = vld [vmem:[#allocation13 + $0x8] sm:$0xf]
        %v4225 = vld [vmem:[#allocation13 + $0xc] sm:$0xf]
        %v4226 = vld [vmem:[#allocation13 + $0x10] sm:$0xf]
        %v4227 = vld [vmem:[#allocation13 + $0x14] sm:$0xf]
        %v4228 = vld [vmem:[#allocation13 + $0x18] sm:$0xf]
        %v4229 = vld [vmem:[#allocation13 + $0x1c] sm:$0xf]
        %v4230 = vld [vmem:[#allocation13 + $0x20] sm:$0xf]
        %v4231 = vld [vmem:[#allocation13 + $0x24] sm:$0xf]
        %v4232 = vld [vmem:[#allocation13 + $0x28] sm:$0xf]
        %v4233 = vld [vmem:[#allocation13 + $0x2c] sm:$0xf]
        %v4234 = vld [vmem:[#allocation13 + $0x30] sm:$0xf]
        %v4235 = vld [vmem:[#allocation13 + $0x34] sm:$0xf]
        %v4236 = vld [vmem:[#allocation13 + $0x38] sm:$0xf]
        %v4237 = vld [vmem:[#allocation13 + $0x3c] sm:$0xf]
        %v4238 = vld [vmem:[#allocation15] sm:$0x1]
        %v4240 = vlaneseq
        %v4241 = vshrl.u32 %v4240, 7
        %v4242 = vsub.s32 0, %v4241
        %v4243 = vrot.slane %v4238, %v4242
        %v4261 = vunpack.c.l.b16 %v4222
        %v4262 = vunpack.c.l.b16 %v4223
        %v4263 = vunpack.c.l.b16 %v4224
        %v4264 = vunpack.c.l.b16 %v4225
        %v4265 = vunpack.c.l.b16 %v4226
        %v4266 = vunpack.c.l.b16 %v4227
        %v4267 = vunpack.c.l.b16 %v4228
        %v4268 = vunpack.c.l.b16 %v4229
        %v4269 = vunpack.c.l.b16 %v4230
        %v4270 = vunpack.c.l.b16 %v4231
        %v4271 = vunpack.c.l.b16 %v4232
        %v4272 = vunpack.c.l.b16 %v4233
        %v4273 = vunpack.c.l.b16 %v4234
        %v4274 = vunpack.c.l.b16 %v4235
        %v4275 = vunpack.c.l.b16 %v4236
        %v4276 = vunpack.c.l.b16 %v4237
        %v4277 = vpack.c.b16 %v4262, %v4261
        %v4278 = vpack.c.b16 %v4264, %v4263
        %v4279 = vpack.c.b16 %v4266, %v4265
        %v4280 = vpack.c.b16 %v4268, %v4267
        %v4281 = vpack.c.b16 %v4270, %v4269
        %v4282 = vpack.c.b16 %v4272, %v4271
        %v4283 = vpack.c.b16 %v4274, %v4273
        %v4284 = vpack.c.b16 %v4276, %v4275
        %4293 = vmatprep.subr.bf16.mxu0 0
        %4294 = vmatpush1.bf16.msra.mxu0 %v4277
        %4295 = vmatprep.subr.bf16.mxu0 0
        %4296 = vmatpush1.bf16.msra.mxu0 %v4278
        %4297 = vmatprep.subr.bf16.mxu0 0
        %4298 = vmatpush1.bf16.msra.mxu0 %v4279
        %4299 = vmatprep.subr.bf16.mxu0 0
        %4300 = vmatpush1.bf16.msra.mxu0 %v4280
        %4301 = vmatprep.subr.bf16.mxu0 0
        %4302 = vmatpush1.bf16.msra.mxu0 %v4281
        %4303 = vmatprep.subr.bf16.mxu0 0
        %4304 = vmatpush1.bf16.msra.mxu0 %v4282
        %4305 = vmatprep.subr.bf16.mxu0 0
        %4306 = vmatpush1.bf16.msra.mxu0 %v4283
        %4307 = vmatprep.subr.bf16.mxu0 0
        %4308 = vmatpush1.bf16.msra.mxu0 %v4284
        %4309 = vmatprep.subr.bf16.mxu0 0
        %4310 = vmatpush1.bf16.msra.mxu0 0
        %4311 = vmatprep.subr.bf16.mxu0 0
        %4312 = vmatpush1.bf16.msra.mxu0 0
        %4313 = vmatprep.subr.bf16.mxu0 0
        %4314 = vmatpush1.bf16.msra.mxu0 0
        %4315 = vmatprep.subr.bf16.mxu0 0
        %4316 = vmatpush1.bf16.msra.mxu0 0
        %4317 = vmatprep.subr.bf16.mxu0 0
        %4318 = vmatpush1.bf16.msra.mxu0 0
        %4319 = vmatprep.subr.bf16.mxu0 0
        %4320 = vmatpush1.bf16.msra.mxu0 0
        %4321 = vmatprep.subr.bf16.mxu0 0
        %4322 = vmatpush1.bf16.msra.mxu0 0
        %4323 = vmatprep.subr.bf16.mxu0 0
        %4324 = vmatpush1.bf16.msra.mxu0 0
        %4325 = vmatprep.mubr.bf16.mxu0 0
        %4326 = vmatmul.mubr.bf16.gmra.mrb[0].mxu0 %v4214
        %v4327 = vpop.f32.mrb[0].mxu0
        %v4328 = vadd.f32 %v4243, %v4327
        %v4329 = vpop.f32.mrb[0].mxu0
        %v4330 = vpop.f32.mrb[0].mxu0
        %v4331 = vadd.f32 %v4243, %v4330
        %v4332 = vpop.f32.mrb[0].mxu0
        %4333 = vmatprep.mubr.bf16.mxu0 0
        %4334 = vmatmul.mubr.bf16.gmra.mrb[0].mxu0 %v4215
        %v4335 = vpop.f32.mrb[0].mxu0
        %v4336 = vadd.f32 %v4243, %v4335
        %v4337 = vpop.f32.mrb[0].mxu0
        %v4338 = vpop.f32.mrb[0].mxu0
        %v4339 = vadd.f32 %v4243, %v4338
        %v4340 = vpop.f32.mrb[0].mxu0
        %4341 = vmatprep.mubr.bf16.mxu0 0
        %4342 = vmatmul.mubr.bf16.gmra.mrb[0].mxu0 %v4216
        %v4343 = vpop.f32.mrb[0].mxu0
        %v4344 = vadd.f32 %v4243, %v4343
        %v4345 = vpop.f32.mrb[0].mxu0
        %v4346 = vpop.f32.mrb[0].mxu0
        %v4347 = vadd.f32 %v4243, %v4346
        %v4348 = vpop.f32.mrb[0].mxu0
        %4349 = vmatprep.mubr.bf16.mxu0 0
        %4350 = vmatmul.mubr.bf16.gmra.mrb[0].mxu0 %v4217
        %v4351 = vpop.f32.mrb[0].mxu0
        %v4352 = vadd.f32 %v4243, %v4351
        %v4353 = vpop.f32.mrb[0].mxu0
        %v4354 = vpop.f32.mrb[0].mxu0
        %v4355 = vadd.f32 %v4243, %v4354
        %v4356 = vpop.f32.mrb[0].mxu0
        %4357 = vmatprep.mubr.bf16.mxu0 0
        %4358 = vmatmul.mubr.bf16.gmra.mrb[0].mxu0 %v4218
        %v4359 = vpop.f32.mrb[0].mxu0
        %v4360 = vadd.f32 %v4243, %v4359
        %v4361 = vpop.f32.mrb[0].mxu0
        %v4362 = vpop.f32.mrb[0].mxu0
        %v4363 = vadd.f32 %v4243, %v4362
        %v4364 = vpop.f32.mrb[0].mxu0
        %4365 = vmatprep.mubr.bf16.mxu0 0
        %4366 = vmatmul.mubr.bf16.gmra.mrb[0].mxu0 %v4219
        %v4367 = vpop.f32.mrb[0].mxu0
        %v4368 = vadd.f32 %v4243, %v4367
        %v4369 = vpop.f32.mrb[0].mxu0
        %v4370 = vpop.f32.mrb[0].mxu0
        %v4371 = vadd.f32 %v4243, %v4370
        %v4372 = vpop.f32.mrb[0].mxu0
        %4373 = vmatprep.mubr.bf16.mxu0 0
        %4374 = vmatmul.mubr.bf16.gmra.mrb[0].mxu0 %v4220
        %v4375 = vpop.f32.mrb[0].mxu0
        %v4376 = vadd.f32 %v4243, %v4375
        %v4377 = vpop.f32.mrb[0].mxu0
        %v4378 = vpop.f32.mrb[0].mxu0
        %v4379 = vadd.f32 %v4243, %v4378
        %v4380 = vpop.f32.mrb[0].mxu0
        %4381 = vmatprep.mubr.bf16.mxu0 0
        %4382 = vmatmul.mubr.bf16.gmra.mrb[0].mxu0 %v4221
        %v4383 = vpop.f32.mrb[0].mxu0
        %v4384 = vadd.f32 %v4243, %v4383
        %v4385 = vpop.f32.mrb[0].mxu0
        %v4386 = vpop.f32.mrb[0].mxu0
        %v4387 = vadd.f32 %v4243, %v4386
        %v4388 = vpop.f32.mrb[0].mxu0
        %4389 = vdwg.mxu0
        %v4390 = vmax.f32 %v4328, 0.0
        %v4391 = vmax.f32 %v4331, 0.0
        %v4392 = vmax.f32 %v4336, 0.0
        %v4393 = vmax.f32 %v4339, 0.0
        %v4394 = vmax.f32 %v4344, 0.0
        %v4395 = vmax.f32 %v4347, 0.0
        %v4396 = vmax.f32 %v4352, 0.0
        %v4397 = vmax.f32 %v4355, 0.0
        %v4398 = vmax.f32 %v4360, 0.0
        %v4399 = vmax.f32 %v4363, 0.0
        %v4400 = vmax.f32 %v4368, 0.0
        %v4401 = vmax.f32 %v4371, 0.0
        %v4402 = vmax.f32 %v4376, 0.0
        %v4403 = vmax.f32 %v4379, 0.0
        %v4404 = vmax.f32 %v4384, 0.0
        %v4405 = vmax.f32 %v4387, 0.0
        %v4406 = vpack.c.bf16 %v4391, %v4390
        %v4407 = vpack.c.bf16 %v4393, %v4392
        %v4408 = vpack.c.bf16 %v4395, %v4394
        %v4409 = vpack.c.bf16 %v4397, %v4396
        %v4410 = vpack.c.bf16 %v4399, %v4398
        %v4411 = vpack.c.bf16 %v4401, %v4400
        %v4412 = vpack.c.bf16 %v4403, %v4402
        %v4413 = vpack.c.bf16 %v4405, %v4404
        %v4414 = vld [vmem:[#allocation16] sm:$0xf]
        %v4415 = vld [vmem:[#allocation16 + $0x4] sm:$0xf]
        %v4416 = vld [vmem:[#allocation16 + $0x8] sm:$0xf]
        %v4417 = vld [vmem:[#allocation16 + $0xc] sm:$0xf]
        %v4418 = vld [vmem:[#allocation16 + $0x10] sm:$0xf]
        %v4419 = vld [vmem:[#allocation16 + $0x14] sm:$0xf]
        %v4420 = vld [vmem:[#allocation16 + $0x18] sm:$0xf]
        %v4421 = vld [vmem:[#allocation16 + $0x1c] sm:$0xf]
        %v4422 = vld [vmem:[#allocation16 + $0x20] sm:$0xf]
        %v4423 = vld [vmem:[#allocation16 + $0x24] sm:$0xf]
        %v4424 = vld [vmem:[#allocation16 + $0x28] sm:$0xf]
        %v4425 = vld [vmem:[#allocation16 + $0x2c] sm:$0xf]
        %v4426 = vld [vmem:[#allocation16 + $0x30] sm:$0xf]
        %v4427 = vld [vmem:[#allocation16 + $0x34] sm:$0xf]
        %v4428 = vld [vmem:[#allocation16 + $0x38] sm:$0xf]
        %v4429 = vld [vmem:[#allocation16 + $0x3c] sm:$0xf]
        %v4430 = vld [vmem:[#allocation18] sm:$0x1]
        %v4432 = vlaneseq
        %v4433 = vshrl.u32 %v4432, 7
        %v4434 = vsub.s32 0, %v4433
        %v4435 = vrot.slane %v4430, %v4434
        %v4453 = vunpack.c.l.b16 %v4414
        %v4454 = vunpack.c.l.b16 %v4415
        %v4455 = vunpack.c.l.b16 %v4416
        %v4456 = vunpack.c.l.b16 %v4417
        %v4457 = vunpack.c.l.b16 %v4418
        %v4458 = vunpack.c.l.b16 %v4419
        %v4459 = vunpack.c.l.b16 %v4420
        %v4460 = vunpack.c.l.b16 %v4421
        %v4461 = vunpack.c.l.b16 %v4422
        %v4462 = vunpack.c.l.b16 %v4423
        %v4463 = vunpack.c.l.b16 %v4424
        %v4464 = vunpack.c.l.b16 %v4425
        %v4465 = vunpack.c.l.b16 %v4426
        %v4466 = vunpack.c.l.b16 %v4427
        %v4467 = vunpack.c.l.b16 %v4428
        %v4468 = vunpack.c.l.b16 %v4429
        %v4469 = vpack.c.b16 %v4454, %v4453
        %v4470 = vpack.c.b16 %v4456, %v4455
        %v4471 = vpack.c.b16 %v4458, %v4457
        %v4472 = vpack.c.b16 %v4460, %v4459
        %v4473 = vpack.c.b16 %v4462, %v4461
        %v4474 = vpack.c.b16 %v4464, %v4463
        %v4475 = vpack.c.b16 %v4466, %v4465
        %v4476 = vpack.c.b16 %v4468, %v4467
        %4485 = vmatprep.subr.bf16.mxu0 0
        %4486 = vmatpush1.bf16.msra.mxu0 %v4469
        %4487 = vmatprep.subr.bf16.mxu0 0
        %4488 = vmatpush1.bf16.msra.mxu0 %v4470
        %4489 = vmatprep.subr.bf16.mxu0 0
        %4490 = vmatpush1.bf16.msra.mxu0 %v4471
        %4491 = vmatprep.subr.bf16.mxu0 0
        %4492 = vmatpush1.bf16.msra.mxu0 %v4472
        %4493 = vmatprep.subr.bf16.mxu0 0
        %4494 = vmatpush1.bf16.msra.mxu0 %v4473
        %4495 = vmatprep.subr.bf16.mxu0 0
        %4496 = vmatpush1.bf16.msra.mxu0 %v4474
        %4497 = vmatprep.subr.bf16.mxu0 0
        %4498 = vmatpush1.bf16.msra.mxu0 %v4475
        %4499 = vmatprep.subr.bf16.mxu0 0
        %4500 = vmatpush1.bf16.msra.mxu0 %v4476
        %4501 = vmatprep.subr.bf16.mxu0 0
        %4502 = vmatpush1.bf16.msra.mxu0 0
        %4503 = vmatprep.subr.bf16.mxu0 0
        %4504 = vmatpush1.bf16.msra.mxu0 0
        %4505 = vmatprep.subr.bf16.mxu0 0
        %4506 = vmatpush1.bf16.msra.mxu0 0
        %4507 = vmatprep.subr.bf16.mxu0 0
        %4508 = vmatpush1.bf16.msra.mxu0 0
        %4509 = vmatprep.subr.bf16.mxu0 0
        %4510 = vmatpush1.bf16.msra.mxu0 0
        %4511 = vmatprep.subr.bf16.mxu0 0
        %4512 = vmatpush1.bf16.msra.mxu0 0
        %4513 = vmatprep.subr.bf16.mxu0 0
        %4514 = vmatpush1.bf16.msra.mxu0 0
        %4515 = vmatprep.subr.bf16.mxu0 0
        %4516 = vmatpush1.bf16.msra.mxu0 0
        %4517 = vmatprep.mubr.bf16.mxu0 0
        %4518 = vmatmul.mubr.bf16.gmra.mrb[0].mxu0 %v4406
        %v4519 = vpop.f32.mrb[0].mxu0
        %v4520 = vadd.f32 %v4435, %v4519
        %v4521 = vpop.f32.mrb[0].mxu0
        %v4522 = vpop.f32.mrb[0].mxu0
        %v4523 = vadd.f32 %v4435, %v4522
        %v4524 = vpop.f32.mrb[0].mxu0
        %4525 = vmatprep.mubr.bf16.mxu0 0
        %4526 = vmatmul.mubr.bf16.gmra.mrb[0].mxu0 %v4407
        %v4527 = vpop.f32.mrb[0].mxu0
        %v4528 = vadd.f32 %v4435, %v4527
        %v4529 = vpop.f32.mrb[0].mxu0
        %v4530 = vpop.f32.mrb[0].mxu0
        %v4531 = vadd.f32 %v4435, %v4530
        %v4532 = vpop.f32.mrb[0].mxu0
        %4533 = vmatprep.mubr.bf16.mxu0 0
        %4534 = vmatmul.mubr.bf16.gmra.mrb[0].mxu0 %v4408
        %v4535 = vpop.f32.mrb[0].mxu0
        %v4536 = vadd.f32 %v4435, %v4535
        %v4537 = vpop.f32.mrb[0].mxu0
        %v4538 = vpop.f32.mrb[0].mxu0
        %v4539 = vadd.f32 %v4435, %v4538
        %v4540 = vpop.f32.mrb[0].mxu0
        %4541 = vmatprep.mubr.bf16.mxu0 0
        %4542 = vmatmul.mubr.bf16.gmra.mrb[0].mxu0 %v4409
        %v4543 = vpop.f32.mrb[0].mxu0
        %v4544 = vadd.f32 %v4435, %v4543
        %v4545 = vpop.f32.mrb[0].mxu0
        %v4546 = vpop.f32.mrb[0].mxu0
        %v4547 = vadd.f32 %v4435, %v4546
        %v4548 = vpop.f32.mrb[0].mxu0
        %4549 = vmatprep.mubr.bf16.mxu0 0
        %4550 = vmatmul.mubr.bf16.gmra.mrb[0].mxu0 %v4410
        %v4551 = vpop.f32.mrb[0].mxu0
        %v4552 = vadd.f32 %v4435, %v4551
        %v4553 = vpop.f32.mrb[0].mxu0
        %v4554 = vpop.f32.mrb[0].mxu0
        %v4555 = vadd.f32 %v4435, %v4554
        %v4556 = vpop.f32.mrb[0].mxu0
        %4557 = vmatprep.mubr.bf16.mxu0 0
        %4558 = vmatmul.mubr.bf16.gmra.mrb[0].mxu0 %v4411
        %v4559 = vpop.f32.mrb[0].mxu0
        %v4560 = vadd.f32 %v4435, %v4559
        %v4561 = vpop.f32.mrb[0].mxu0
        %v4562 = vpop.f32.mrb[0].mxu0
        %v4563 = vadd.f32 %v4435, %v4562
        %v4564 = vpop.f32.mrb[0].mxu0
        %4565 = vmatprep.mubr.bf16.mxu0 0
        %4566 = vmatmul.mubr.bf16.gmra.mrb[0].mxu0 %v4412
        %v4567 = vpop.f32.mrb[0].mxu0
        %v4568 = vadd.f32 %v4435, %v4567
        %v4569 = vpop.f32.mrb[0].mxu0
        %v4570 = vpop.f32.mrb[0].mxu0
        %v4571 = vadd.f32 %v4435, %v4570
        %v4572 = vpop.f32.mrb[0].mxu0
        %4573 = vmatprep.mubr.bf16.mxu0 0
        %4574 = vmatmul.mubr.bf16.gmra.mrb[0].mxu0 %v4413
        %v4575 = vpop.f32.mrb[0].mxu0
        %v4576 = vadd.f32 %v4435, %v4575
        %v4577 = vpop.f32.mrb[0].mxu0
        %v4578 = vpop.f32.mrb[0].mxu0
        %v4579 = vadd.f32 %v4435, %v4578
        %v4580 = vpop.f32.mrb[0].mxu0
        %4581 = vdwg.mxu0
        %4582 = vst [vmem:[%s543] sm:$0xff] %v4520
        %4583 = vst [vmem:[%s543 + $0x8] sm:$0xff] %v4523
        %4584 = vst [vmem:[%s543 + $0x10] sm:$0xff] %v4528
        %4585 = vst [vmem:[%s543 + $0x18] sm:$0xff] %v4531
        %4586 = vst [vmem:[%s543 + $0x20] sm:$0xff] %v4536
        %4587 = vst [vmem:[%s543 + $0x28] sm:$0xff] %v4539
        %4588 = vst [vmem:[%s543 + $0x30] sm:$0xff] %v4544
        %4589 = vst [vmem:[%s543 + $0x38] sm:$0xff] %v4547
        %4590 = vst [vmem:[%s543 + $0x40] sm:$0xff] %v4552
        %4591 = vst [vmem:[%s543 + $0x48] sm:$0xff] %v4555
        %4592 = vst [vmem:[%s543 + $0x50] sm:$0xff] %v4560
        %4593 = vst [vmem:[%s543 + $0x58] sm:$0xff] %v4563
        %4594 = vst [vmem:[%s543 + $0x60] sm:$0xff] %v4568
        %4595 = vst [vmem:[%s543 + $0x68] sm:$0xff] %v4571
        %4596 = vst [vmem:[%s543 + $0x70] sm:$0xff] %v4576
        %4597 = vst [vmem:[%s543 + $0x78] sm:$0xff] %v4579
        %s4598 = smul.u32 16, %s30
        %p4599 = scmp.lt.s32.totalorder %s4598, 63
        %s4600 = scalar_select %p4599, %s4598, 63
        %s4601 = smul.addr %s4600, 8
        %s4602 = scalar_lea.vmem %s11, %s4601
        // Predicated region
        $region109: #{complexnet_forward.1} parent=63 // pred_check
          %p4603 = pneg %p284
        $region110: #{complexnet_forward.1} parent=63 // pred_check_branch
          %4605 = sbr.rel (%p4603) target = $region112
        $region111: #{complexnet_forward.1} parent=63 // pred_region
          %s4606 = smul.u32 16, %s30
        $region112: #{complexnet_forward.1} parent=63 // pred_fallthru
          _
      $region64: #{complexnet_forward.1} parent=5 // pred_fallthru
        _
      %p4607 = scmp.le.s32.totalorder 2, %s25
      // Predicated region
      $region113: #{complexnet_forward.1} parent=5 // pred_check
        %p4608 = pneg %p4607
      $region114: #{complexnet_forward.1} parent=5 // pred_check_branch
        %4610 = sbr.rel (%p4608) target = $region116
      $region115: #{complexnet_forward.1} parent=5 // pred_region
        %s4611 = ssub.s32 %s25, 2
        // Predicated region
        $region117: #{complexnet_forward.1} parent=115 // pred_check
          %p4612 = pneg %p290
        $region118: #{complexnet_forward.1} parent=115 // pred_check_branch
          %4614 = sbr.rel (%p4612) target = $region120
        $region119: #{complexnet_forward.1} parent=115 // pred_region
          %s4615 = smul.u32 16, %s31
          %p4616 = scmp.lt.s32.totalorder %s4615, 63
          %s4617 = scalar_select %p4616, %s4615, 63
          %s4618 = smul.addr %s4617, 8
          %s4619 = scalar_lea.vmem %s11, %s4618
        $region120: #{complexnet_forward.1} parent=115 // pred_fallthru
          _
      $region116: #{complexnet_forward.1} parent=5 // pred_fallthru
        _
    $region6: #{complexnet_forward.1} parent=1 // loop_footer
      %s29 = sadd.s32 1, %s25
    $region7: #{complexnet_forward.1} parent=1 // loop_footer_branch
      %24 = sbr.rel target = $region3
    $region8: #{complexnet_forward.1} parent=1 // loop_exit
      _
    %4620 = vsyncpa [#allocation3], 1
    %s4621 = scalar_lea.sflag [#allocation3], 1
    %4622 = vsyncpa %s4621, 1
    %4623 = vsyncpa [#allocation5], 1
    %4624 = vsyncpa [#allocation8], 1
    %4625 = vsyncpa [#allocation11], 1
    %4626 = vsyncpa [#allocation14], 1
    %4627 = vsyncpa [#allocation17], 1

</llo_original>
